<compile_context>
chip_gen: v6e
topology: v6e:2x2x1
jax: 0.10.0
libtpu: 0.0.40
codegen_flags: <defaults>
</compile_context>

<pallas_src>
import jax
import jax.numpy as jnp
from jax.experimental import pallas as pl
from jax.experimental.pallas import tpu as pltpu


def _d4_symmetrize(w_oihw):
    """Average a (Cout, Cin, k, k) conv weight over the D4 symmetry group."""
    acc = jnp.zeros_like(w_oihw)
    for r in range(4):
        wr = jnp.rot90(w_oihw, r, axes=(2, 3))
        acc = acc + wr + jnp.flip(wr, axis=3)
    return acc / 8.0


def _make_kernel(k, dil, pad, h, w, b_tile, mxu_dtype):
    hw = h * w

    def kernel(x_ref, w_ref, scale_ref, shift_ref, o_ref):
        # x_ref:       (B_TILE, Cin, H, W)   raw NCHW samples (no wrapper pad)
        # w_ref:       (Cout, k*k*Cin)       flattened conv taps (MXU dtype)
        # scale/shift: (Cout, 1)             folded eval-mode BatchNorm (f32)
        # o_ref:       (B_TILE, Cout, H*W)   flattened-NCHW output (lane-dense)
        w_mat = w_ref[...]
        scale = scale_ref[...]
        shift = shift_ref[...]

        for b in range(b_tile):                      # static unroll over samples
            xs = jnp.maximum(x_ref[b], 0.0)          # ReLU on unpadded sample
            cin = xs.shape[0]

            # Circular halo built in-kernel from the resident block (no extra
            # HBM pass for jnp.pad(mode='wrap') in the wrapper).
            if pad:
                xs = jnp.concatenate(
                    [xs[:, h - pad:, :], xs, xs[:, :pad, :]], axis=1)
                xs = jnp.concatenate(
                    [xs[:, :, w - pad:], xs, xs[:, :, :pad]], axis=2)

            # im2col once per sample -> a single fused MXU matmul.
            cols = []
            for ki in range(k):
                for kj in range(k):
                    tap = xs[:, ki * dil: ki * dil + h, kj * dil: kj * dil + w]
                    cols.append(tap.reshape(cin, hw))
            col = jnp.concatenate(cols, axis=0).astype(mxu_dtype)   # (k*k*Cin, HW)

            acc = jnp.dot(w_mat, col,
                          preferred_element_type=jnp.float32)        # (Cout, HW)
            o_ref[b] = (acc * scale + shift).astype(o_ref.dtype)     # BatchNorm

    return kernel


def relu_ccl_conv_bn(x_nchw, weight_oihw, bn_mean, bn_var, bn_gamma, bn_beta,
                     *, stride=1, dilation=1, eps=1e-5, circular=True,
                     d4_symmetrize=True, b_tile=None, mxu_dtype=jnp.bfloat16):
    """Pallas TPU forward of ReLUcclConvBN: ReLU -> circular conv -> BN (eval)."""
    if x_nchw.ndim != 4:
        raise ValueError("expected 4D input (got {}D input)".format(x_nchw.ndim))
    assert stride == 1, "only stride=1 implemented"        # TODO(synk): stride>1
    assert circular, "only circular padding implemented"   # TODO(synk): zeros mode

    n, cin, h, w = x_nchw.shape
    cout, cin_w, kh, kw = weight_oihw.shape
    assert cin_w == cin and kh == kw
    k = kh
    pad = ((k - 1) * dilation + 1 - stride) // 2
    assert 2 * pad == (k - 1) * dilation, "non-'same' circular conv not supported"
    assert pad <= h and pad <= w, "circular halo larger than the feature map"
    h_out, w_out = h, w
    hw = h_out * w_out

    # Effective conv weight -> (Cout, k*k*Cin); row order (ki, kj, cin) matches
    # the in-kernel im2col stacking order.
    wt = _d4_symmetrize(weight_oihw) if d4_symmetrize else weight_oihw
    w_flat = jnp.transpose(wt, (0, 2, 3, 1)).reshape(cout, k * k * cin)
    w_flat = w_flat.astype(mxu_dtype)

    # Fold eval-mode BatchNorm into a per-output-channel scale/shift.
    # AdaptiveBatchNorm2d bypasses BN when the conv output height is 1.
    if h_out == 1:
        scale = jnp.ones((cout, 1), jnp.float32)
        shift = jnp.zeros((cout, 1), jnp.float32)
    else:
        inv = 1.0 / jnp.sqrt(bn_var.astype(jnp.float32) + eps)
        g = bn_gamma.astype(jnp.float32)
        scale = (g * inv).reshape(cout, 1)
        shift = (bn_beta.astype(jnp.float32)
                 - bn_mean.astype(jnp.float32) * g * inv).reshape(cout, 1)

    # Samples per grid step: target B_TILE*H*W >= ~512 lanes of matmul work,
    # with B_TILE | N so blocks are exact.
    if b_tile is None:
        b_tile = min(n, max(1, -(-512 // hw)))
    b_tile = max(1, min(b_tile, n))
    while n % b_tile:
        b_tile -= 1
    grid = (n // b_tile,)

    kernel = _make_kernel(k, dilation, pad, h_out, w_out, b_tile, mxu_dtype)

    out_dtype = x_nchw.dtype
    x_bytes = x_nchw.size * jnp.dtype(x_nchw.dtype).itemsize
    w_bytes = w_flat.size * jnp.dtype(w_flat.dtype).itemsize
    o_bytes = n * cout * hw * jnp.dtype(out_dtype).itemsize
    flops = 2 * n * hw * (k * k * cin) * cout

    out_flat = pl.pallas_call(
        kernel,
        out_shape=jax.ShapeDtypeStruct((n, cout, hw), out_dtype),
        grid_spec=pltpu.PrefetchScalarGridSpec(
            num_scalar_prefetch=0,
            grid=grid,
            in_specs=[
                pl.BlockSpec((b_tile, cin, h, w), lambda i: (i, 0, 0, 0)),
                pl.BlockSpec((cout, k * k * cin), lambda i: (0, 0)),
                pl.BlockSpec((cout, 1), lambda i: (0, 0)),
                pl.BlockSpec((cout, 1), lambda i: (0, 0)),
            ],
            out_specs=pl.BlockSpec((b_tile, cout, hw), lambda i: (i, 0, 0)),
        ),
        compiler_params=pltpu.CompilerParams(
            dimension_semantics=("parallel",)),
        cost_estimate=pl.CostEstimate(
            flops=flops, transcendentals=0,
            bytes_accessed=int(x_bytes + w_bytes + 2 * cout * 4 + o_bytes)),
    )(x_nchw, w_flat, scale, shift)

    # TODO(synk): for production-size feature maps on v7x (64 MiB VMEM), add an
    # output-row tile grid axis with a (k-1)*dilation row halo in the input
    # index_map and set vmem_limit_bytes explicitly.
    return out_flat.reshape(n, cout, h_out, w_out)   # free contiguous reshape


def _reference(x_nchw, weight_oihw, bn_mean, bn_var, bn_gamma, bn_beta,
               *, eps=1e-5, dilation=1, d4_symmetrize=True):
    """Pure-JAX reference of the same forward pass (for correctness check)."""
    k = weight_oihw.shape[-1]
    pad = ((k - 1) * dilation + 1 - 1) // 2
    wt = _d4_symmetrize(weight_oihw) if d4_symmetrize else weight_oihw
    xr = jnp.maximum(x_nchw, 0.0)
    xp = jnp.pad(xr, ((0, 0), (0, 0), (pad, pad), (pad, pad)), mode="wrap")
    y = jax.lax.conv_general_dilated(
        xp, wt, window_strides=(1, 1), padding="VALID",
        rhs_dilation=(dilation, dilation),
        dimension_numbers=("NCHW", "OIHW", "NCHW"),
        precision=jax.lax.Precision.HIGHEST)
    if y.shape[-2] == 1:
        return y
    scale = bn_gamma / jnp.sqrt(bn_var + eps)
    shift = bn_beta - bn_mean * scale
    return y * scale[None, :, None, None] + shift[None, :, None, None]


if __name__ == "__main__":
    key = jax.random.PRNGKey(0)
    k0, k1, k2, k3, k4, k5 = jax.random.split(key, 6)

    N, C_IN, C_OUT, H, W, K = 2, 4, 8, 16, 16, 3
    x = jax.random.normal(k0, (N, C_IN, H, W), dtype=jnp.float32)        # NCHW
    wgt = jax.random.normal(k1, (C_OUT, C_IN, K, K), dtype=jnp.float32) * 0.2
    gamma = 1.0 + 0.1 * jax.random.normal(k2, (C_OUT,), dtype=jnp.float32)
    beta = 0.1 * jax.random.normal(k3, (C_OUT,), dtype=jnp.float32)
    rmean = 0.1 * jax.random.normal(k4, (C_OUT,), dtype=jnp.float32)
    rvar = jax.nn.softplus(jax.random.normal(k5, (C_OUT,), dtype=jnp.float32)) + 0.5

    y = relu_ccl_conv_bn(x, wgt, rmean, rvar, gamma, beta)
    y = jax.block_until_ready(y)

    y_ref = _reference(x, wgt, rmean, rvar, gamma, beta)
    y_ref = jax.block_until_ready(y_ref)

    assert y.shape == (N, C_OUT, H, W) and y.dtype == x.dtype
    max_err = float(jnp.max(jnp.abs(y - y_ref)))
    assert bool(jnp.allclose(y, y_ref, atol=2e-2, rtol=2e-2)), (
        "max abs err = %f" % max_err)
    print("KERNEL_OK")
</pallas_src>

<mosaic_0001>
module attributes {stable_mosaic.version = 11 : i64} {
  func.func @kernel(%arg0: i32, %arg1: memref<2x4x16x16xf32, #tpu.memory_space<vmem>>, %arg2: memref<8x36xbf16, #tpu.memory_space<vmem>>, %arg3: memref<8x1xf32, #tpu.memory_space<vmem>>, %arg4: memref<8x1xf32, #tpu.memory_space<vmem>>, %arg5: memref<2x8x256xf32, #tpu.memory_space<vmem>>) attributes {dimension_semantics = [#tpu.dimension_semantics<parallel>], iteration_bounds = array<i64: 1>, scalar_prefetch = 0 : i64, scratch_operands = 0 : i64, tpu.core_type = #tpu.core_type<tc>, window_params = [{transform_indices = @transform_0, window_bounds = array<i64: 2, 4, 16, 16>}, {pipeline_mode = #tpu.pipeline_mode<synchronous>, transform_indices = @transform_1, window_bounds = array<i64: 8, 36>}, {pipeline_mode = #tpu.pipeline_mode<synchronous>, transform_indices = @transform_2, window_bounds = array<i64: 8, 1>}, {pipeline_mode = #tpu.pipeline_mode<synchronous>, transform_indices = @transform_3, window_bounds = array<i64: 8, 1>}, {transform_indices = @transform_4, window_bounds = array<i64: 2, 8, 256>}]} {
    %c0 = arith.constant 0 : index
    %c0_0 = arith.constant 0 : index
    %0 = vector.load %arg2[%c0, %c0_0] : memref<8x36xbf16, #tpu.memory_space<vmem>>, vector<8x36xbf16>
    %c0_1 = arith.constant 0 : index
    %c0_2 = arith.constant 0 : index
    %1 = vector.load %arg3[%c0_1, %c0_2] : memref<8x1xf32, #tpu.memory_space<vmem>>, vector<8x1xf32>
    %c0_3 = arith.constant 0 : index
    %c0_4 = arith.constant 0 : index
    %2 = vector.load %arg4[%c0_3, %c0_4] : memref<8x1xf32, #tpu.memory_space<vmem>>, vector<8x1xf32>
    %c0_5 = arith.constant 0 : index
    %c0_6 = arith.constant 0 : index
    %c0_7 = arith.constant 0 : index
    %c0_8 = arith.constant 0 : index
    %3 = vector.load %arg1[%c0_5, %c0_6, %c0_7, %c0_8] : memref<2x4x16x16xf32, #tpu.memory_space<vmem>>, vector<1x4x16x16xf32>
    %4 = vector.shape_cast %3 : vector<1x4x16x16xf32> to vector<4x16x16xf32>
    %cst = arith.constant 0.000000e+00 : f32
    %5 = vector.broadcast %cst : f32 to vector<4x16x16xf32>
    %6 = arith.maximumf %4, %5 : vector<4x16x16xf32>
    %7 = vector.extract_strided_slice %6 {offsets = [0, 15, 0], sizes = [4, 1, 16], strides = [1, 1, 1]} : vector<4x16x16xf32> to vector<4x1x16xf32>
    %8 = vector.extract_strided_slice %6 {offsets = [0, 0, 0], sizes = [4, 1, 16], strides = [1, 1, 1]} : vector<4x16x16xf32> to vector<4x1x16xf32>
    %9 = tpu.concatenate %7, %6, %8 in 1 : vector<4x1x16xf32>, vector<4x16x16xf32>, vector<4x1x16xf32> -> vector<4x18x16xf32>
    %10 = vector.extract_strided_slice %9 {offsets = [0, 0, 15], sizes = [4, 18, 1], strides = [1, 1, 1]} : vector<4x18x16xf32> to vector<4x18x1xf32>
    %11 = vector.extract_strided_slice %9 {offsets = [0, 0, 0], sizes = [4, 18, 1], strides = [1, 1, 1]} : vector<4x18x16xf32> to vector<4x18x1xf32>
    %12 = tpu.concatenate %10, %9, %11 in 2 : vector<4x18x1xf32>, vector<4x18x16xf32>, vector<4x18x1xf32> -> vector<4x18x18xf32>
    %13 = vector.extract_strided_slice %12 {offsets = [0, 0, 0], sizes = [4, 16, 16], strides = [1, 1, 1]} : vector<4x18x18xf32> to vector<4x16x16xf32>
    %14 = vector.shape_cast %13 : vector<4x16x16xf32> to vector<4x256xf32>
    %15 = vector.extract_strided_slice %12 {offsets = [0, 0, 1], sizes = [4, 16, 16], strides = [1, 1, 1]} : vector<4x18x18xf32> to vector<4x16x16xf32>
    %16 = vector.shape_cast %15 : vector<4x16x16xf32> to vector<4x256xf32>
    %17 = vector.extract_strided_slice %12 {offsets = [0, 0, 2], sizes = [4, 16, 16], strides = [1, 1, 1]} : vector<4x18x18xf32> to vector<4x16x16xf32>
    %18 = vector.shape_cast %17 : vector<4x16x16xf32> to vector<4x256xf32>
    %19 = vector.extract_strided_slice %12 {offsets = [0, 1, 0], sizes = [4, 16, 16], strides = [1, 1, 1]} : vector<4x18x18xf32> to vector<4x16x16xf32>
    %20 = vector.shape_cast %19 : vector<4x16x16xf32> to vector<4x256xf32>
    %21 = vector.extract_strided_slice %12 {offsets = [0, 1, 1], sizes = [4, 16, 16], strides = [1, 1, 1]} : vector<4x18x18xf32> to vector<4x16x16xf32>
    %22 = vector.shape_cast %21 : vector<4x16x16xf32> to vector<4x256xf32>
    %23 = vector.extract_strided_slice %12 {offsets = [0, 1, 2], sizes = [4, 16, 16], strides = [1, 1, 1]} : vector<4x18x18xf32> to vector<4x16x16xf32>
    %24 = vector.shape_cast %23 : vector<4x16x16xf32> to vector<4x256xf32>
    %25 = vector.extract_strided_slice %12 {offsets = [0, 2, 0], sizes = [4, 16, 16], strides = [1, 1, 1]} : vector<4x18x18xf32> to vector<4x16x16xf32>
    %26 = vector.shape_cast %25 : vector<4x16x16xf32> to vector<4x256xf32>
    %27 = vector.extract_strided_slice %12 {offsets = [0, 2, 1], sizes = [4, 16, 16], strides = [1, 1, 1]} : vector<4x18x18xf32> to vector<4x16x16xf32>
    %28 = vector.shape_cast %27 : vector<4x16x16xf32> to vector<4x256xf32>
    %29 = vector.extract_strided_slice %12 {offsets = [0, 2, 2], sizes = [4, 16, 16], strides = [1, 1, 1]} : vector<4x18x18xf32> to vector<4x16x16xf32>
    %30 = vector.shape_cast %29 : vector<4x16x16xf32> to vector<4x256xf32>
    %31 = tpu.concatenate %14, %16, %18, %20, %22, %24, %26, %28, %30 in 0 : vector<4x256xf32>, vector<4x256xf32>, vector<4x256xf32>, vector<4x256xf32>, vector<4x256xf32>, vector<4x256xf32>, vector<4x256xf32>, vector<4x256xf32>, vector<4x256xf32> -> vector<36x256xf32>
    %32 = arith.truncf %31 : vector<36x256xf32> to vector<36x256xbf16>
    %cst_9 = arith.constant dense<0.000000e+00> : vector<8x256xf32>
    %33 = tpu.matmul %0, %32, %cst_9 {dimension_numbers = #tpu.dot_dimension_numbers<[1], [0], [0], [1], [0, 0, 1, 1], [], []>} : vector<8x36xbf16>, vector<36x256xbf16>, vector<8x256xf32> -> vector<8x256xf32>
    %34 = vector.broadcast %1 : vector<8x1xf32> to vector<8x256xf32>
    %35 = arith.mulf %33, %34 : vector<8x256xf32>
    %36 = vector.broadcast %2 : vector<8x1xf32> to vector<8x256xf32>
    %37 = arith.addf %35, %36 : vector<8x256xf32>
    %c0_10 = arith.constant 0 : index
    %c0_11 = arith.constant 0 : index
    %c0_12 = arith.constant 0 : index
    %38 = vector.load %arg5[%c0_10, %c0_11, %c0_12] : memref<2x8x256xf32, #tpu.memory_space<vmem>>, vector<1x8x256xf32>
    %39 = vector.shape_cast %38 : vector<1x8x256xf32> to vector<8x256xf32>
    %40 = vector.shape_cast %37 : vector<8x256xf32> to vector<1x8x256xf32>
    tpu.vector_store %arg5[%c0_10, %c0_11, %c0_12], %40 {strides = array<i32>} : memref<2x8x256xf32, #tpu.memory_space<vmem>>, vector<1x8x256xf32>,
    %c1 = arith.constant 1 : index
    %c0_13 = arith.constant 0 : index
    %c0_14 = arith.constant 0 : index
    %c0_15 = arith.constant 0 : index
    %41 = vector.load %arg1[%c1, %c0_13, %c0_14, %c0_15] : memref<2x4x16x16xf32, #tpu.memory_space<vmem>>, vector<1x4x16x16xf32>
    %42 = vector.shape_cast %41 : vector<1x4x16x16xf32> to vector<4x16x16xf32>
    %cst_16 = arith.constant 0.000000e+00 : f32
    %43 = vector.broadcast %cst_16 : f32 to vector<4x16x16xf32>
    %44 = arith.maximumf %42, %43 : vector<4x16x16xf32>
    %45 = vector.extract_strided_slice %44 {offsets = [0, 15, 0], sizes = [4, 1, 16], strides = [1, 1, 1]} : vector<4x16x16xf32> to vector<4x1x16xf32>
    %46 = vector.extract_strided_slice %44 {offsets = [0, 0, 0], sizes = [4, 1, 16], strides = [1, 1, 1]} : vector<4x16x16xf32> to vector<4x1x16xf32>
    %47 = tpu.concatenate %45, %44, %46 in 1 : vector<4x1x16xf32>, vector<4x16x16xf32>, vector<4x1x16xf32> -> vector<4x18x16xf32>
    %48 = vector.extract_strided_slice %47 {offsets = [0, 0, 15], sizes = [4, 18, 1], strides = [1, 1, 1]} : vector<4x18x16xf32> to vector<4x18x1xf32>
    %49 = vector.extract_strided_slice %47 {offsets = [0, 0, 0], sizes = [4, 18, 1], strides = [1, 1, 1]} : vector<4x18x16xf32> to vector<4x18x1xf32>
    %50 = tpu.concatenate %48, %47, %49 in 2 : vector<4x18x1xf32>, vector<4x18x16xf32>, vector<4x18x1xf32> -> vector<4x18x18xf32>
    %51 = vector.extract_strided_slice %50 {offsets = [0, 0, 0], sizes = [4, 16, 16], strides = [1, 1, 1]} : vector<4x18x18xf32> to vector<4x16x16xf32>
    %52 = vector.shape_cast %51 : vector<4x16x16xf32> to vector<4x256xf32>
    %53 = vector.extract_strided_slice %50 {offsets = [0, 0, 1], sizes = [4, 16, 16], strides = [1, 1, 1]} : vector<4x18x18xf32> to vector<4x16x16xf32>
    %54 = vector.shape_cast %53 : vector<4x16x16xf32> to vector<4x256xf32>
    %55 = vector.extract_strided_slice %50 {offsets = [0, 0, 2], sizes = [4, 16, 16], strides = [1, 1, 1]} : vector<4x18x18xf32> to vector<4x16x16xf32>
    %56 = vector.shape_cast %55 : vector<4x16x16xf32> to vector<4x256xf32>
    %57 = vector.extract_strided_slice %50 {offsets = [0, 1, 0], sizes = [4, 16, 16], strides = [1, 1, 1]} : vector<4x18x18xf32> to vector<4x16x16xf32>
    %58 = vector.shape_cast %57 : vector<4x16x16xf32> to vector<4x256xf32>
    %59 = vector.extract_strided_slice %50 {offsets = [0, 1, 1], sizes = [4, 16, 16], strides = [1, 1, 1]} : vector<4x18x18xf32> to vector<4x16x16xf32>
    %60 = vector.shape_cast %59 : vector<4x16x16xf32> to vector<4x256xf32>
    %61 = vector.extract_strided_slice %50 {offsets = [0, 1, 2], sizes = [4, 16, 16], strides = [1, 1, 1]} : vector<4x18x18xf32> to vector<4x16x16xf32>
    %62 = vector.shape_cast %61 : vector<4x16x16xf32> to vector<4x256xf32>
    %63 = vector.extract_strided_slice %50 {offsets = [0, 2, 0], sizes = [4, 16, 16], strides = [1, 1, 1]} : vector<4x18x18xf32> to vector<4x16x16xf32>
    %64 = vector.shape_cast %63 : vector<4x16x16xf32> to vector<4x256xf32>
    %65 = vector.extract_strided_slice %50 {offsets = [0, 2, 1], sizes = [4, 16, 16], strides = [1, 1, 1]} : vector<4x18x18xf32> to vector<4x16x16xf32>
    %66 = vector.shape_cast %65 : vector<4x16x16xf32> to vector<4x256xf32>
    %67 = vector.extract_strided_slice %50 {offsets = [0, 2, 2], sizes = [4, 16, 16], strides = [1, 1, 1]} : vector<4x18x18xf32> to vector<4x16x16xf32>
    %68 = vector.shape_cast %67 : vector<4x16x16xf32> to vector<4x256xf32>
    %69 = tpu.concatenate %52, %54, %56, %58, %60, %62, %64, %66, %68 in 0 : vector<4x256xf32>, vector<4x256xf32>, vector<4x256xf32>, vector<4x256xf32>, vector<4x256xf32>, vector<4x256xf32>, vector<4x256xf32>, vector<4x256xf32>, vector<4x256xf32> -> vector<36x256xf32>
    %70 = arith.truncf %69 : vector<36x256xf32> to vector<36x256xbf16>
    %cst_17 = arith.constant dense<0.000000e+00> : vector<8x256xf32>
    %71 = tpu.matmul %0, %70, %cst_17 {dimension_numbers = #tpu.dot_dimension_numbers<[1], [0], [0], [1], [0, 0, 1, 1], [], []>} : vector<8x36xbf16>, vector<36x256xbf16>, vector<8x256xf32> -> vector<8x256xf32>
    %72 = vector.broadcast %1 : vector<8x1xf32> to vector<8x256xf32>
    %73 = arith.mulf %71, %72 : vector<8x256xf32>
    %74 = vector.broadcast %2 : vector<8x1xf32> to vector<8x256xf32>
    %75 = arith.addf %73, %74 : vector<8x256xf32>
    %c1_18 = arith.constant 1 : index
    %c0_19 = arith.constant 0 : index
    %c0_20 = arith.constant 0 : index
    %76 = vector.load %arg5[%c1_18, %c0_19, %c0_20] : memref<2x8x256xf32, #tpu.memory_space<vmem>>, vector<1x8x256xf32>
    %77 = vector.shape_cast %76 : vector<1x8x256xf32> to vector<8x256xf32>
    %78 = vector.shape_cast %75 : vector<8x256xf32> to vector<1x8x256xf32>
    tpu.vector_store %arg5[%c1_18, %c0_19, %c0_20], %78 {strides = array<i32>} : memref<2x8x256xf32, #tpu.memory_space<vmem>>, vector<1x8x256xf32>,
    return
  }
  func.func @transform_0(%arg0: i32) -> (i32, i32, i32, i32) {
    %c0_i32 = arith.constant 0 : i32
    %c0_i32_0 = arith.constant 0 : i32
    %c0_i32_1 = arith.constant 0 : i32
    %c0_i32_2 = arith.constant 0 : i32
    return %arg0, %c0_i32, %c0_i32_0, %c0_i32_1 : i32, i32, i32, i32
  }
  func.func @transform_1(%arg0: i32) -> (i32, i32) {
    %c0_i32 = arith.constant 0 : i32
    %c0_i32_0 = arith.constant 0 : i32
    %c0_i32_1 = arith.constant 0 : i32
    return %c0_i32, %c0_i32_0 : i32, i32
  }
  func.func @transform_2(%arg0: i32) -> (i32, i32) {
    %c0_i32 = arith.constant 0 : i32
    %c0_i32_0 = arith.constant 0 : i32
    %c0_i32_1 = arith.constant 0 : i32
    return %c0_i32, %c0_i32_0 : i32, i32
  }
  func.func @transform_3(%arg0: i32) -> (i32, i32) {
    %c0_i32 = arith.constant 0 : i32
    %c0_i32_0 = arith.constant 0 : i32
    %c0_i32_1 = arith.constant 0 : i32
    return %c0_i32, %c0_i32_0 : i32, i32
  }
  func.func @transform_4(%arg0: i32) -> (i32, i32, i32) {
    %c0_i32 = arith.constant 0 : i32
    %c0_i32_0 = arith.constant 0 : i32
    %c0_i32_1 = arith.constant 0 : i32
    return %arg0, %c0_i32, %c0_i32_0 : i32, i32, i32
  }
}

</mosaic_0001>

<llo_original>
// kernel: tpu_custom_call.1
$region0: #{tpu_custom_call.1}
  #allocation0 [shape = 'u32[]', space=smem, size = 0x4, offset = 0x4, fixed_abs, tag = 'smem constant byte address 0x4 - core index']
  #allocation1 [shape = 'u32[144,128]{1,0:T(1,128)}', space=vmem, size = 0x12000, scoped, tag = 'internal scratch']
  %s0 = inlined_call_operand.hbm [shape: f32[2,4,16,16], index: 0, kind: input, shape index: {}]
  %s1 = inlined_call_operand.vmem [shape: bf16[8,36], index: 1, kind: input, shape index: {}]
  %s2 = inlined_call_operand.vmem [shape: f32[8,1], index: 2, kind: input, shape index: {}]
  %s3 = inlined_call_operand.vmem [shape: f32[8,1], index: 3, kind: input, shape index: {}]
  %s4 = inlined_call_operand.hbm [shape: f32[2,8,256], index: 4, kind: output, shape index: {}]
  %s5 = sld [smem:[#allocation0]]
  $region30: #{tpu_custom_call.1} parent=0
    _
  %s7 = ssub.s32 1, %s5
  %s8 = scalar_select 0, %s7, %s5
  $region1: #{tpu_custom_call.1} parent=0
    #allocation2 [shape = 'u8[65536]{0}', space=vmem, size = 0x10000, scoped, tag = 'input window, operand 0, single buffered']
    #allocation3 [shape = 's32[1]{0}', space=sflag, size = 0x4, scoped, tag = 'scoped memory for tpu_custom_call.1']
    #allocation4 [shape = 's32[1]{0}', space=sflag, size = 0x4, scoped, tag = 'scoped memory for tpu_custom_call.1']
    #allocation5 [shape = 'u8[16384]{0}', space=vmem, size = 0x4000, scoped, tag = 'output window, operand 0, single buffered']
    %9 = vsyncpa [#allocation3], 0
    %10 = vsyncpa [#allocation4], 0
    // Predicated region
    $region2: #{tpu_custom_call.1} parent=1 // pred_check
      _
    $region3: #{tpu_custom_call.1} parent=1 // pred_check_branch
      %12 = sbr.rel (0) target = $region5
    $region4: #{tpu_custom_call.1} parent=1 // pred_region
      %s14 = ssub.s32 2048, 2048
      %15 = vsyncadd [#allocation3], %s14
      %s16 = sshll.u32 [#allocation2], 4
      %s17 = int_to_ptr.vmem [resolvable:$true] %s16
      %22 = dma.hbm_to_vmem [thread:$0]  %s0, 2048, %s17, [#allocation3], 128, 128, 8
    $region5: #{tpu_custom_call.1} parent=1 // pred_fallthru
      _
    // Predicated region
    $region6: #{tpu_custom_call.1} parent=1 // pred_check
      _
    $region7: #{tpu_custom_call.1} parent=1 // pred_check_branch
      %24 = sbr.rel (0) target = $region9
    $region8: #{tpu_custom_call.1} parent=1 // pred_region
      _
    $region9: #{tpu_custom_call.1} parent=1 // pred_fallthru
      _
    // Predicated region
    $region10: #{tpu_custom_call.1} parent=1 // pred_check
      _
    $region11: #{tpu_custom_call.1} parent=1 // pred_check_branch
      %26 = sbr.rel (0) target = $region13
    $region12: #{tpu_custom_call.1} parent=1 // pred_region
      _
    $region13: #{tpu_custom_call.1} parent=1 // pred_fallthru
      _
    // Predicated region
    $region14: #{tpu_custom_call.1} parent=1 // pred_check
      _
    $region15: #{tpu_custom_call.1} parent=1 // pred_check_branch
      %28 = sbr.rel (0) target = $region17
    $region16: #{tpu_custom_call.1} parent=1 // pred_region
      _
    $region17: #{tpu_custom_call.1} parent=1 // pred_fallthru
      _
    // Predicated region
    $region18: #{tpu_custom_call.1} parent=1 // pred_check
      _
    $region19: #{tpu_custom_call.1} parent=1 // pred_check_branch
      %30 = sbr.rel (0) target = $region21
    $region20: #{tpu_custom_call.1} parent=1 // pred_region
      %31 = dma.done [#allocation3], 2048
    $region21: #{tpu_custom_call.1} parent=1 // pred_fallthru
      _
    %v33 = vld [vmem:[%s1] sm:$0xf]
    %v34 = vld [vmem:[%s2] sm:$0xff]
    %v35 = vld [vmem:[%s3] sm:$0xff]
    %v36 = vld [vmem:[#allocation2] sm:$0xff]
    %v37 = vld [vmem:[#allocation2 + $0x8] sm:$0xff]
    %v38 = vld [vmem:[#allocation2 + $0x10] sm:$0xff]
    %v39 = vld [vmem:[#allocation2 + $0x18] sm:$0xff]
    %v40 = vld [vmem:[#allocation2 + $0x20] sm:$0xff]
    %v41 = vld [vmem:[#allocation2 + $0x28] sm:$0xff]
    %v42 = vld [vmem:[#allocation2 + $0x30] sm:$0xff]
    %v43 = vld [vmem:[#allocation2 + $0x38] sm:$0xff]
    %v44 = vmax.f32 %v36, 0.0
    %v45 = vmax.f32 %v37, 0.0
    %v46 = vmax.f32 %v38, 0.0
    %v47 = vmax.f32 %v39, 0.0
    %v48 = vmax.f32 %v40, 0.0
    %v49 = vmax.f32 %v41, 0.0
    %v50 = vmax.f32 %v42, 0.0
    %v51 = vmax.f32 %v43, 0.0
    %v56 = vrot.slane %v45, 7
    %v57 = vrot.slane %v47, 7
    %v58 = vrot.slane %v49, 7
    %v59 = vrot.slane %v51, 7
    %vm68 = vcmask 1040384
    %v69 = vrot.slane %v44, 7
    %v70 = vsel %vm68, %v69, %v56
    %v71 = vrot.slane %v46, 7
    %v72 = vsel %vm68, %v71, %v57
    %v73 = vrot.slane %v48, 7
    %v74 = vsel %vm68, %v73, %v58
    %v75 = vrot.slane %v50, 7
    %v76 = vsel %vm68, %v75, %v59
    %v81 = vsel %vm68, %v56, %v69
    %v82 = vsel %vm68, %v57, %v71
    %v83 = vsel %vm68, %v58, %v73
    %v84 = vsel %vm68, %v59, %v75
    %89 = vrot.lane.b32.xlu0 %v81, 113
    %v90 = vpop.permute.xlu0 %89
    %91 = vrot.lane.b32.xlu0 %v70, 113
    %v92 = vpop.permute.xlu0 %91
    %93 = vrot.lane.b32.xlu0 %v82, 113
    %v94 = vpop.permute.xlu0 %93
    %95 = vrot.lane.b32.xlu0 %v72, 113
    %v96 = vpop.permute.xlu0 %95
    %97 = vrot.lane.b32.xlu0 %v83, 113
    %v98 = vpop.permute.xlu0 %97
    %99 = vrot.lane.b32.xlu0 %v74, 113
    %v100 = vpop.permute.xlu0 %99
    %101 = vrot.lane.b32.xlu0 %v84, 113
    %v102 = vpop.permute.xlu0 %101
    %103 = vrot.lane.b32.xlu0 %v76, 113
    %v104 = vpop.permute.xlu0 %103
    %113 = vrot.lane.b32.xlu0 %v81, 1
    %v114 = vpop.permute.xlu0 %113
    %115 = vrot.lane.b32.xlu0 %v70, 1
    %v116 = vpop.permute.xlu0 %115
    %117 = vrot.lane.b32.xlu0 %v82, 1
    %v118 = vpop.permute.xlu0 %117
    %119 = vrot.lane.b32.xlu0 %v72, 1
    %v120 = vpop.permute.xlu0 %119
    %121 = vrot.lane.b32.xlu0 %v83, 1
    %v122 = vpop.permute.xlu0 %121
    %123 = vrot.lane.b32.xlu0 %v74, 1
    %v124 = vpop.permute.xlu0 %123
    %125 = vrot.lane.b32.xlu0 %v84, 1
    %v126 = vpop.permute.xlu0 %125
    %127 = vrot.lane.b32.xlu0 %v76, 1
    %v128 = vpop.permute.xlu0 %127
    %137 = vrot.lane.b32.xlu0 %v81, 17
    %v138 = vpop.permute.xlu0 %137
    %139 = vrot.lane.b32.xlu0 %v70, 17
    %v140 = vpop.permute.xlu0 %139
    %141 = vrot.lane.b32.xlu0 %v82, 17
    %v142 = vpop.permute.xlu0 %141
    %143 = vrot.lane.b32.xlu0 %v72, 17
    %v144 = vpop.permute.xlu0 %143
    %145 = vrot.lane.b32.xlu0 %v83, 17
    %v146 = vpop.permute.xlu0 %145
    %147 = vrot.lane.b32.xlu0 %v74, 17
    %v148 = vpop.permute.xlu0 %147
    %149 = vrot.lane.b32.xlu0 %v84, 17
    %v150 = vpop.permute.xlu0 %149
    %151 = vrot.lane.b32.xlu0 %v76, 17
    %v152 = vpop.permute.xlu0 %151
    %vm161 = vcmask 7168
    %v162 = vsel %vm161, %v90, %v114
    %v163 = vsel %vm161, %v92, %v116
    %v164 = vsel %vm161, %v94, %v118
    %v165 = vsel %vm161, %v96, %v120
    %v166 = vsel %vm161, %v98, %v122
    %v167 = vsel %vm161, %v100, %v124
    %v168 = vsel %vm161, %v102, %v126
    %v169 = vsel %vm161, %v104, %v128
    %vm170 = vcmask 138240
    %v171 = vsel %vm170, %v162, %v138
    %v172 = vsel %vm170, %v163, %v140
    %v173 = vsel %vm170, %v164, %v142
    %v174 = vsel %vm170, %v165, %v144
    %v175 = vsel %vm170, %v166, %v146
    %v176 = vsel %vm170, %v167, %v148
    %v177 = vsel %vm170, %v168, %v150
    %v178 = vsel %vm170, %v169, %v152
    %v179 = vcombine.low %v171, %v175
    %v180 = vcombine.high %v171, %v175
    %v182 = vunpack.c.l.s4 1983009808
    %v183 = vunpack.c.0.s8 %v182
    %v184 = vlaneseq
    %v185 = vshrl.u32 %v184, 7
    %v186 = vsub.s32 %v183, %v185
    %v187 = vrot.slane %v179, %v186
    %v189 = vunpack.c.l.s4 1983009808
    %v190 = vunpack.c.0.s8 %v189
    %v191 = vlaneseq
    %v192 = vshrl.u32 %v191, 7
    %v193 = vsub.s32 %v190, %v192
    %v194 = vrot.slane %v180, %v193
    %v195 = vcombine.low %v173, %v177
    %v196 = vcombine.high %v173, %v177
    %v198 = vunpack.c.l.s4 1983009808
    %v199 = vunpack.c.0.s8 %v198
    %v200 = vlaneseq
    %v201 = vshrl.u32 %v200, 7
    %v202 = vsub.s32 %v199, %v201
    %v203 = vrot.slane %v195, %v202
    %v205 = vunpack.c.l.s4 1983009808
    %v206 = vunpack.c.0.s8 %v205
    %v207 = vlaneseq
    %v208 = vshrl.u32 %v207, 7
    %v209 = vsub.s32 %v206, %v208
    %v210 = vrot.slane %v196, %v209
    %v211 = vcombine.low %v187, %v203
    %v212 = vcombine.high %v187, %v203
    %v214 = vunpack.c.l.s4 1934713408
    %v215 = vunpack.c.0.s8 %v214
    %v216 = vlaneseq
    %v217 = vshrl.u32 %v216, 7
    %v218 = vsub.s32 %v215, %v217
    %v219 = vrot.slane %v211, %v218
    %v221 = vunpack.c.l.s4 1934713408
    %v222 = vunpack.c.0.s8 %v221
    %v223 = vlaneseq
    %v224 = vshrl.u32 %v223, 7
    %v225 = vsub.s32 %v222, %v224
    %v226 = vrot.slane %v212, %v225
    %v227 = vcombine.low %v194, %v210
    %v228 = vcombine.high %v194, %v210
    %v230 = vunpack.c.l.s4 1934713408
    %v231 = vunpack.c.0.s8 %v230
    %v232 = vlaneseq
    %v233 = vshrl.u32 %v232, 7
    %v234 = vsub.s32 %v231, %v233
    %v235 = vrot.slane %v227, %v234
    %v237 = vunpack.c.l.s4 1934713408
    %v238 = vunpack.c.0.s8 %v237
    %v239 = vlaneseq
    %v240 = vshrl.u32 %v239, 7
    %v241 = vsub.s32 %v238, %v240
    %v242 = vrot.slane %v228, %v241
    %v243 = vcombine.high %v219, 0.0
    %v244 = vcombine.high %v226, 0.0
    %v245 = vcombine.high %v235, 0.0
    %v246 = vcombine.high %v242, 0.0
    %v247 = vcombine.low %v172, %v176
    %v248 = vcombine.high %v172, %v176
    %v250 = vunpack.c.l.s4 1983009808
    %v251 = vunpack.c.0.s8 %v250
    %v252 = vlaneseq
    %v253 = vshrl.u32 %v252, 7
    %v254 = vsub.s32 %v251, %v253
    %v255 = vrot.slane %v247, %v254
    %v257 = vunpack.c.l.s4 1983009808
    %v258 = vunpack.c.0.s8 %v257
    %v259 = vlaneseq
    %v260 = vshrl.u32 %v259, 7
    %v261 = vsub.s32 %v258, %v260
    %v262 = vrot.slane %v248, %v261
    %v263 = vcombine.low %v174, %v178
    %v264 = vcombine.high %v174, %v178
    %v266 = vunpack.c.l.s4 1983009808
    %v267 = vunpack.c.0.s8 %v266
    %v268 = vlaneseq
    %v269 = vshrl.u32 %v268, 7
    %v270 = vsub.s32 %v267, %v269
    %v271 = vrot.slane %v263, %v270
    %v273 = vunpack.c.l.s4 1983009808
    %v274 = vunpack.c.0.s8 %v273
    %v275 = vlaneseq
    %v276 = vshrl.u32 %v275, 7
    %v277 = vsub.s32 %v274, %v276
    %v278 = vrot.slane %v264, %v277
    %v279 = vcombine.low %v255, %v271
    %v280 = vcombine.high %v255, %v271
    %v282 = vunpack.c.l.s4 1934713408
    %v283 = vunpack.c.0.s8 %v282
    %v284 = vlaneseq
    %v285 = vshrl.u32 %v284, 7
    %v286 = vsub.s32 %v283, %v285
    %v287 = vrot.slane %v279, %v286
    %v289 = vunpack.c.l.s4 1934713408
    %v290 = vunpack.c.0.s8 %v289
    %v291 = vlaneseq
    %v292 = vshrl.u32 %v291, 7
    %v293 = vsub.s32 %v290, %v292
    %v294 = vrot.slane %v280, %v293
    %v295 = vcombine.low %v262, %v278
    %v296 = vcombine.high %v262, %v278
    %v298 = vunpack.c.l.s4 1934713408
    %v299 = vunpack.c.0.s8 %v298
    %v300 = vlaneseq
    %v301 = vshrl.u32 %v300, 7
    %v302 = vsub.s32 %v299, %v301
    %v303 = vrot.slane %v295, %v302
    %v305 = vunpack.c.l.s4 1934713408
    %v306 = vunpack.c.0.s8 %v305
    %v307 = vlaneseq
    %v308 = vshrl.u32 %v307, 7
    %v309 = vsub.s32 %v306, %v308
    %v310 = vrot.slane %v296, %v309
    %v311 = vcombine.high %v287, 0.0
    %v312 = vcombine.high %v294, 0.0
    %v313 = vcombine.high %v303, 0.0
    %v314 = vcombine.high %v310, 0.0
    %316 = vrot.lane.b32.xlu0 %v243, 16
    %v317 = vpop.permute.xlu0 %316
    %320 = vrot.lane.b32.xlu0 %v226, 32
    %v321 = vpop.permute.xlu0 %320
    %324 = vrot.lane.b32.xlu0 %v244, 48
    %v325 = vpop.permute.xlu0 %324
    %328 = vrot.lane.b32.xlu0 %v235, 64
    %v329 = vpop.permute.xlu0 %328
    %332 = vrot.lane.b32.xlu0 %v245, 80
    %v333 = vpop.permute.xlu0 %332
    %336 = vrot.lane.b32.xlu0 %v242, 96
    %v337 = vpop.permute.xlu0 %336
    %340 = vrot.lane.b32.xlu0 %v246, 112
    %v341 = vpop.permute.xlu0 %340
    %344 = vrot.lane.b32.xlu0 %v311, 16
    %v345 = vpop.permute.xlu0 %344
    %348 = vrot.lane.b32.xlu0 %v294, 32
    %v349 = vpop.permute.xlu0 %348
    %352 = vrot.lane.b32.xlu0 %v312, 48
    %v353 = vpop.permute.xlu0 %352
    %356 = vrot.lane.b32.xlu0 %v303, 64
    %v357 = vpop.permute.xlu0 %356
    %360 = vrot.lane.b32.xlu0 %v313, 80
    %v361 = vpop.permute.xlu0 %360
    %364 = vrot.lane.b32.xlu0 %v310, 96
    %v365 = vpop.permute.xlu0 %364
    %368 = vrot.lane.b32.xlu0 %v314, 112
    %v369 = vpop.permute.xlu0 %368
    %vm371 = vcmask 130048
    %v372 = vsel %vm371, %v219, %v317
    %vm373 = vcmask 261120
    %v374 = vsel %vm373, %v372, %v321
    %vm375 = vcmask 392192
    %v376 = vsel %vm375, %v374, %v325
    %vm377 = vcmask 523264
    %v378 = vsel %vm377, %v376, %v329
    %vm379 = vcmask 654336
    %v380 = vsel %vm379, %v378, %v333
    %vm381 = vcmask 785408
    %v382 = vsel %vm381, %v380, %v337
    %vm383 = vcmask 916480
    %v384 = vsel %vm383, %v382, %v341
    %v385 = vsel %vm371, %v287, %v345
    %v386 = vsel %vm373, %v385, %v349
    %v387 = vsel %vm375, %v386, %v353
    %v388 = vsel %vm377, %v387, %v357
    %v389 = vsel %vm379, %v388, %v361
    %v390 = vsel %vm381, %v389, %v365
    %v391 = vsel %vm383, %v390, %v369
    %400 = vrot.lane.b32.xlu0 %v171, 127
    %v401 = vpop.permute.xlu0 %400
    %402 = vrot.lane.b32.xlu0 %v172, 127
    %v403 = vpop.permute.xlu0 %402
    %404 = vrot.lane.b32.xlu0 %v173, 127
    %v405 = vpop.permute.xlu0 %404
    %406 = vrot.lane.b32.xlu0 %v174, 127
    %v407 = vpop.permute.xlu0 %406
    %408 = vrot.lane.b32.xlu0 %v175, 127
    %v409 = vpop.permute.xlu0 %408
    %410 = vrot.lane.b32.xlu0 %v176, 127
    %v411 = vpop.permute.xlu0 %410
    %412 = vrot.lane.b32.xlu0 %v177, 127
    %v413 = vpop.permute.xlu0 %412
    %414 = vrot.lane.b32.xlu0 %v178, 127
    %v415 = vpop.permute.xlu0 %414
    %v424 = vcombine.low %v401, %v409
    %v425 = vcombine.high %v401, %v409
    %v427 = vunpack.c.l.s4 1983009808
    %v428 = vunpack.c.0.s8 %v427
    %v429 = vlaneseq
    %v430 = vshrl.u32 %v429, 7
    %v431 = vsub.s32 %v428, %v430
    %v432 = vrot.slane %v424, %v431
    %v434 = vunpack.c.l.s4 1983009808
    %v435 = vunpack.c.0.s8 %v434
    %v436 = vlaneseq
    %v437 = vshrl.u32 %v436, 7
    %v438 = vsub.s32 %v435, %v437
    %v439 = vrot.slane %v425, %v438
    %v440 = vcombine.low %v405, %v413
    %v441 = vcombine.high %v405, %v413
    %v443 = vunpack.c.l.s4 1983009808
    %v444 = vunpack.c.0.s8 %v443
    %v445 = vlaneseq
    %v446 = vshrl.u32 %v445, 7
    %v447 = vsub.s32 %v444, %v446
    %v448 = vrot.slane %v440, %v447
    %v450 = vunpack.c.l.s4 1983009808
    %v451 = vunpack.c.0.s8 %v450
    %v452 = vlaneseq
    %v453 = vshrl.u32 %v452, 7
    %v454 = vsub.s32 %v451, %v453
    %v455 = vrot.slane %v441, %v454
    %v456 = vcombine.low %v432, %v448
    %v457 = vcombine.high %v432, %v448
    %v459 = vunpack.c.l.s4 1934713408
    %v460 = vunpack.c.0.s8 %v459
    %v461 = vlaneseq
    %v462 = vshrl.u32 %v461, 7
    %v463 = vsub.s32 %v460, %v462
    %v464 = vrot.slane %v456, %v463
    %v466 = vunpack.c.l.s4 1934713408
    %v467 = vunpack.c.0.s8 %v466
    %v468 = vlaneseq
    %v469 = vshrl.u32 %v468, 7
    %v470 = vsub.s32 %v467, %v469
    %v471 = vrot.slane %v457, %v470
    %v472 = vcombine.low %v439, %v455
    %v473 = vcombine.high %v439, %v455
    %v475 = vunpack.c.l.s4 1934713408
    %v476 = vunpack.c.0.s8 %v475
    %v477 = vlaneseq
    %v478 = vshrl.u32 %v477, 7
    %v479 = vsub.s32 %v476, %v478
    %v480 = vrot.slane %v472, %v479
    %v482 = vunpack.c.l.s4 1934713408
    %v483 = vunpack.c.0.s8 %v482
    %v484 = vlaneseq
    %v485 = vshrl.u32 %v484, 7
    %v486 = vsub.s32 %v483, %v485
    %v487 = vrot.slane %v473, %v486
    %v488 = vcombine.high %v464, 0.0
    %v489 = vcombine.high %v471, 0.0
    %v490 = vcombine.high %v480, 0.0
    %v491 = vcombine.high %v487, 0.0
    %v492 = vcombine.low %v403, %v411
    %v493 = vcombine.high %v403, %v411
    %v495 = vunpack.c.l.s4 1983009808
    %v496 = vunpack.c.0.s8 %v495
    %v497 = vlaneseq
    %v498 = vshrl.u32 %v497, 7
    %v499 = vsub.s32 %v496, %v498
    %v500 = vrot.slane %v492, %v499
    %v502 = vunpack.c.l.s4 1983009808
    %v503 = vunpack.c.0.s8 %v502
    %v504 = vlaneseq
    %v505 = vshrl.u32 %v504, 7
    %v506 = vsub.s32 %v503, %v505
    %v507 = vrot.slane %v493, %v506
    %v508 = vcombine.low %v407, %v415
    %v509 = vcombine.high %v407, %v415
    %v511 = vunpack.c.l.s4 1983009808
    %v512 = vunpack.c.0.s8 %v511
    %v513 = vlaneseq
    %v514 = vshrl.u32 %v513, 7
    %v515 = vsub.s32 %v512, %v514
    %v516 = vrot.slane %v508, %v515
    %v518 = vunpack.c.l.s4 1983009808
    %v519 = vunpack.c.0.s8 %v518
    %v520 = vlaneseq
    %v521 = vshrl.u32 %v520, 7
    %v522 = vsub.s32 %v519, %v521
    %v523 = vrot.slane %v509, %v522
    %v524 = vcombine.low %v500, %v516
    %v525 = vcombine.high %v500, %v516
    %v527 = vunpack.c.l.s4 1934713408
    %v528 = vunpack.c.0.s8 %v527
    %v529 = vlaneseq
    %v530 = vshrl.u32 %v529, 7
    %v531 = vsub.s32 %v528, %v530
    %v532 = vrot.slane %v524, %v531
    %v534 = vunpack.c.l.s4 1934713408
    %v535 = vunpack.c.0.s8 %v534
    %v536 = vlaneseq
    %v537 = vshrl.u32 %v536, 7
    %v538 = vsub.s32 %v535, %v537
    %v539 = vrot.slane %v525, %v538
    %v540 = vcombine.low %v507, %v523
    %v541 = vcombine.high %v507, %v523
    %v543 = vunpack.c.l.s4 1934713408
    %v544 = vunpack.c.0.s8 %v543
    %v545 = vlaneseq
    %v546 = vshrl.u32 %v545, 7
    %v547 = vsub.s32 %v544, %v546
    %v548 = vrot.slane %v540, %v547
    %v550 = vunpack.c.l.s4 1934713408
    %v551 = vunpack.c.0.s8 %v550
    %v552 = vlaneseq
    %v553 = vshrl.u32 %v552, 7
    %v554 = vsub.s32 %v551, %v553
    %v555 = vrot.slane %v541, %v554
    %v556 = vcombine.high %v532, 0.0
    %v557 = vcombine.high %v539, 0.0
    %v558 = vcombine.high %v548, 0.0
    %v559 = vcombine.high %v555, 0.0
    %561 = vrot.lane.b32.xlu0 %v488, 16
    %v562 = vpop.permute.xlu0 %561
    %565 = vrot.lane.b32.xlu0 %v471, 32
    %v566 = vpop.permute.xlu0 %565
    %569 = vrot.lane.b32.xlu0 %v489, 48
    %v570 = vpop.permute.xlu0 %569
    %573 = vrot.lane.b32.xlu0 %v480, 64
    %v574 = vpop.permute.xlu0 %573
    %577 = vrot.lane.b32.xlu0 %v490, 80
    %v578 = vpop.permute.xlu0 %577
    %581 = vrot.lane.b32.xlu0 %v487, 96
    %v582 = vpop.permute.xlu0 %581
    %585 = vrot.lane.b32.xlu0 %v491, 112
    %v586 = vpop.permute.xlu0 %585
    %589 = vrot.lane.b32.xlu0 %v556, 16
    %v590 = vpop.permute.xlu0 %589
    %593 = vrot.lane.b32.xlu0 %v539, 32
    %v594 = vpop.permute.xlu0 %593
    %597 = vrot.lane.b32.xlu0 %v557, 48
    %v598 = vpop.permute.xlu0 %597
    %601 = vrot.lane.b32.xlu0 %v548, 64
    %v602 = vpop.permute.xlu0 %601
    %605 = vrot.lane.b32.xlu0 %v558, 80
    %v606 = vpop.permute.xlu0 %605
    %609 = vrot.lane.b32.xlu0 %v555, 96
    %v610 = vpop.permute.xlu0 %609
    %613 = vrot.lane.b32.xlu0 %v559, 112
    %v614 = vpop.permute.xlu0 %613
    %v616 = vsel %vm371, %v464, %v562
    %v617 = vsel %vm373, %v616, %v566
    %v618 = vsel %vm375, %v617, %v570
    %v619 = vsel %vm377, %v618, %v574
    %v620 = vsel %vm379, %v619, %v578
    %v621 = vsel %vm381, %v620, %v582
    %v622 = vsel %vm383, %v621, %v586
    %v623 = vsel %vm371, %v532, %v590
    %v624 = vsel %vm373, %v623, %v594
    %v625 = vsel %vm375, %v624, %v598
    %v626 = vsel %vm377, %v625, %v602
    %v627 = vsel %vm379, %v626, %v606
    %v628 = vsel %vm381, %v627, %v610
    %v629 = vsel %vm383, %v628, %v614
    %630 = vrot.lane.b32.xlu0 %v171, 126
    %v631 = vpop.permute.xlu0 %630
    %632 = vrot.lane.b32.xlu0 %v172, 126
    %v633 = vpop.permute.xlu0 %632
    %634 = vrot.lane.b32.xlu0 %v173, 126
    %v635 = vpop.permute.xlu0 %634
    %636 = vrot.lane.b32.xlu0 %v174, 126
    %v637 = vpop.permute.xlu0 %636
    %638 = vrot.lane.b32.xlu0 %v175, 126
    %v639 = vpop.permute.xlu0 %638
    %640 = vrot.lane.b32.xlu0 %v176, 126
    %v641 = vpop.permute.xlu0 %640
    %642 = vrot.lane.b32.xlu0 %v177, 126
    %v643 = vpop.permute.xlu0 %642
    %644 = vrot.lane.b32.xlu0 %v178, 126
    %v645 = vpop.permute.xlu0 %644
    %v654 = vcombine.low %v631, %v639
    %v655 = vcombine.high %v631, %v639
    %v657 = vunpack.c.l.s4 1983009808
    %v658 = vunpack.c.0.s8 %v657
    %v659 = vlaneseq
    %v660 = vshrl.u32 %v659, 7
    %v661 = vsub.s32 %v658, %v660
    %v662 = vrot.slane %v654, %v661
    %v664 = vunpack.c.l.s4 1983009808
    %v665 = vunpack.c.0.s8 %v664
    %v666 = vlaneseq
    %v667 = vshrl.u32 %v666, 7
    %v668 = vsub.s32 %v665, %v667
    %v669 = vrot.slane %v655, %v668
    %v670 = vcombine.low %v635, %v643
    %v671 = vcombine.high %v635, %v643
    %v673 = vunpack.c.l.s4 1983009808
    %v674 = vunpack.c.0.s8 %v673
    %v675 = vlaneseq
    %v676 = vshrl.u32 %v675, 7
    %v677 = vsub.s32 %v674, %v676
    %v678 = vrot.slane %v670, %v677
    %v680 = vunpack.c.l.s4 1983009808
    %v681 = vunpack.c.0.s8 %v680
    %v682 = vlaneseq
    %v683 = vshrl.u32 %v682, 7
    %v684 = vsub.s32 %v681, %v683
    %v685 = vrot.slane %v671, %v684
    %v686 = vcombine.low %v662, %v678
    %v687 = vcombine.high %v662, %v678
    %v689 = vunpack.c.l.s4 1934713408
    %v690 = vunpack.c.0.s8 %v689
    %v691 = vlaneseq
    %v692 = vshrl.u32 %v691, 7
    %v693 = vsub.s32 %v690, %v692
    %v694 = vrot.slane %v686, %v693
    %v696 = vunpack.c.l.s4 1934713408
    %v697 = vunpack.c.0.s8 %v696
    %v698 = vlaneseq
    %v699 = vshrl.u32 %v698, 7
    %v700 = vsub.s32 %v697, %v699
    %v701 = vrot.slane %v687, %v700
    %v702 = vcombine.low %v669, %v685
    %v703 = vcombine.high %v669, %v685
    %v705 = vunpack.c.l.s4 1934713408
    %v706 = vunpack.c.0.s8 %v705
    %v707 = vlaneseq
    %v708 = vshrl.u32 %v707, 7
    %v709 = vsub.s32 %v706, %v708
    %v710 = vrot.slane %v702, %v709
    %v712 = vunpack.c.l.s4 1934713408
    %v713 = vunpack.c.0.s8 %v712
    %v714 = vlaneseq
    %v715 = vshrl.u32 %v714, 7
    %v716 = vsub.s32 %v713, %v715
    %v717 = vrot.slane %v703, %v716
    %v718 = vcombine.high %v694, 0.0
    %v719 = vcombine.high %v701, 0.0
    %v720 = vcombine.high %v710, 0.0
    %v721 = vcombine.high %v717, 0.0
    %v722 = vcombine.low %v633, %v641
    %v723 = vcombine.high %v633, %v641
    %v725 = vunpack.c.l.s4 1983009808
    %v726 = vunpack.c.0.s8 %v725
    %v727 = vlaneseq
    %v728 = vshrl.u32 %v727, 7
    %v729 = vsub.s32 %v726, %v728
    %v730 = vrot.slane %v722, %v729
    %v732 = vunpack.c.l.s4 1983009808
    %v733 = vunpack.c.0.s8 %v732
    %v734 = vlaneseq
    %v735 = vshrl.u32 %v734, 7
    %v736 = vsub.s32 %v733, %v735
    %v737 = vrot.slane %v723, %v736
    %v738 = vcombine.low %v637, %v645
    %v739 = vcombine.high %v637, %v645
    %v741 = vunpack.c.l.s4 1983009808
    %v742 = vunpack.c.0.s8 %v741
    %v743 = vlaneseq
    %v744 = vshrl.u32 %v743, 7
    %v745 = vsub.s32 %v742, %v744
    %v746 = vrot.slane %v738, %v745
    %v748 = vunpack.c.l.s4 1983009808
    %v749 = vunpack.c.0.s8 %v748
    %v750 = vlaneseq
    %v751 = vshrl.u32 %v750, 7
    %v752 = vsub.s32 %v749, %v751
    %v753 = vrot.slane %v739, %v752
    %v754 = vcombine.low %v730, %v746
    %v755 = vcombine.high %v730, %v746
    %v757 = vunpack.c.l.s4 1934713408
    %v758 = vunpack.c.0.s8 %v757
    %v759 = vlaneseq
    %v760 = vshrl.u32 %v759, 7
    %v761 = vsub.s32 %v758, %v760
    %v762 = vrot.slane %v754, %v761
    %v764 = vunpack.c.l.s4 1934713408
    %v765 = vunpack.c.0.s8 %v764
    %v766 = vlaneseq
    %v767 = vshrl.u32 %v766, 7
    %v768 = vsub.s32 %v765, %v767
    %v769 = vrot.slane %v755, %v768
    %v770 = vcombine.low %v737, %v753
    %v771 = vcombine.high %v737, %v753
    %v773 = vunpack.c.l.s4 1934713408
    %v774 = vunpack.c.0.s8 %v773
    %v775 = vlaneseq
    %v776 = vshrl.u32 %v775, 7
    %v777 = vsub.s32 %v774, %v776
    %v778 = vrot.slane %v770, %v777
    %v780 = vunpack.c.l.s4 1934713408
    %v781 = vunpack.c.0.s8 %v780
    %v782 = vlaneseq
    %v783 = vshrl.u32 %v782, 7
    %v784 = vsub.s32 %v781, %v783
    %v785 = vrot.slane %v771, %v784
    %v786 = vcombine.high %v762, 0.0
    %v787 = vcombine.high %v769, 0.0
    %v788 = vcombine.high %v778, 0.0
    %v789 = vcombine.high %v785, 0.0
    %791 = vrot.lane.b32.xlu0 %v718, 16
    %v792 = vpop.permute.xlu0 %791
    %795 = vrot.lane.b32.xlu0 %v701, 32
    %v796 = vpop.permute.xlu0 %795
    %799 = vrot.lane.b32.xlu0 %v719, 48
    %v800 = vpop.permute.xlu0 %799
    %803 = vrot.lane.b32.xlu0 %v710, 64
    %v804 = vpop.permute.xlu0 %803
    %807 = vrot.lane.b32.xlu0 %v720, 80
    %v808 = vpop.permute.xlu0 %807
    %811 = vrot.lane.b32.xlu0 %v717, 96
    %v812 = vpop.permute.xlu0 %811
    %815 = vrot.lane.b32.xlu0 %v721, 112
    %v816 = vpop.permute.xlu0 %815
    %819 = vrot.lane.b32.xlu0 %v786, 16
    %v820 = vpop.permute.xlu0 %819
    %823 = vrot.lane.b32.xlu0 %v769, 32
    %v824 = vpop.permute.xlu0 %823
    %827 = vrot.lane.b32.xlu0 %v787, 48
    %v828 = vpop.permute.xlu0 %827
    %831 = vrot.lane.b32.xlu0 %v778, 64
    %v832 = vpop.permute.xlu0 %831
    %835 = vrot.lane.b32.xlu0 %v788, 80
    %v836 = vpop.permute.xlu0 %835
    %839 = vrot.lane.b32.xlu0 %v785, 96
    %v840 = vpop.permute.xlu0 %839
    %843 = vrot.lane.b32.xlu0 %v789, 112
    %v844 = vpop.permute.xlu0 %843
    %v846 = vsel %vm371, %v694, %v792
    %v847 = vsel %vm373, %v846, %v796
    %v848 = vsel %vm375, %v847, %v800
    %v849 = vsel %vm377, %v848, %v804
    %v850 = vsel %vm379, %v849, %v808
    %v851 = vsel %vm381, %v850, %v812
    %v852 = vsel %vm383, %v851, %v816
    %v853 = vsel %vm371, %v762, %v820
    %v854 = vsel %vm373, %v853, %v824
    %v855 = vsel %vm375, %v854, %v828
    %v856 = vsel %vm377, %v855, %v832
    %v857 = vsel %vm379, %v856, %v836
    %v858 = vsel %vm381, %v857, %v840
    %v859 = vsel %vm383, %v858, %v844
    %vm860 = vcmask 1046528
    %v861 = vrot.slane %v171, 1
    %v862 = vrot.slane %v172, 1
    %v863 = vsel %vm860, %v861, %v862
    %v864 = vsel %vm860, %v862, %v861
    %v865 = vrot.slane %v173, 1
    %v866 = vrot.slane %v174, 1
    %v867 = vsel %vm860, %v865, %v866
    %v868 = vsel %vm860, %v866, %v865
    %v869 = vrot.slane %v175, 1
    %v870 = vrot.slane %v176, 1
    %v871 = vsel %vm860, %v869, %v870
    %v872 = vsel %vm860, %v870, %v869
    %v873 = vrot.slane %v177, 1
    %v874 = vrot.slane %v178, 1
    %v875 = vsel %vm860, %v873, %v874
    %v876 = vsel %vm860, %v874, %v873
    %v885 = vcombine.low %v863, %v871
    %v886 = vcombine.high %v863, %v871
    %v888 = vunpack.c.l.s4 1983009808
    %v889 = vunpack.c.0.s8 %v888
    %v890 = vlaneseq
    %v891 = vshrl.u32 %v890, 7
    %v892 = vsub.s32 %v889, %v891
    %v893 = vrot.slane %v885, %v892
    %v895 = vunpack.c.l.s4 1983009808
    %v896 = vunpack.c.0.s8 %v895
    %v897 = vlaneseq
    %v898 = vshrl.u32 %v897, 7
    %v899 = vsub.s32 %v896, %v898
    %v900 = vrot.slane %v886, %v899
    %v901 = vcombine.low %v867, %v875
    %v902 = vcombine.high %v867, %v875
    %v904 = vunpack.c.l.s4 1983009808
    %v905 = vunpack.c.0.s8 %v904
    %v906 = vlaneseq
    %v907 = vshrl.u32 %v906, 7
    %v908 = vsub.s32 %v905, %v907
    %v909 = vrot.slane %v901, %v908
    %v911 = vunpack.c.l.s4 1983009808
    %v912 = vunpack.c.0.s8 %v911
    %v913 = vlaneseq
    %v914 = vshrl.u32 %v913, 7
    %v915 = vsub.s32 %v912, %v914
    %v916 = vrot.slane %v902, %v915
    %v917 = vcombine.low %v893, %v909
    %v918 = vcombine.high %v893, %v909
    %v920 = vunpack.c.l.s4 1934713408
    %v921 = vunpack.c.0.s8 %v920
    %v922 = vlaneseq
    %v923 = vshrl.u32 %v922, 7
    %v924 = vsub.s32 %v921, %v923
    %v925 = vrot.slane %v917, %v924
    %v927 = vunpack.c.l.s4 1934713408
    %v928 = vunpack.c.0.s8 %v927
    %v929 = vlaneseq
    %v930 = vshrl.u32 %v929, 7
    %v931 = vsub.s32 %v928, %v930
    %v932 = vrot.slane %v918, %v931
    %v933 = vcombine.low %v900, %v916
    %v934 = vcombine.high %v900, %v916
    %v936 = vunpack.c.l.s4 1934713408
    %v937 = vunpack.c.0.s8 %v936
    %v938 = vlaneseq
    %v939 = vshrl.u32 %v938, 7
    %v940 = vsub.s32 %v937, %v939
    %v941 = vrot.slane %v933, %v940
    %v943 = vunpack.c.l.s4 1934713408
    %v944 = vunpack.c.0.s8 %v943
    %v945 = vlaneseq
    %v946 = vshrl.u32 %v945, 7
    %v947 = vsub.s32 %v944, %v946
    %v948 = vrot.slane %v934, %v947
    %v949 = vcombine.high %v925, 0.0
    %v950 = vcombine.high %v932, 0.0
    %v951 = vcombine.high %v941, 0.0
    %v952 = vcombine.high %v948, 0.0
    %v953 = vcombine.low %v864, %v872
    %v954 = vcombine.high %v864, %v872
    %v956 = vunpack.c.l.s4 1983009808
    %v957 = vunpack.c.0.s8 %v956
    %v958 = vlaneseq
    %v959 = vshrl.u32 %v958, 7
    %v960 = vsub.s32 %v957, %v959
    %v961 = vrot.slane %v953, %v960
    %v963 = vunpack.c.l.s4 1983009808
    %v964 = vunpack.c.0.s8 %v963
    %v965 = vlaneseq
    %v966 = vshrl.u32 %v965, 7
    %v967 = vsub.s32 %v964, %v966
    %v968 = vrot.slane %v954, %v967
    %v969 = vcombine.low %v868, %v876
    %v970 = vcombine.high %v868, %v876
    %v972 = vunpack.c.l.s4 1983009808
    %v973 = vunpack.c.0.s8 %v972
    %v974 = vlaneseq
    %v975 = vshrl.u32 %v974, 7
    %v976 = vsub.s32 %v973, %v975
    %v977 = vrot.slane %v969, %v976
    %v979 = vunpack.c.l.s4 1983009808
    %v980 = vunpack.c.0.s8 %v979
    %v981 = vlaneseq
    %v982 = vshrl.u32 %v981, 7
    %v983 = vsub.s32 %v980, %v982
    %v984 = vrot.slane %v970, %v983
    %v985 = vcombine.low %v961, %v977
    %v986 = vcombine.high %v961, %v977
    %v988 = vunpack.c.l.s4 1934713408
    %v989 = vunpack.c.0.s8 %v988
    %v990 = vlaneseq
    %v991 = vshrl.u32 %v990, 7
    %v992 = vsub.s32 %v989, %v991
    %v993 = vrot.slane %v985, %v992
    %v995 = vunpack.c.l.s4 1934713408
    %v996 = vunpack.c.0.s8 %v995
    %v997 = vlaneseq
    %v998 = vshrl.u32 %v997, 7
    %v999 = vsub.s32 %v996, %v998
    %v1000 = vrot.slane %v986, %v999
    %v1001 = vcombine.low %v968, %v984
    %v1002 = vcombine.high %v968, %v984
    %v1004 = vunpack.c.l.s4 1934713408
    %v1005 = vunpack.c.0.s8 %v1004
    %v1006 = vlaneseq
    %v1007 = vshrl.u32 %v1006, 7
    %v1008 = vsub.s32 %v1005, %v1007
    %v1009 = vrot.slane %v1001, %v1008
    %v1011 = vunpack.c.l.s4 1934713408
    %v1012 = vunpack.c.0.s8 %v1011
    %v1013 = vlaneseq
    %v1014 = vshrl.u32 %v1013, 7
    %v1015 = vsub.s32 %v1012, %v1014
    %v1016 = vrot.slane %v1002, %v1015
    %v1017 = vcombine.high %v993, 0.0
    %v1018 = vcombine.high %v1000, 0.0
    %v1019 = vcombine.high %v1009, 0.0
    %v1020 = vcombine.high %v1016, 0.0
    %1022 = vrot.lane.b32.xlu0 %v949, 16
    %v1023 = vpop.permute.xlu0 %1022
    %1026 = vrot.lane.b32.xlu0 %v932, 32
    %v1027 = vpop.permute.xlu0 %1026
    %1030 = vrot.lane.b32.xlu0 %v950, 48
    %v1031 = vpop.permute.xlu0 %1030
    %1034 = vrot.lane.b32.xlu0 %v941, 64
    %v1035 = vpop.permute.xlu0 %1034
    %1038 = vrot.lane.b32.xlu0 %v951, 80
    %v1039 = vpop.permute.xlu0 %1038
    %1042 = vrot.lane.b32.xlu0 %v948, 96
    %v1043 = vpop.permute.xlu0 %1042
    %1046 = vrot.lane.b32.xlu0 %v952, 112
    %v1047 = vpop.permute.xlu0 %1046
    %1050 = vrot.lane.b32.xlu0 %v1017, 16
    %v1051 = vpop.permute.xlu0 %1050
    %1054 = vrot.lane.b32.xlu0 %v1000, 32
    %v1055 = vpop.permute.xlu0 %1054
    %1058 = vrot.lane.b32.xlu0 %v1018, 48
    %v1059 = vpop.permute.xlu0 %1058
    %1062 = vrot.lane.b32.xlu0 %v1009, 64
    %v1063 = vpop.permute.xlu0 %1062
    %1066 = vrot.lane.b32.xlu0 %v1019, 80
    %v1067 = vpop.permute.xlu0 %1066
    %1070 = vrot.lane.b32.xlu0 %v1016, 96
    %v1071 = vpop.permute.xlu0 %1070
    %1074 = vrot.lane.b32.xlu0 %v1020, 112
    %v1075 = vpop.permute.xlu0 %1074
    %v1077 = vsel %vm371, %v925, %v1023
    %v1078 = vsel %vm373, %v1077, %v1027
    %v1079 = vsel %vm375, %v1078, %v1031
    %v1080 = vsel %vm377, %v1079, %v1035
    %v1081 = vsel %vm379, %v1080, %v1039
    %v1082 = vsel %vm381, %v1081, %v1043
    %v1083 = vsel %vm383, %v1082, %v1047
    %v1084 = vsel %vm371, %v993, %v1051
    %v1085 = vsel %vm373, %v1084, %v1055
    %v1086 = vsel %vm375, %v1085, %v1059
    %v1087 = vsel %vm377, %v1086, %v1063
    %v1088 = vsel %vm379, %v1087, %v1067
    %v1089 = vsel %vm381, %v1088, %v1071
    %v1090 = vsel %vm383, %v1089, %v1075
    %1091 = vrot.lane.b32.xlu0 %v863, 127
    %v1092 = vpop.permute.xlu0 %1091
    %1093 = vrot.lane.b32.xlu0 %v864, 127
    %v1094 = vpop.permute.xlu0 %1093
    %1095 = vrot.lane.b32.xlu0 %v867, 127
    %v1096 = vpop.permute.xlu0 %1095
    %1097 = vrot.lane.b32.xlu0 %v868, 127
    %v1098 = vpop.permute.xlu0 %1097
    %1099 = vrot.lane.b32.xlu0 %v871, 127
    %v1100 = vpop.permute.xlu0 %1099
    %1101 = vrot.lane.b32.xlu0 %v872, 127
    %v1102 = vpop.permute.xlu0 %1101
    %1103 = vrot.lane.b32.xlu0 %v875, 127
    %v1104 = vpop.permute.xlu0 %1103
    %1105 = vrot.lane.b32.xlu0 %v876, 127
    %v1106 = vpop.permute.xlu0 %1105
    %v1115 = vcombine.low %v1092, %v1100
    %v1116 = vcombine.high %v1092, %v1100
    %v1118 = vunpack.c.l.s4 1983009808
    %v1119 = vunpack.c.0.s8 %v1118
    %v1120 = vlaneseq
    %v1121 = vshrl.u32 %v1120, 7
    %v1122 = vsub.s32 %v1119, %v1121
    %v1123 = vrot.slane %v1115, %v1122
    %v1125 = vunpack.c.l.s4 1983009808
    %v1126 = vunpack.c.0.s8 %v1125
    %v1127 = vlaneseq
    %v1128 = vshrl.u32 %v1127, 7
    %v1129 = vsub.s32 %v1126, %v1128
    %v1130 = vrot.slane %v1116, %v1129
    %v1131 = vcombine.low %v1096, %v1104
    %v1132 = vcombine.high %v1096, %v1104
    %v1134 = vunpack.c.l.s4 1983009808
    %v1135 = vunpack.c.0.s8 %v1134
    %v1136 = vlaneseq
    %v1137 = vshrl.u32 %v1136, 7
    %v1138 = vsub.s32 %v1135, %v1137
    %v1139 = vrot.slane %v1131, %v1138
    %v1141 = vunpack.c.l.s4 1983009808
    %v1142 = vunpack.c.0.s8 %v1141
    %v1143 = vlaneseq
    %v1144 = vshrl.u32 %v1143, 7
    %v1145 = vsub.s32 %v1142, %v1144
    %v1146 = vrot.slane %v1132, %v1145
    %v1147 = vcombine.low %v1123, %v1139
    %v1148 = vcombine.high %v1123, %v1139
    %v1150 = vunpack.c.l.s4 1934713408
    %v1151 = vunpack.c.0.s8 %v1150
    %v1152 = vlaneseq
    %v1153 = vshrl.u32 %v1152, 7
    %v1154 = vsub.s32 %v1151, %v1153
    %v1155 = vrot.slane %v1147, %v1154
    %v1157 = vunpack.c.l.s4 1934713408
    %v1158 = vunpack.c.0.s8 %v1157
    %v1159 = vlaneseq
    %v1160 = vshrl.u32 %v1159, 7
    %v1161 = vsub.s32 %v1158, %v1160
    %v1162 = vrot.slane %v1148, %v1161
    %v1163 = vcombine.low %v1130, %v1146
    %v1164 = vcombine.high %v1130, %v1146
    %v1166 = vunpack.c.l.s4 1934713408
    %v1167 = vunpack.c.0.s8 %v1166
    %v1168 = vlaneseq
    %v1169 = vshrl.u32 %v1168, 7
    %v1170 = vsub.s32 %v1167, %v1169
    %v1171 = vrot.slane %v1163, %v1170
    %v1173 = vunpack.c.l.s4 1934713408
    %v1174 = vunpack.c.0.s8 %v1173
    %v1175 = vlaneseq
    %v1176 = vshrl.u32 %v1175, 7
    %v1177 = vsub.s32 %v1174, %v1176
    %v1178 = vrot.slane %v1164, %v1177
    %v1179 = vcombine.high %v1155, 0.0
    %v1180 = vcombine.high %v1162, 0.0
    %v1181 = vcombine.high %v1171, 0.0
    %v1182 = vcombine.high %v1178, 0.0
    %v1183 = vcombine.low %v1094, %v1102
    %v1184 = vcombine.high %v1094, %v1102
    %v1186 = vunpack.c.l.s4 1983009808
    %v1187 = vunpack.c.0.s8 %v1186
    %v1188 = vlaneseq
    %v1189 = vshrl.u32 %v1188, 7
    %v1190 = vsub.s32 %v1187, %v1189
    %v1191 = vrot.slane %v1183, %v1190
    %v1193 = vunpack.c.l.s4 1983009808
    %v1194 = vunpack.c.0.s8 %v1193
    %v1195 = vlaneseq
    %v1196 = vshrl.u32 %v1195, 7
    %v1197 = vsub.s32 %v1194, %v1196
    %v1198 = vrot.slane %v1184, %v1197
    %v1199 = vcombine.low %v1098, %v1106
    %v1200 = vcombine.high %v1098, %v1106
    %v1202 = vunpack.c.l.s4 1983009808
    %v1203 = vunpack.c.0.s8 %v1202
    %v1204 = vlaneseq
    %v1205 = vshrl.u32 %v1204, 7
    %v1206 = vsub.s32 %v1203, %v1205
    %v1207 = vrot.slane %v1199, %v1206
    %v1209 = vunpack.c.l.s4 1983009808
    %v1210 = vunpack.c.0.s8 %v1209
    %v1211 = vlaneseq
    %v1212 = vshrl.u32 %v1211, 7
    %v1213 = vsub.s32 %v1210, %v1212
    %v1214 = vrot.slane %v1200, %v1213
    %v1215 = vcombine.low %v1191, %v1207
    %v1216 = vcombine.high %v1191, %v1207
    %v1218 = vunpack.c.l.s4 1934713408
    %v1219 = vunpack.c.0.s8 %v1218
    %v1220 = vlaneseq
    %v1221 = vshrl.u32 %v1220, 7
    %v1222 = vsub.s32 %v1219, %v1221
    %v1223 = vrot.slane %v1215, %v1222
    %v1225 = vunpack.c.l.s4 1934713408
    %v1226 = vunpack.c.0.s8 %v1225
    %v1227 = vlaneseq
    %v1228 = vshrl.u32 %v1227, 7
    %v1229 = vsub.s32 %v1226, %v1228
    %v1230 = vrot.slane %v1216, %v1229
    %v1231 = vcombine.low %v1198, %v1214
    %v1232 = vcombine.high %v1198, %v1214
    %v1234 = vunpack.c.l.s4 1934713408
    %v1235 = vunpack.c.0.s8 %v1234
    %v1236 = vlaneseq
    %v1237 = vshrl.u32 %v1236, 7
    %v1238 = vsub.s32 %v1235, %v1237
    %v1239 = vrot.slane %v1231, %v1238
    %v1241 = vunpack.c.l.s4 1934713408
    %v1242 = vunpack.c.0.s8 %v1241
    %v1243 = vlaneseq
    %v1244 = vshrl.u32 %v1243, 7
    %v1245 = vsub.s32 %v1242, %v1244
    %v1246 = vrot.slane %v1232, %v1245
    %v1247 = vcombine.high %v1223, 0.0
    %v1248 = vcombine.high %v1230, 0.0
    %v1249 = vcombine.high %v1239, 0.0
    %v1250 = vcombine.high %v1246, 0.0
    %1252 = vrot.lane.b32.xlu0 %v1179, 16
    %v1253 = vpop.permute.xlu0 %1252
    %1256 = vrot.lane.b32.xlu0 %v1162, 32
    %v1257 = vpop.permute.xlu0 %1256
    %1260 = vrot.lane.b32.xlu0 %v1180, 48
    %v1261 = vpop.permute.xlu0 %1260
    %1264 = vrot.lane.b32.xlu0 %v1171, 64
    %v1265 = vpop.permute.xlu0 %1264
    %1268 = vrot.lane.b32.xlu0 %v1181, 80
    %v1269 = vpop.permute.xlu0 %1268
    %1272 = vrot.lane.b32.xlu0 %v1178, 96
    %v1273 = vpop.permute.xlu0 %1272
    %1276 = vrot.lane.b32.xlu0 %v1182, 112
    %v1277 = vpop.permute.xlu0 %1276
    %1280 = vrot.lane.b32.xlu0 %v1247, 16
    %v1281 = vpop.permute.xlu0 %1280
    %1284 = vrot.lane.b32.xlu0 %v1230, 32
    %v1285 = vpop.permute.xlu0 %1284
    %1288 = vrot.lane.b32.xlu0 %v1248, 48
    %v1289 = vpop.permute.xlu0 %1288
    %1292 = vrot.lane.b32.xlu0 %v1239, 64
    %v1293 = vpop.permute.xlu0 %1292
    %1296 = vrot.lane.b32.xlu0 %v1249, 80
    %v1297 = vpop.permute.xlu0 %1296
    %1300 = vrot.lane.b32.xlu0 %v1246, 96
    %v1301 = vpop.permute.xlu0 %1300
    %1304 = vrot.lane.b32.xlu0 %v1250, 112
    %v1305 = vpop.permute.xlu0 %1304
    %v1307 = vsel %vm371, %v1155, %v1253
    %v1308 = vsel %vm373, %v1307, %v1257
    %v1309 = vsel %vm375, %v1308, %v1261
    %v1310 = vsel %vm377, %v1309, %v1265
    %v1311 = vsel %vm379, %v1310, %v1269
    %v1312 = vsel %vm381, %v1311, %v1273
    %v1313 = vsel %vm383, %v1312, %v1277
    %v1314 = vsel %vm371, %v1223, %v1281
    %v1315 = vsel %vm373, %v1314, %v1285
    %v1316 = vsel %vm375, %v1315, %v1289
    %v1317 = vsel %vm377, %v1316, %v1293
    %v1318 = vsel %vm379, %v1317, %v1297
    %v1319 = vsel %vm381, %v1318, %v1301
    %v1320 = vsel %vm383, %v1319, %v1305
    %1321 = vrot.lane.b32.xlu0 %v863, 126
    %v1322 = vpop.permute.xlu0 %1321
    %1323 = vrot.lane.b32.xlu0 %v864, 126
    %v1324 = vpop.permute.xlu0 %1323
    %1325 = vrot.lane.b32.xlu0 %v867, 126
    %v1326 = vpop.permute.xlu0 %1325
    %1327 = vrot.lane.b32.xlu0 %v868, 126
    %v1328 = vpop.permute.xlu0 %1327
    %1329 = vrot.lane.b32.xlu0 %v871, 126
    %v1330 = vpop.permute.xlu0 %1329
    %1331 = vrot.lane.b32.xlu0 %v872, 126
    %v1332 = vpop.permute.xlu0 %1331
    %1333 = vrot.lane.b32.xlu0 %v875, 126
    %v1334 = vpop.permute.xlu0 %1333
    %1335 = vrot.lane.b32.xlu0 %v876, 126
    %v1336 = vpop.permute.xlu0 %1335
    %v1345 = vcombine.low %v1322, %v1330
    %v1346 = vcombine.high %v1322, %v1330
    %v1348 = vunpack.c.l.s4 1983009808
    %v1349 = vunpack.c.0.s8 %v1348
    %v1350 = vlaneseq
    %v1351 = vshrl.u32 %v1350, 7
    %v1352 = vsub.s32 %v1349, %v1351
    %v1353 = vrot.slane %v1345, %v1352
    %v1355 = vunpack.c.l.s4 1983009808
    %v1356 = vunpack.c.0.s8 %v1355
    %v1357 = vlaneseq
    %v1358 = vshrl.u32 %v1357, 7
    %v1359 = vsub.s32 %v1356, %v1358
    %v1360 = vrot.slane %v1346, %v1359
    %v1361 = vcombine.low %v1326, %v1334
    %v1362 = vcombine.high %v1326, %v1334
    %v1364 = vunpack.c.l.s4 1983009808
    %v1365 = vunpack.c.0.s8 %v1364
    %v1366 = vlaneseq
    %v1367 = vshrl.u32 %v1366, 7
    %v1368 = vsub.s32 %v1365, %v1367
    %v1369 = vrot.slane %v1361, %v1368
    %v1371 = vunpack.c.l.s4 1983009808
    %v1372 = vunpack.c.0.s8 %v1371
    %v1373 = vlaneseq
    %v1374 = vshrl.u32 %v1373, 7
    %v1375 = vsub.s32 %v1372, %v1374
    %v1376 = vrot.slane %v1362, %v1375
    %v1377 = vcombine.low %v1353, %v1369
    %v1378 = vcombine.high %v1353, %v1369
    %v1380 = vunpack.c.l.s4 1934713408
    %v1381 = vunpack.c.0.s8 %v1380
    %v1382 = vlaneseq
    %v1383 = vshrl.u32 %v1382, 7
    %v1384 = vsub.s32 %v1381, %v1383
    %v1385 = vrot.slane %v1377, %v1384
    %v1387 = vunpack.c.l.s4 1934713408
    %v1388 = vunpack.c.0.s8 %v1387
    %v1389 = vlaneseq
    %v1390 = vshrl.u32 %v1389, 7
    %v1391 = vsub.s32 %v1388, %v1390
    %v1392 = vrot.slane %v1378, %v1391
    %v1393 = vcombine.low %v1360, %v1376
    %v1394 = vcombine.high %v1360, %v1376
    %v1396 = vunpack.c.l.s4 1934713408
    %v1397 = vunpack.c.0.s8 %v1396
    %v1398 = vlaneseq
    %v1399 = vshrl.u32 %v1398, 7
    %v1400 = vsub.s32 %v1397, %v1399
    %v1401 = vrot.slane %v1393, %v1400
    %v1403 = vunpack.c.l.s4 1934713408
    %v1404 = vunpack.c.0.s8 %v1403
    %v1405 = vlaneseq
    %v1406 = vshrl.u32 %v1405, 7
    %v1407 = vsub.s32 %v1404, %v1406
    %v1408 = vrot.slane %v1394, %v1407
    %v1409 = vcombine.high %v1385, 0.0
    %v1410 = vcombine.high %v1392, 0.0
    %v1411 = vcombine.high %v1401, 0.0
    %v1412 = vcombine.high %v1408, 0.0
    %v1413 = vcombine.low %v1324, %v1332
    %v1414 = vcombine.high %v1324, %v1332
    %v1416 = vunpack.c.l.s4 1983009808
    %v1417 = vunpack.c.0.s8 %v1416
    %v1418 = vlaneseq
    %v1419 = vshrl.u32 %v1418, 7
    %v1420 = vsub.s32 %v1417, %v1419
    %v1421 = vrot.slane %v1413, %v1420
    %v1423 = vunpack.c.l.s4 1983009808
    %v1424 = vunpack.c.0.s8 %v1423
    %v1425 = vlaneseq
    %v1426 = vshrl.u32 %v1425, 7
    %v1427 = vsub.s32 %v1424, %v1426
    %v1428 = vrot.slane %v1414, %v1427
    %v1429 = vcombine.low %v1328, %v1336
    %v1430 = vcombine.high %v1328, %v1336
    %v1432 = vunpack.c.l.s4 1983009808
    %v1433 = vunpack.c.0.s8 %v1432
    %v1434 = vlaneseq
    %v1435 = vshrl.u32 %v1434, 7
    %v1436 = vsub.s32 %v1433, %v1435
    %v1437 = vrot.slane %v1429, %v1436
    %v1439 = vunpack.c.l.s4 1983009808
    %v1440 = vunpack.c.0.s8 %v1439
    %v1441 = vlaneseq
    %v1442 = vshrl.u32 %v1441, 7
    %v1443 = vsub.s32 %v1440, %v1442
    %v1444 = vrot.slane %v1430, %v1443
    %v1445 = vcombine.low %v1421, %v1437
    %v1446 = vcombine.high %v1421, %v1437
    %v1448 = vunpack.c.l.s4 1934713408
    %v1449 = vunpack.c.0.s8 %v1448
    %v1450 = vlaneseq
    %v1451 = vshrl.u32 %v1450, 7
    %v1452 = vsub.s32 %v1449, %v1451
    %v1453 = vrot.slane %v1445, %v1452
    %v1455 = vunpack.c.l.s4 1934713408
    %v1456 = vunpack.c.0.s8 %v1455
    %v1457 = vlaneseq
    %v1458 = vshrl.u32 %v1457, 7
    %v1459 = vsub.s32 %v1456, %v1458
    %v1460 = vrot.slane %v1446, %v1459
    %v1461 = vcombine.low %v1428, %v1444
    %v1462 = vcombine.high %v1428, %v1444
    %v1464 = vunpack.c.l.s4 1934713408
    %v1465 = vunpack.c.0.s8 %v1464
    %v1466 = vlaneseq
    %v1467 = vshrl.u32 %v1466, 7
    %v1468 = vsub.s32 %v1465, %v1467
    %v1469 = vrot.slane %v1461, %v1468
    %v1471 = vunpack.c.l.s4 1934713408
    %v1472 = vunpack.c.0.s8 %v1471
    %v1473 = vlaneseq
    %v1474 = vshrl.u32 %v1473, 7
    %v1475 = vsub.s32 %v1472, %v1474
    %v1476 = vrot.slane %v1462, %v1475
    %v1477 = vcombine.high %v1453, 0.0
    %v1478 = vcombine.high %v1460, 0.0
    %v1479 = vcombine.high %v1469, 0.0
    %v1480 = vcombine.high %v1476, 0.0
    %1482 = vrot.lane.b32.xlu0 %v1409, 16
    %v1483 = vpop.permute.xlu0 %1482
    %1486 = vrot.lane.b32.xlu0 %v1392, 32
    %v1487 = vpop.permute.xlu0 %1486
    %1490 = vrot.lane.b32.xlu0 %v1410, 48
    %v1491 = vpop.permute.xlu0 %1490
    %1494 = vrot.lane.b32.xlu0 %v1401, 64
    %v1495 = vpop.permute.xlu0 %1494
    %1498 = vrot.lane.b32.xlu0 %v1411, 80
    %v1499 = vpop.permute.xlu0 %1498
    %1502 = vrot.lane.b32.xlu0 %v1408, 96
    %v1503 = vpop.permute.xlu0 %1502
    %1506 = vrot.lane.b32.xlu0 %v1412, 112
    %v1507 = vpop.permute.xlu0 %1506
    %1510 = vrot.lane.b32.xlu0 %v1477, 16
    %v1511 = vpop.permute.xlu0 %1510
    %1514 = vrot.lane.b32.xlu0 %v1460, 32
    %v1515 = vpop.permute.xlu0 %1514
    %1518 = vrot.lane.b32.xlu0 %v1478, 48
    %v1519 = vpop.permute.xlu0 %1518
    %1522 = vrot.lane.b32.xlu0 %v1469, 64
    %v1523 = vpop.permute.xlu0 %1522
    %1526 = vrot.lane.b32.xlu0 %v1479, 80
    %v1527 = vpop.permute.xlu0 %1526
    %1530 = vrot.lane.b32.xlu0 %v1476, 96
    %v1531 = vpop.permute.xlu0 %1530
    %1534 = vrot.lane.b32.xlu0 %v1480, 112
    %v1535 = vpop.permute.xlu0 %1534
    %v1537 = vsel %vm371, %v1385, %v1483
    %v1538 = vsel %vm373, %v1537, %v1487
    %v1539 = vsel %vm375, %v1538, %v1491
    %v1540 = vsel %vm377, %v1539, %v1495
    %v1541 = vsel %vm379, %v1540, %v1499
    %v1542 = vsel %vm381, %v1541, %v1503
    %v1543 = vsel %vm383, %v1542, %v1507
    %v1544 = vsel %vm371, %v1453, %v1511
    %v1545 = vsel %vm373, %v1544, %v1515
    %v1546 = vsel %vm375, %v1545, %v1519
    %v1547 = vsel %vm377, %v1546, %v1523
    %v1548 = vsel %vm379, %v1547, %v1527
    %v1549 = vsel %vm381, %v1548, %v1531
    %v1550 = vsel %vm383, %v1549, %v1535
    %vm1551 = vcmask 1045504
    %v1552 = vrot.slane %v171, 2
    %v1553 = vrot.slane %v172, 2
    %v1554 = vsel %vm1551, %v1552, %v1553
    %v1555 = vsel %vm1551, %v1553, %v1552
    %v1556 = vrot.slane %v173, 2
    %v1557 = vrot.slane %v174, 2
    %v1558 = vsel %vm1551, %v1556, %v1557
    %v1559 = vsel %vm1551, %v1557, %v1556
    %v1560 = vrot.slane %v175, 2
    %v1561 = vrot.slane %v176, 2
    %v1562 = vsel %vm1551, %v1560, %v1561
    %v1563 = vsel %vm1551, %v1561, %v1560
    %v1564 = vrot.slane %v177, 2
    %v1565 = vrot.slane %v178, 2
    %v1566 = vsel %vm1551, %v1564, %v1565
    %v1567 = vsel %vm1551, %v1565, %v1564
    %v1576 = vcombine.low %v1554, %v1562
    %v1577 = vcombine.high %v1554, %v1562
    %v1579 = vunpack.c.l.s4 1983009808
    %v1580 = vunpack.c.0.s8 %v1579
    %v1581 = vlaneseq
    %v1582 = vshrl.u32 %v1581, 7
    %v1583 = vsub.s32 %v1580, %v1582
    %v1584 = vrot.slane %v1576, %v1583
    %v1586 = vunpack.c.l.s4 1983009808
    %v1587 = vunpack.c.0.s8 %v1586
    %v1588 = vlaneseq
    %v1589 = vshrl.u32 %v1588, 7
    %v1590 = vsub.s32 %v1587, %v1589
    %v1591 = vrot.slane %v1577, %v1590
    %v1592 = vcombine.low %v1558, %v1566
    %v1593 = vcombine.high %v1558, %v1566
    %v1595 = vunpack.c.l.s4 1983009808
    %v1596 = vunpack.c.0.s8 %v1595
    %v1597 = vlaneseq
    %v1598 = vshrl.u32 %v1597, 7
    %v1599 = vsub.s32 %v1596, %v1598
    %v1600 = vrot.slane %v1592, %v1599
    %v1602 = vunpack.c.l.s4 1983009808
    %v1603 = vunpack.c.0.s8 %v1602
    %v1604 = vlaneseq
    %v1605 = vshrl.u32 %v1604, 7
    %v1606 = vsub.s32 %v1603, %v1605
    %v1607 = vrot.slane %v1593, %v1606
    %v1608 = vcombine.low %v1584, %v1600
    %v1609 = vcombine.high %v1584, %v1600
    %v1611 = vunpack.c.l.s4 1934713408
    %v1612 = vunpack.c.0.s8 %v1611
    %v1613 = vlaneseq
    %v1614 = vshrl.u32 %v1613, 7
    %v1615 = vsub.s32 %v1612, %v1614
    %v1616 = vrot.slane %v1608, %v1615
    %v1618 = vunpack.c.l.s4 1934713408
    %v1619 = vunpack.c.0.s8 %v1618
    %v1620 = vlaneseq
    %v1621 = vshrl.u32 %v1620, 7
    %v1622 = vsub.s32 %v1619, %v1621
    %v1623 = vrot.slane %v1609, %v1622
    %v1624 = vcombine.low %v1591, %v1607
    %v1625 = vcombine.high %v1591, %v1607
    %v1627 = vunpack.c.l.s4 1934713408
    %v1628 = vunpack.c.0.s8 %v1627
    %v1629 = vlaneseq
    %v1630 = vshrl.u32 %v1629, 7
    %v1631 = vsub.s32 %v1628, %v1630
    %v1632 = vrot.slane %v1624, %v1631
    %v1634 = vunpack.c.l.s4 1934713408
    %v1635 = vunpack.c.0.s8 %v1634
    %v1636 = vlaneseq
    %v1637 = vshrl.u32 %v1636, 7
    %v1638 = vsub.s32 %v1635, %v1637
    %v1639 = vrot.slane %v1625, %v1638
    %v1640 = vcombine.high %v1616, 0.0
    %v1641 = vcombine.high %v1623, 0.0
    %v1642 = vcombine.high %v1632, 0.0
    %v1643 = vcombine.high %v1639, 0.0
    %v1644 = vcombine.low %v1555, %v1563
    %v1645 = vcombine.high %v1555, %v1563
    %v1647 = vunpack.c.l.s4 1983009808
    %v1648 = vunpack.c.0.s8 %v1647
    %v1649 = vlaneseq
    %v1650 = vshrl.u32 %v1649, 7
    %v1651 = vsub.s32 %v1648, %v1650
    %v1652 = vrot.slane %v1644, %v1651
    %v1654 = vunpack.c.l.s4 1983009808
    %v1655 = vunpack.c.0.s8 %v1654
    %v1656 = vlaneseq
    %v1657 = vshrl.u32 %v1656, 7
    %v1658 = vsub.s32 %v1655, %v1657
    %v1659 = vrot.slane %v1645, %v1658
    %v1660 = vcombine.low %v1559, %v1567
    %v1661 = vcombine.high %v1559, %v1567
    %v1663 = vunpack.c.l.s4 1983009808
    %v1664 = vunpack.c.0.s8 %v1663
    %v1665 = vlaneseq
    %v1666 = vshrl.u32 %v1665, 7
    %v1667 = vsub.s32 %v1664, %v1666
    %v1668 = vrot.slane %v1660, %v1667
    %v1670 = vunpack.c.l.s4 1983009808
    %v1671 = vunpack.c.0.s8 %v1670
    %v1672 = vlaneseq
    %v1673 = vshrl.u32 %v1672, 7
    %v1674 = vsub.s32 %v1671, %v1673
    %v1675 = vrot.slane %v1661, %v1674
    %v1676 = vcombine.low %v1652, %v1668
    %v1677 = vcombine.high %v1652, %v1668
    %v1679 = vunpack.c.l.s4 1934713408
    %v1680 = vunpack.c.0.s8 %v1679
    %v1681 = vlaneseq
    %v1682 = vshrl.u32 %v1681, 7
    %v1683 = vsub.s32 %v1680, %v1682
    %v1684 = vrot.slane %v1676, %v1683
    %v1686 = vunpack.c.l.s4 1934713408
    %v1687 = vunpack.c.0.s8 %v1686
    %v1688 = vlaneseq
    %v1689 = vshrl.u32 %v1688, 7
    %v1690 = vsub.s32 %v1687, %v1689
    %v1691 = vrot.slane %v1677, %v1690
    %v1692 = vcombine.low %v1659, %v1675
    %v1693 = vcombine.high %v1659, %v1675
    %v1695 = vunpack.c.l.s4 1934713408
    %v1696 = vunpack.c.0.s8 %v1695
    %v1697 = vlaneseq
    %v1698 = vshrl.u32 %v1697, 7
    %v1699 = vsub.s32 %v1696, %v1698
    %v1700 = vrot.slane %v1692, %v1699
    %v1702 = vunpack.c.l.s4 1934713408
    %v1703 = vunpack.c.0.s8 %v1702
    %v1704 = vlaneseq
    %v1705 = vshrl.u32 %v1704, 7
    %v1706 = vsub.s32 %v1703, %v1705
    %v1707 = vrot.slane %v1693, %v1706
    %v1708 = vcombine.high %v1684, 0.0
    %v1709 = vcombine.high %v1691, 0.0
    %v1710 = vcombine.high %v1700, 0.0
    %v1711 = vcombine.high %v1707, 0.0
    %1713 = vrot.lane.b32.xlu0 %v1640, 16
    %v1714 = vpop.permute.xlu0 %1713
    %1717 = vrot.lane.b32.xlu0 %v1623, 32
    %v1718 = vpop.permute.xlu0 %1717
    %1721 = vrot.lane.b32.xlu0 %v1641, 48
    %v1722 = vpop.permute.xlu0 %1721
    %1725 = vrot.lane.b32.xlu0 %v1632, 64
    %v1726 = vpop.permute.xlu0 %1725
    %1729 = vrot.lane.b32.xlu0 %v1642, 80
    %v1730 = vpop.permute.xlu0 %1729
    %1733 = vrot.lane.b32.xlu0 %v1639, 96
    %v1734 = vpop.permute.xlu0 %1733
    %1737 = vrot.lane.b32.xlu0 %v1643, 112
    %v1738 = vpop.permute.xlu0 %1737
    %1741 = vrot.lane.b32.xlu0 %v1708, 16
    %v1742 = vpop.permute.xlu0 %1741
    %1745 = vrot.lane.b32.xlu0 %v1691, 32
    %v1746 = vpop.permute.xlu0 %1745
    %1749 = vrot.lane.b32.xlu0 %v1709, 48
    %v1750 = vpop.permute.xlu0 %1749
    %1753 = vrot.lane.b32.xlu0 %v1700, 64
    %v1754 = vpop.permute.xlu0 %1753
    %1757 = vrot.lane.b32.xlu0 %v1710, 80
    %v1758 = vpop.permute.xlu0 %1757
    %1761 = vrot.lane.b32.xlu0 %v1707, 96
    %v1762 = vpop.permute.xlu0 %1761
    %1765 = vrot.lane.b32.xlu0 %v1711, 112
    %v1766 = vpop.permute.xlu0 %1765
    %v1768 = vsel %vm371, %v1616, %v1714
    %v1769 = vsel %vm373, %v1768, %v1718
    %v1770 = vsel %vm375, %v1769, %v1722
    %v1771 = vsel %vm377, %v1770, %v1726
    %v1772 = vsel %vm379, %v1771, %v1730
    %v1773 = vsel %vm381, %v1772, %v1734
    %v1774 = vsel %vm383, %v1773, %v1738
    %v1775 = vsel %vm371, %v1684, %v1742
    %v1776 = vsel %vm373, %v1775, %v1746
    %v1777 = vsel %vm375, %v1776, %v1750
    %v1778 = vsel %vm377, %v1777, %v1754
    %v1779 = vsel %vm379, %v1778, %v1758
    %v1780 = vsel %vm381, %v1779, %v1762
    %v1781 = vsel %vm383, %v1780, %v1766
    %1782 = vrot.lane.b32.xlu0 %v1554, 127
    %v1783 = vpop.permute.xlu0 %1782
    %1784 = vrot.lane.b32.xlu0 %v1555, 127
    %v1785 = vpop.permute.xlu0 %1784
    %1786 = vrot.lane.b32.xlu0 %v1558, 127
    %v1787 = vpop.permute.xlu0 %1786
    %1788 = vrot.lane.b32.xlu0 %v1559, 127
    %v1789 = vpop.permute.xlu0 %1788
    %1790 = vrot.lane.b32.xlu0 %v1562, 127
    %v1791 = vpop.permute.xlu0 %1790
    %1792 = vrot.lane.b32.xlu0 %v1563, 127
    %v1793 = vpop.permute.xlu0 %1792
    %1794 = vrot.lane.b32.xlu0 %v1566, 127
    %v1795 = vpop.permute.xlu0 %1794
    %1796 = vrot.lane.b32.xlu0 %v1567, 127
    %v1797 = vpop.permute.xlu0 %1796
    %v1806 = vcombine.low %v1783, %v1791
    %v1807 = vcombine.high %v1783, %v1791
    %v1809 = vunpack.c.l.s4 1983009808
    %v1810 = vunpack.c.0.s8 %v1809
    %v1811 = vlaneseq
    %v1812 = vshrl.u32 %v1811, 7
    %v1813 = vsub.s32 %v1810, %v1812
    %v1814 = vrot.slane %v1806, %v1813
    %v1816 = vunpack.c.l.s4 1983009808
    %v1817 = vunpack.c.0.s8 %v1816
    %v1818 = vlaneseq
    %v1819 = vshrl.u32 %v1818, 7
    %v1820 = vsub.s32 %v1817, %v1819
    %v1821 = vrot.slane %v1807, %v1820
    %v1822 = vcombine.low %v1787, %v1795
    %v1823 = vcombine.high %v1787, %v1795
    %v1825 = vunpack.c.l.s4 1983009808
    %v1826 = vunpack.c.0.s8 %v1825
    %v1827 = vlaneseq
    %v1828 = vshrl.u32 %v1827, 7
    %v1829 = vsub.s32 %v1826, %v1828
    %v1830 = vrot.slane %v1822, %v1829
    %v1832 = vunpack.c.l.s4 1983009808
    %v1833 = vunpack.c.0.s8 %v1832
    %v1834 = vlaneseq
    %v1835 = vshrl.u32 %v1834, 7
    %v1836 = vsub.s32 %v1833, %v1835
    %v1837 = vrot.slane %v1823, %v1836
    %v1838 = vcombine.low %v1814, %v1830
    %v1839 = vcombine.high %v1814, %v1830
    %v1841 = vunpack.c.l.s4 1934713408
    %v1842 = vunpack.c.0.s8 %v1841
    %v1843 = vlaneseq
    %v1844 = vshrl.u32 %v1843, 7
    %v1845 = vsub.s32 %v1842, %v1844
    %v1846 = vrot.slane %v1838, %v1845
    %v1848 = vunpack.c.l.s4 1934713408
    %v1849 = vunpack.c.0.s8 %v1848
    %v1850 = vlaneseq
    %v1851 = vshrl.u32 %v1850, 7
    %v1852 = vsub.s32 %v1849, %v1851
    %v1853 = vrot.slane %v1839, %v1852
    %v1854 = vcombine.low %v1821, %v1837
    %v1855 = vcombine.high %v1821, %v1837
    %v1857 = vunpack.c.l.s4 1934713408
    %v1858 = vunpack.c.0.s8 %v1857
    %v1859 = vlaneseq
    %v1860 = vshrl.u32 %v1859, 7
    %v1861 = vsub.s32 %v1858, %v1860
    %v1862 = vrot.slane %v1854, %v1861
    %v1864 = vunpack.c.l.s4 1934713408
    %v1865 = vunpack.c.0.s8 %v1864
    %v1866 = vlaneseq
    %v1867 = vshrl.u32 %v1866, 7
    %v1868 = vsub.s32 %v1865, %v1867
    %v1869 = vrot.slane %v1855, %v1868
    %v1870 = vcombine.high %v1846, 0.0
    %v1871 = vcombine.high %v1853, 0.0
    %v1872 = vcombine.high %v1862, 0.0
    %v1873 = vcombine.high %v1869, 0.0
    %v1874 = vcombine.low %v1785, %v1793
    %v1875 = vcombine.high %v1785, %v1793
    %v1877 = vunpack.c.l.s4 1983009808
    %v1878 = vunpack.c.0.s8 %v1877
    %v1879 = vlaneseq
    %v1880 = vshrl.u32 %v1879, 7
    %v1881 = vsub.s32 %v1878, %v1880
    %v1882 = vrot.slane %v1874, %v1881
    %v1884 = vunpack.c.l.s4 1983009808
    %v1885 = vunpack.c.0.s8 %v1884
    %v1886 = vlaneseq
    %v1887 = vshrl.u32 %v1886, 7
    %v1888 = vsub.s32 %v1885, %v1887
    %v1889 = vrot.slane %v1875, %v1888
    %v1890 = vcombine.low %v1789, %v1797
    %v1891 = vcombine.high %v1789, %v1797
    %v1893 = vunpack.c.l.s4 1983009808
    %v1894 = vunpack.c.0.s8 %v1893
    %v1895 = vlaneseq
    %v1896 = vshrl.u32 %v1895, 7
    %v1897 = vsub.s32 %v1894, %v1896
    %v1898 = vrot.slane %v1890, %v1897
    %v1900 = vunpack.c.l.s4 1983009808
    %v1901 = vunpack.c.0.s8 %v1900
    %v1902 = vlaneseq
    %v1903 = vshrl.u32 %v1902, 7
    %v1904 = vsub.s32 %v1901, %v1903
    %v1905 = vrot.slane %v1891, %v1904
    %v1906 = vcombine.low %v1882, %v1898
    %v1907 = vcombine.high %v1882, %v1898
    %v1909 = vunpack.c.l.s4 1934713408
    %v1910 = vunpack.c.0.s8 %v1909
    %v1911 = vlaneseq
    %v1912 = vshrl.u32 %v1911, 7
    %v1913 = vsub.s32 %v1910, %v1912
    %v1914 = vrot.slane %v1906, %v1913
    %v1916 = vunpack.c.l.s4 1934713408
    %v1917 = vunpack.c.0.s8 %v1916
    %v1918 = vlaneseq
    %v1919 = vshrl.u32 %v1918, 7
    %v1920 = vsub.s32 %v1917, %v1919
    %v1921 = vrot.slane %v1907, %v1920
    %v1922 = vcombine.low %v1889, %v1905
    %v1923 = vcombine.high %v1889, %v1905
    %v1925 = vunpack.c.l.s4 1934713408
    %v1926 = vunpack.c.0.s8 %v1925
    %v1927 = vlaneseq
    %v1928 = vshrl.u32 %v1927, 7
    %v1929 = vsub.s32 %v1926, %v1928
    %v1930 = vrot.slane %v1922, %v1929
    %v1932 = vunpack.c.l.s4 1934713408
    %v1933 = vunpack.c.0.s8 %v1932
    %v1934 = vlaneseq
    %v1935 = vshrl.u32 %v1934, 7
    %v1936 = vsub.s32 %v1933, %v1935
    %v1937 = vrot.slane %v1923, %v1936
    %v1938 = vcombine.high %v1914, 0.0
    %v1939 = vcombine.high %v1921, 0.0
    %v1940 = vcombine.high %v1930, 0.0
    %v1941 = vcombine.high %v1937, 0.0
    %1943 = vrot.lane.b32.xlu0 %v1870, 16
    %v1944 = vpop.permute.xlu0 %1943
    %1947 = vrot.lane.b32.xlu0 %v1853, 32
    %v1948 = vpop.permute.xlu0 %1947
    %1951 = vrot.lane.b32.xlu0 %v1871, 48
    %v1952 = vpop.permute.xlu0 %1951
    %1955 = vrot.lane.b32.xlu0 %v1862, 64
    %v1956 = vpop.permute.xlu0 %1955
    %1959 = vrot.lane.b32.xlu0 %v1872, 80
    %v1960 = vpop.permute.xlu0 %1959
    %1963 = vrot.lane.b32.xlu0 %v1869, 96
    %v1964 = vpop.permute.xlu0 %1963
    %1967 = vrot.lane.b32.xlu0 %v1873, 112
    %v1968 = vpop.permute.xlu0 %1967
    %1971 = vrot.lane.b32.xlu0 %v1938, 16
    %v1972 = vpop.permute.xlu0 %1971
    %1975 = vrot.lane.b32.xlu0 %v1921, 32
    %v1976 = vpop.permute.xlu0 %1975
    %1979 = vrot.lane.b32.xlu0 %v1939, 48
    %v1980 = vpop.permute.xlu0 %1979
    %1983 = vrot.lane.b32.xlu0 %v1930, 64
    %v1984 = vpop.permute.xlu0 %1983
    %1987 = vrot.lane.b32.xlu0 %v1940, 80
    %v1988 = vpop.permute.xlu0 %1987
    %1991 = vrot.lane.b32.xlu0 %v1937, 96
    %v1992 = vpop.permute.xlu0 %1991
    %1995 = vrot.lane.b32.xlu0 %v1941, 112
    %v1996 = vpop.permute.xlu0 %1995
    %v1998 = vsel %vm371, %v1846, %v1944
    %v1999 = vsel %vm373, %v1998, %v1948
    %v2000 = vsel %vm375, %v1999, %v1952
    %v2001 = vsel %vm377, %v2000, %v1956
    %v2002 = vsel %vm379, %v2001, %v1960
    %v2003 = vsel %vm381, %v2002, %v1964
    %v2004 = vsel %vm383, %v2003, %v1968
    %v2005 = vsel %vm371, %v1914, %v1972
    %v2006 = vsel %vm373, %v2005, %v1976
    %v2007 = vsel %vm375, %v2006, %v1980
    %v2008 = vsel %vm377, %v2007, %v1984
    %v2009 = vsel %vm379, %v2008, %v1988
    %v2010 = vsel %vm381, %v2009, %v1992
    %v2011 = vsel %vm383, %v2010, %v1996
    %2012 = vrot.lane.b32.xlu0 %v1554, 126
    %v2013 = vpop.permute.xlu0 %2012
    %2014 = vrot.lane.b32.xlu0 %v1555, 126
    %v2015 = vpop.permute.xlu0 %2014
    %2016 = vrot.lane.b32.xlu0 %v1558, 126
    %v2017 = vpop.permute.xlu0 %2016
    %2018 = vrot.lane.b32.xlu0 %v1559, 126
    %v2019 = vpop.permute.xlu0 %2018
    %2020 = vrot.lane.b32.xlu0 %v1562, 126
    %v2021 = vpop.permute.xlu0 %2020
    %2022 = vrot.lane.b32.xlu0 %v1563, 126
    %v2023 = vpop.permute.xlu0 %2022
    %2024 = vrot.lane.b32.xlu0 %v1566, 126
    %v2025 = vpop.permute.xlu0 %2024
    %2026 = vrot.lane.b32.xlu0 %v1567, 126
    %v2027 = vpop.permute.xlu0 %2026
    %v2036 = vcombine.low %v2013, %v2021
    %v2037 = vcombine.high %v2013, %v2021
    %v2039 = vunpack.c.l.s4 1983009808
    %v2040 = vunpack.c.0.s8 %v2039
    %v2041 = vlaneseq
    %v2042 = vshrl.u32 %v2041, 7
    %v2043 = vsub.s32 %v2040, %v2042
    %v2044 = vrot.slane %v2036, %v2043
    %v2046 = vunpack.c.l.s4 1983009808
    %v2047 = vunpack.c.0.s8 %v2046
    %v2048 = vlaneseq
    %v2049 = vshrl.u32 %v2048, 7
    %v2050 = vsub.s32 %v2047, %v2049
    %v2051 = vrot.slane %v2037, %v2050
    %v2052 = vcombine.low %v2017, %v2025
    %v2053 = vcombine.high %v2017, %v2025
    %v2055 = vunpack.c.l.s4 1983009808
    %v2056 = vunpack.c.0.s8 %v2055
    %v2057 = vlaneseq
    %v2058 = vshrl.u32 %v2057, 7
    %v2059 = vsub.s32 %v2056, %v2058
    %v2060 = vrot.slane %v2052, %v2059
    %v2062 = vunpack.c.l.s4 1983009808
    %v2063 = vunpack.c.0.s8 %v2062
    %v2064 = vlaneseq
    %v2065 = vshrl.u32 %v2064, 7
    %v2066 = vsub.s32 %v2063, %v2065
    %v2067 = vrot.slane %v2053, %v2066
    %v2068 = vcombine.low %v2044, %v2060
    %v2069 = vcombine.high %v2044, %v2060
    %v2071 = vunpack.c.l.s4 1934713408
    %v2072 = vunpack.c.0.s8 %v2071
    %v2073 = vlaneseq
    %v2074 = vshrl.u32 %v2073, 7
    %v2075 = vsub.s32 %v2072, %v2074
    %v2076 = vrot.slane %v2068, %v2075
    %v2078 = vunpack.c.l.s4 1934713408
    %v2079 = vunpack.c.0.s8 %v2078
    %v2080 = vlaneseq
    %v2081 = vshrl.u32 %v2080, 7
    %v2082 = vsub.s32 %v2079, %v2081
    %v2083 = vrot.slane %v2069, %v2082
    %v2084 = vcombine.low %v2051, %v2067
    %v2085 = vcombine.high %v2051, %v2067
    %v2087 = vunpack.c.l.s4 1934713408
    %v2088 = vunpack.c.0.s8 %v2087
    %v2089 = vlaneseq
    %v2090 = vshrl.u32 %v2089, 7
    %v2091 = vsub.s32 %v2088, %v2090
    %v2092 = vrot.slane %v2084, %v2091
    %v2094 = vunpack.c.l.s4 1934713408
    %v2095 = vunpack.c.0.s8 %v2094
    %v2096 = vlaneseq
    %v2097 = vshrl.u32 %v2096, 7
    %v2098 = vsub.s32 %v2095, %v2097
    %v2099 = vrot.slane %v2085, %v2098
    %v2100 = vcombine.high %v2076, 0.0
    %v2101 = vcombine.high %v2083, 0.0
    %v2102 = vcombine.high %v2092, 0.0
    %v2103 = vcombine.high %v2099, 0.0
    %v2104 = vcombine.low %v2015, %v2023
    %v2105 = vcombine.high %v2015, %v2023
    %v2107 = vunpack.c.l.s4 1983009808
    %v2108 = vunpack.c.0.s8 %v2107
    %v2109 = vlaneseq
    %v2110 = vshrl.u32 %v2109, 7
    %v2111 = vsub.s32 %v2108, %v2110
    %v2112 = vrot.slane %v2104, %v2111
    %v2114 = vunpack.c.l.s4 1983009808
    %v2115 = vunpack.c.0.s8 %v2114
    %v2116 = vlaneseq
    %v2117 = vshrl.u32 %v2116, 7
    %v2118 = vsub.s32 %v2115, %v2117
    %v2119 = vrot.slane %v2105, %v2118
    %v2120 = vcombine.low %v2019, %v2027
    %v2121 = vcombine.high %v2019, %v2027
    %v2123 = vunpack.c.l.s4 1983009808
    %v2124 = vunpack.c.0.s8 %v2123
    %v2125 = vlaneseq
    %v2126 = vshrl.u32 %v2125, 7
    %v2127 = vsub.s32 %v2124, %v2126
    %v2128 = vrot.slane %v2120, %v2127
    %v2130 = vunpack.c.l.s4 1983009808
    %v2131 = vunpack.c.0.s8 %v2130
    %v2132 = vlaneseq
    %v2133 = vshrl.u32 %v2132, 7
    %v2134 = vsub.s32 %v2131, %v2133
    %v2135 = vrot.slane %v2121, %v2134
    %v2136 = vcombine.low %v2112, %v2128
    %v2137 = vcombine.high %v2112, %v2128
    %v2139 = vunpack.c.l.s4 1934713408
    %v2140 = vunpack.c.0.s8 %v2139
    %v2141 = vlaneseq
    %v2142 = vshrl.u32 %v2141, 7
    %v2143 = vsub.s32 %v2140, %v2142
    %v2144 = vrot.slane %v2136, %v2143
    %v2146 = vunpack.c.l.s4 1934713408
    %v2147 = vunpack.c.0.s8 %v2146
    %v2148 = vlaneseq
    %v2149 = vshrl.u32 %v2148, 7
    %v2150 = vsub.s32 %v2147, %v2149
    %v2151 = vrot.slane %v2137, %v2150
    %v2152 = vcombine.low %v2119, %v2135
    %v2153 = vcombine.high %v2119, %v2135
    %v2155 = vunpack.c.l.s4 1934713408
    %v2156 = vunpack.c.0.s8 %v2155
    %v2157 = vlaneseq
    %v2158 = vshrl.u32 %v2157, 7
    %v2159 = vsub.s32 %v2156, %v2158
    %v2160 = vrot.slane %v2152, %v2159
    %v2162 = vunpack.c.l.s4 1934713408
    %v2163 = vunpack.c.0.s8 %v2162
    %v2164 = vlaneseq
    %v2165 = vshrl.u32 %v2164, 7
    %v2166 = vsub.s32 %v2163, %v2165
    %v2167 = vrot.slane %v2153, %v2166
    %v2168 = vcombine.high %v2144, 0.0
    %v2169 = vcombine.high %v2151, 0.0
    %v2170 = vcombine.high %v2160, 0.0
    %v2171 = vcombine.high %v2167, 0.0
    %2173 = vrot.lane.b32.xlu0 %v2100, 16
    %v2174 = vpop.permute.xlu0 %2173
    %2177 = vrot.lane.b32.xlu0 %v2083, 32
    %v2178 = vpop.permute.xlu0 %2177
    %2181 = vrot.lane.b32.xlu0 %v2101, 48
    %v2182 = vpop.permute.xlu0 %2181
    %2185 = vrot.lane.b32.xlu0 %v2092, 64
    %v2186 = vpop.permute.xlu0 %2185
    %2189 = vrot.lane.b32.xlu0 %v2102, 80
    %v2190 = vpop.permute.xlu0 %2189
    %2193 = vrot.lane.b32.xlu0 %v2099, 96
    %v2194 = vpop.permute.xlu0 %2193
    %2197 = vrot.lane.b32.xlu0 %v2103, 112
    %v2198 = vpop.permute.xlu0 %2197
    %2201 = vrot.lane.b32.xlu0 %v2168, 16
    %v2202 = vpop.permute.xlu0 %2201
    %2205 = vrot.lane.b32.xlu0 %v2151, 32
    %v2206 = vpop.permute.xlu0 %2205
    %2209 = vrot.lane.b32.xlu0 %v2169, 48
    %v2210 = vpop.permute.xlu0 %2209
    %2213 = vrot.lane.b32.xlu0 %v2160, 64
    %v2214 = vpop.permute.xlu0 %2213
    %2217 = vrot.lane.b32.xlu0 %v2170, 80
    %v2218 = vpop.permute.xlu0 %2217
    %2221 = vrot.lane.b32.xlu0 %v2167, 96
    %v2222 = vpop.permute.xlu0 %2221
    %2225 = vrot.lane.b32.xlu0 %v2171, 112
    %v2226 = vpop.permute.xlu0 %2225
    %v2228 = vsel %vm371, %v2076, %v2174
    %v2229 = vsel %vm373, %v2228, %v2178
    %v2230 = vsel %vm375, %v2229, %v2182
    %v2231 = vsel %vm377, %v2230, %v2186
    %v2232 = vsel %vm379, %v2231, %v2190
    %v2233 = vsel %vm381, %v2232, %v2194
    %v2234 = vsel %vm383, %v2233, %v2198
    %v2235 = vsel %vm371, %v2144, %v2202
    %v2236 = vsel %vm373, %v2235, %v2206
    %v2237 = vsel %vm375, %v2236, %v2210
    %v2238 = vsel %vm377, %v2237, %v2214
    %v2239 = vsel %vm379, %v2238, %v2218
    %v2240 = vsel %vm381, %v2239, %v2222
    %v2241 = vsel %vm383, %v2240, %v2226
    %v2244 = vrot.slane %v622, 4
    %v2245 = vrot.slane %v629, 4
    %v2250 = vrot.slane %v1083, 4
    %v2251 = vrot.slane %v1090, 4
    %v2256 = vrot.slane %v1543, 4
    %v2257 = vrot.slane %v1550, 4
    %v2262 = vrot.slane %v2004, 4
    %v2263 = vrot.slane %v2011, 4
    %vm2266 = vcmask 1043456
    %v2267 = vsel %vm2266, %v384, %v2244
    %v2268 = vsel %vm2266, %v391, %v2245
    %v2269 = vsel %vm2266, %v852, %v2250
    %v2270 = vsel %vm2266, %v859, %v2251
    %v2271 = vsel %vm2266, %v1313, %v2256
    %v2272 = vsel %vm2266, %v1320, %v2257
    %v2273 = vsel %vm2266, %v1774, %v2262
    %v2274 = vsel %vm2266, %v1781, %v2263
    %v2275 = vpack.c.bf16 %v2269, %v2267
    %v2276 = vpack.c.bf16 %v2270, %v2268
    %v2277 = vpack.c.bf16 %v2273, %v2271
    %v2278 = vpack.c.bf16 %v2274, %v2272
    %v2279 = vpack.c.bf16 %v2234, %v2234
    %v2280 = vpack.c.bf16 %v2241, %v2241
    %vm2281 = vcmask 293888
    %v2283 = vsel %vm2281, %v33, 0
    %vm2285 = vcmask 1041408
    %v2287 = vsel %vm2285, %v2279, 0
    %v2290 = vsel %vm2285, %v2280, 0
    %2292 = vmatprep.subr.bf16.mxu0 0
    %2293 = vmatpush1.bf16.msra.mxu0 0
    %2294 = vmatprep.subr.bf16.mxu0 0
    %2295 = vmatpush1.bf16.msra.mxu0 0
    %2296 = vmatprep.subr.bf16.mxu0 0
    %2297 = vmatpush1.bf16.msra.mxu0 0
    %2298 = vmatprep.subr.bf16.mxu0 0
    %2299 = vmatpush1.bf16.msra.mxu0 0
    %2300 = vmatprep.subr.bf16.mxu0 0
    %2301 = vmatpush1.bf16.msra.mxu0 0
    %2302 = vmatprep.subr.bf16.mxu0 %v2290
    %2303 = vmatpush1.bf16.msra.mxu0 %v2287
    %2304 = vmatprep.subr.bf16.mxu0 %v2278
    %2305 = vmatpush1.bf16.msra.mxu0 %v2277
    %2306 = vmatprep.subr.bf16.mxu0 %v2276
    %2307 = vmatpush1.bf16.msra.mxu0 %v2275
    %2308 = vmatprep.subr.bf16.mxu0 0
    %2309 = vmatpush2.bf16.msra.mxu0 0
    %2310 = vmatprep.subr.bf16.mxu0 0
    %2311 = vmatpush2.bf16.msra.mxu0 0
    %2312 = vmatprep.subr.bf16.mxu0 0
    %2313 = vmatpush2.bf16.msra.mxu0 0
    %2314 = vmatprep.subr.bf16.mxu0 0
    %2315 = vmatpush2.bf16.msra.mxu0 0
    %2316 = vmatprep.subr.bf16.mxu0 0
    %2317 = vmatpush2.bf16.msra.mxu0 0
    %2318 = vmatprep.subr.bf16.mxu0 0
    %2319 = vmatpush2.bf16.msra.mxu0 0
    %2320 = vmatprep.subr.bf16.mxu0 0
    %2321 = vmatpush2.bf16.msra.mxu0 0
    %2322 = vmatprep.subr.bf16.mxu0 0
    %2323 = vmatpush2.bf16.msra.mxu0 0
    %2324 = vmatprep.mubr.bf16.mxu0 0
    %2325 = vmatmul.mubr.bf16.gmra.mxu0 %v2283
    %v2326 = vpop.f32.mrf.mxu0
    %v2327 = vadd.f32 0.0, %v2326
    %v2328 = vpop.f32.mrf.mxu0
    %v2329 = vadd.f32 0.0, %v2328
    %v2330 = vpop.f32.mrf.mxu0
    %v2331 = vpop.f32.mrf.mxu0
    %2332 = vdwg.mxu0
    %2334 = vset.pattern.permute.xlu0 0
    %2335 = vperm.xlu0 %2334, %v34
    %v2336 = vpop.permute.xlu0 %2335
    %v2338 = vmul.f32 %v2327, %v2336
    %v2339 = vmul.f32 %v2329, %v2336
    %2341 = vset.pattern.permute.xlu0 0
    %2342 = vperm.xlu0 %2341, %v35
    %v2343 = vpop.permute.xlu0 %2342
    %v2345 = vadd.f32 %v2338, %v2343
    %v2346 = vadd.f32 %v2339, %v2343
    %2347 = vst [vmem:[#allocation5] sm:$0xff] %v2345
    %2348 = vst [vmem:[#allocation5 + $0x8] sm:$0xff] %v2346
    %s2349 = scalar_lea.vmem [#allocation2], 64
    %v2350 = vld [vmem:[%s2349] sm:$0xff]
    %v2351 = vld [vmem:[%s2349 + $0x8] sm:$0xff]
    %v2352 = vld [vmem:[%s2349 + $0x10] sm:$0xff]
    %v2353 = vld [vmem:[%s2349 + $0x18] sm:$0xff]
    %v2354 = vld [vmem:[%s2349 + $0x20] sm:$0xff]
    %v2355 = vld [vmem:[%s2349 + $0x28] sm:$0xff]
    %v2356 = vld [vmem:[%s2349 + $0x30] sm:$0xff]
    %v2357 = vld [vmem:[%s2349 + $0x38] sm:$0xff]
    %v2358 = vmax.f32 %v2350, 0.0
    %v2359 = vmax.f32 %v2351, 0.0
    %v2360 = vmax.f32 %v2352, 0.0
    %v2361 = vmax.f32 %v2353, 0.0
    %v2362 = vmax.f32 %v2354, 0.0
    %v2363 = vmax.f32 %v2355, 0.0
    %v2364 = vmax.f32 %v2356, 0.0
    %v2365 = vmax.f32 %v2357, 0.0
    %v2370 = vrot.slane %v2359, 7
    %v2371 = vrot.slane %v2361, 7
    %v2372 = vrot.slane %v2363, 7
    %v2373 = vrot.slane %v2365, 7
    %v2382 = vrot.slane %v2358, 7
    %v2383 = vsel %vm68, %v2382, %v2370
    %v2384 = vrot.slane %v2360, 7
    %v2385 = vsel %vm68, %v2384, %v2371
    %v2386 = vrot.slane %v2362, 7
    %v2387 = vsel %vm68, %v2386, %v2372
    %v2388 = vrot.slane %v2364, 7
    %v2389 = vsel %vm68, %v2388, %v2373
    %v2394 = vsel %vm68, %v2370, %v2382
    %v2395 = vsel %vm68, %v2371, %v2384
    %v2396 = vsel %vm68, %v2372, %v2386
    %v2397 = vsel %vm68, %v2373, %v2388
    %2402 = vrot.lane.b32.xlu0 %v2394, 113
    %v2403 = vpop.permute.xlu0 %2402
    %2404 = vrot.lane.b32.xlu0 %v2383, 113
    %v2405 = vpop.permute.xlu0 %2404
    %2406 = vrot.lane.b32.xlu0 %v2395, 113
    %v2407 = vpop.permute.xlu0 %2406
    %2408 = vrot.lane.b32.xlu0 %v2385, 113
    %v2409 = vpop.permute.xlu0 %2408
    %2410 = vrot.lane.b32.xlu0 %v2396, 113
    %v2411 = vpop.permute.xlu0 %2410
    %2412 = vrot.lane.b32.xlu0 %v2387, 113
    %v2413 = vpop.permute.xlu0 %2412
    %2414 = vrot.lane.b32.xlu0 %v2397, 113
    %v2415 = vpop.permute.xlu0 %2414
    %2416 = vrot.lane.b32.xlu0 %v2389, 113
    %v2417 = vpop.permute.xlu0 %2416
    %2426 = vrot.lane.b32.xlu0 %v2394, 1
    %v2427 = vpop.permute.xlu0 %2426
    %2428 = vrot.lane.b32.xlu0 %v2383, 1
    %v2429 = vpop.permute.xlu0 %2428
    %2430 = vrot.lane.b32.xlu0 %v2395, 1
    %v2431 = vpop.permute.xlu0 %2430
    %2432 = vrot.lane.b32.xlu0 %v2385, 1
    %v2433 = vpop.permute.xlu0 %2432
    %2434 = vrot.lane.b32.xlu0 %v2396, 1
    %v2435 = vpop.permute.xlu0 %2434
    %2436 = vrot.lane.b32.xlu0 %v2387, 1
    %v2437 = vpop.permute.xlu0 %2436
    %2438 = vrot.lane.b32.xlu0 %v2397, 1
    %v2439 = vpop.permute.xlu0 %2438
    %2440 = vrot.lane.b32.xlu0 %v2389, 1
    %v2441 = vpop.permute.xlu0 %2440
    %2450 = vrot.lane.b32.xlu0 %v2394, 17
    %v2451 = vpop.permute.xlu0 %2450
    %2452 = vrot.lane.b32.xlu0 %v2383, 17
    %v2453 = vpop.permute.xlu0 %2452
    %2454 = vrot.lane.b32.xlu0 %v2395, 17
    %v2455 = vpop.permute.xlu0 %2454
    %2456 = vrot.lane.b32.xlu0 %v2385, 17
    %v2457 = vpop.permute.xlu0 %2456
    %2458 = vrot.lane.b32.xlu0 %v2396, 17
    %v2459 = vpop.permute.xlu0 %2458
    %2460 = vrot.lane.b32.xlu0 %v2387, 17
    %v2461 = vpop.permute.xlu0 %2460
    %2462 = vrot.lane.b32.xlu0 %v2397, 17
    %v2463 = vpop.permute.xlu0 %2462
    %2464 = vrot.lane.b32.xlu0 %v2389, 17
    %v2465 = vpop.permute.xlu0 %2464
    %v2474 = vsel %vm161, %v2403, %v2427
    %v2475 = vsel %vm161, %v2405, %v2429
    %v2476 = vsel %vm161, %v2407, %v2431
    %v2477 = vsel %vm161, %v2409, %v2433
    %v2478 = vsel %vm161, %v2411, %v2435
    %v2479 = vsel %vm161, %v2413, %v2437
    %v2480 = vsel %vm161, %v2415, %v2439
    %v2481 = vsel %vm161, %v2417, %v2441
    %v2482 = vsel %vm170, %v2474, %v2451
    %v2483 = vsel %vm170, %v2475, %v2453
    %v2484 = vsel %vm170, %v2476, %v2455
    %v2485 = vsel %vm170, %v2477, %v2457
    %v2486 = vsel %vm170, %v2478, %v2459
    %v2487 = vsel %vm170, %v2479, %v2461
    %v2488 = vsel %vm170, %v2480, %v2463
    %v2489 = vsel %vm170, %v2481, %v2465
    %v2490 = vcombine.low %v2482, %v2486
    %v2491 = vcombine.high %v2482, %v2486
    %v2493 = vunpack.c.l.s4 1983009808
    %v2494 = vunpack.c.0.s8 %v2493
    %v2495 = vlaneseq
    %v2496 = vshrl.u32 %v2495, 7
    %v2497 = vsub.s32 %v2494, %v2496
    %v2498 = vrot.slane %v2490, %v2497
    %v2500 = vunpack.c.l.s4 1983009808
    %v2501 = vunpack.c.0.s8 %v2500
    %v2502 = vlaneseq
    %v2503 = vshrl.u32 %v2502, 7
    %v2504 = vsub.s32 %v2501, %v2503
    %v2505 = vrot.slane %v2491, %v2504
    %v2506 = vcombine.low %v2484, %v2488
    %v2507 = vcombine.high %v2484, %v2488
    %v2509 = vunpack.c.l.s4 1983009808
    %v2510 = vunpack.c.0.s8 %v2509
    %v2511 = vlaneseq
    %v2512 = vshrl.u32 %v2511, 7
    %v2513 = vsub.s32 %v2510, %v2512
    %v2514 = vrot.slane %v2506, %v2513
    %v2516 = vunpack.c.l.s4 1983009808
    %v2517 = vunpack.c.0.s8 %v2516
    %v2518 = vlaneseq
    %v2519 = vshrl.u32 %v2518, 7
    %v2520 = vsub.s32 %v2517, %v2519
    %v2521 = vrot.slane %v2507, %v2520
    %v2522 = vcombine.low %v2498, %v2514
    %v2523 = vcombine.high %v2498, %v2514
    %v2525 = vunpack.c.l.s4 1934713408
    %v2526 = vunpack.c.0.s8 %v2525
    %v2527 = vlaneseq
    %v2528 = vshrl.u32 %v2527, 7
    %v2529 = vsub.s32 %v2526, %v2528
    %v2530 = vrot.slane %v2522, %v2529
    %v2532 = vunpack.c.l.s4 1934713408
    %v2533 = vunpack.c.0.s8 %v2532
    %v2534 = vlaneseq
    %v2535 = vshrl.u32 %v2534, 7
    %v2536 = vsub.s32 %v2533, %v2535
    %v2537 = vrot.slane %v2523, %v2536
    %v2538 = vcombine.low %v2505, %v2521
    %v2539 = vcombine.high %v2505, %v2521
    %v2541 = vunpack.c.l.s4 1934713408
    %v2542 = vunpack.c.0.s8 %v2541
    %v2543 = vlaneseq
    %v2544 = vshrl.u32 %v2543, 7
    %v2545 = vsub.s32 %v2542, %v2544
    %v2546 = vrot.slane %v2538, %v2545
    %v2548 = vunpack.c.l.s4 1934713408
    %v2549 = vunpack.c.0.s8 %v2548
    %v2550 = vlaneseq
    %v2551 = vshrl.u32 %v2550, 7
    %v2552 = vsub.s32 %v2549, %v2551
    %v2553 = vrot.slane %v2539, %v2552
    %v2554 = vcombine.high %v2530, 0.0
    %v2555 = vcombine.high %v2537, 0.0
    %v2556 = vcombine.high %v2546, 0.0
    %v2557 = vcombine.high %v2553, 0.0
    %v2558 = vcombine.low %v2483, %v2487
    %v2559 = vcombine.high %v2483, %v2487
    %v2561 = vunpack.c.l.s4 1983009808
    %v2562 = vunpack.c.0.s8 %v2561
    %v2563 = vlaneseq
    %v2564 = vshrl.u32 %v2563, 7
    %v2565 = vsub.s32 %v2562, %v2564
    %v2566 = vrot.slane %v2558, %v2565
    %v2568 = vunpack.c.l.s4 1983009808
    %v2569 = vunpack.c.0.s8 %v2568
    %v2570 = vlaneseq
    %v2571 = vshrl.u32 %v2570, 7
    %v2572 = vsub.s32 %v2569, %v2571
    %v2573 = vrot.slane %v2559, %v2572
    %v2574 = vcombine.low %v2485, %v2489
    %v2575 = vcombine.high %v2485, %v2489
    %v2577 = vunpack.c.l.s4 1983009808
    %v2578 = vunpack.c.0.s8 %v2577
    %v2579 = vlaneseq
    %v2580 = vshrl.u32 %v2579, 7
    %v2581 = vsub.s32 %v2578, %v2580
    %v2582 = vrot.slane %v2574, %v2581
    %v2584 = vunpack.c.l.s4 1983009808
    %v2585 = vunpack.c.0.s8 %v2584
    %v2586 = vlaneseq
    %v2587 = vshrl.u32 %v2586, 7
    %v2588 = vsub.s32 %v2585, %v2587
    %v2589 = vrot.slane %v2575, %v2588
    %v2590 = vcombine.low %v2566, %v2582
    %v2591 = vcombine.high %v2566, %v2582
    %v2593 = vunpack.c.l.s4 1934713408
    %v2594 = vunpack.c.0.s8 %v2593
    %v2595 = vlaneseq
    %v2596 = vshrl.u32 %v2595, 7
    %v2597 = vsub.s32 %v2594, %v2596
    %v2598 = vrot.slane %v2590, %v2597
    %v2600 = vunpack.c.l.s4 1934713408
    %v2601 = vunpack.c.0.s8 %v2600
    %v2602 = vlaneseq
    %v2603 = vshrl.u32 %v2602, 7
    %v2604 = vsub.s32 %v2601, %v2603
    %v2605 = vrot.slane %v2591, %v2604
    %v2606 = vcombine.low %v2573, %v2589
    %v2607 = vcombine.high %v2573, %v2589
    %v2609 = vunpack.c.l.s4 1934713408
    %v2610 = vunpack.c.0.s8 %v2609
    %v2611 = vlaneseq
    %v2612 = vshrl.u32 %v2611, 7
    %v2613 = vsub.s32 %v2610, %v2612
    %v2614 = vrot.slane %v2606, %v2613
    %v2616 = vunpack.c.l.s4 1934713408
    %v2617 = vunpack.c.0.s8 %v2616
    %v2618 = vlaneseq
    %v2619 = vshrl.u32 %v2618, 7
    %v2620 = vsub.s32 %v2617, %v2619
    %v2621 = vrot.slane %v2607, %v2620
    %v2622 = vcombine.high %v2598, 0.0
    %v2623 = vcombine.high %v2605, 0.0
    %v2624 = vcombine.high %v2614, 0.0
    %v2625 = vcombine.high %v2621, 0.0
    %2627 = vrot.lane.b32.xlu0 %v2554, 16
    %v2628 = vpop.permute.xlu0 %2627
    %2631 = vrot.lane.b32.xlu0 %v2537, 32
    %v2632 = vpop.permute.xlu0 %2631
    %2635 = vrot.lane.b32.xlu0 %v2555, 48
    %v2636 = vpop.permute.xlu0 %2635
    %2639 = vrot.lane.b32.xlu0 %v2546, 64
    %v2640 = vpop.permute.xlu0 %2639
    %2643 = vrot.lane.b32.xlu0 %v2556, 80
    %v2644 = vpop.permute.xlu0 %2643
    %2647 = vrot.lane.b32.xlu0 %v2553, 96
    %v2648 = vpop.permute.xlu0 %2647
    %2651 = vrot.lane.b32.xlu0 %v2557, 112
    %v2652 = vpop.permute.xlu0 %2651
    %2655 = vrot.lane.b32.xlu0 %v2622, 16
    %v2656 = vpop.permute.xlu0 %2655
    %2659 = vrot.lane.b32.xlu0 %v2605, 32
    %v2660 = vpop.permute.xlu0 %2659
    %2663 = vrot.lane.b32.xlu0 %v2623, 48
    %v2664 = vpop.permute.xlu0 %2663
    %2667 = vrot.lane.b32.xlu0 %v2614, 64
    %v2668 = vpop.permute.xlu0 %2667
    %2671 = vrot.lane.b32.xlu0 %v2624, 80
    %v2672 = vpop.permute.xlu0 %2671
    %2675 = vrot.lane.b32.xlu0 %v2621, 96
    %v2676 = vpop.permute.xlu0 %2675
    %2679 = vrot.lane.b32.xlu0 %v2625, 112
    %v2680 = vpop.permute.xlu0 %2679
    %v2682 = vsel %vm371, %v2530, %v2628
    %v2683 = vsel %vm373, %v2682, %v2632
    %v2684 = vsel %vm375, %v2683, %v2636
    %v2685 = vsel %vm377, %v2684, %v2640
    %v2686 = vsel %vm379, %v2685, %v2644
    %v2687 = vsel %vm381, %v2686, %v2648
    %v2688 = vsel %vm383, %v2687, %v2652
    %v2689 = vsel %vm371, %v2598, %v2656
    %v2690 = vsel %vm373, %v2689, %v2660
    %v2691 = vsel %vm375, %v2690, %v2664
    %v2692 = vsel %vm377, %v2691, %v2668
    %v2693 = vsel %vm379, %v2692, %v2672
    %v2694 = vsel %vm381, %v2693, %v2676
    %v2695 = vsel %vm383, %v2694, %v2680
    %2704 = vrot.lane.b32.xlu0 %v2482, 127
    %v2705 = vpop.permute.xlu0 %2704
    %2706 = vrot.lane.b32.xlu0 %v2483, 127
    %v2707 = vpop.permute.xlu0 %2706
    %2708 = vrot.lane.b32.xlu0 %v2484, 127
    %v2709 = vpop.permute.xlu0 %2708
    %2710 = vrot.lane.b32.xlu0 %v2485, 127
    %v2711 = vpop.permute.xlu0 %2710
    %2712 = vrot.lane.b32.xlu0 %v2486, 127
    %v2713 = vpop.permute.xlu0 %2712
    %2714 = vrot.lane.b32.xlu0 %v2487, 127
    %v2715 = vpop.permute.xlu0 %2714
    %2716 = vrot.lane.b32.xlu0 %v2488, 127
    %v2717 = vpop.permute.xlu0 %2716
    %2718 = vrot.lane.b32.xlu0 %v2489, 127
    %v2719 = vpop.permute.xlu0 %2718
    %v2728 = vcombine.low %v2705, %v2713
    %v2729 = vcombine.high %v2705, %v2713
    %v2731 = vunpack.c.l.s4 1983009808
    %v2732 = vunpack.c.0.s8 %v2731
    %v2733 = vlaneseq
    %v2734 = vshrl.u32 %v2733, 7
    %v2735 = vsub.s32 %v2732, %v2734
    %v2736 = vrot.slane %v2728, %v2735
    %v2738 = vunpack.c.l.s4 1983009808
    %v2739 = vunpack.c.0.s8 %v2738
    %v2740 = vlaneseq
    %v2741 = vshrl.u32 %v2740, 7
    %v2742 = vsub.s32 %v2739, %v2741
    %v2743 = vrot.slane %v2729, %v2742
    %v2744 = vcombine.low %v2709, %v2717
    %v2745 = vcombine.high %v2709, %v2717
    %v2747 = vunpack.c.l.s4 1983009808
    %v2748 = vunpack.c.0.s8 %v2747
    %v2749 = vlaneseq
    %v2750 = vshrl.u32 %v2749, 7
    %v2751 = vsub.s32 %v2748, %v2750
    %v2752 = vrot.slane %v2744, %v2751
    %v2754 = vunpack.c.l.s4 1983009808
    %v2755 = vunpack.c.0.s8 %v2754
    %v2756 = vlaneseq
    %v2757 = vshrl.u32 %v2756, 7
    %v2758 = vsub.s32 %v2755, %v2757
    %v2759 = vrot.slane %v2745, %v2758
    %v2760 = vcombine.low %v2736, %v2752
    %v2761 = vcombine.high %v2736, %v2752
    %v2763 = vunpack.c.l.s4 1934713408
    %v2764 = vunpack.c.0.s8 %v2763
    %v2765 = vlaneseq
    %v2766 = vshrl.u32 %v2765, 7
    %v2767 = vsub.s32 %v2764, %v2766
    %v2768 = vrot.slane %v2760, %v2767
    %v2770 = vunpack.c.l.s4 1934713408
    %v2771 = vunpack.c.0.s8 %v2770
    %v2772 = vlaneseq
    %v2773 = vshrl.u32 %v2772, 7
    %v2774 = vsub.s32 %v2771, %v2773
    %v2775 = vrot.slane %v2761, %v2774
    %v2776 = vcombine.low %v2743, %v2759
    %v2777 = vcombine.high %v2743, %v2759
    %v2779 = vunpack.c.l.s4 1934713408
    %v2780 = vunpack.c.0.s8 %v2779
    %v2781 = vlaneseq
    %v2782 = vshrl.u32 %v2781, 7
    %v2783 = vsub.s32 %v2780, %v2782
    %v2784 = vrot.slane %v2776, %v2783
    %v2786 = vunpack.c.l.s4 1934713408
    %v2787 = vunpack.c.0.s8 %v2786
    %v2788 = vlaneseq
    %v2789 = vshrl.u32 %v2788, 7
    %v2790 = vsub.s32 %v2787, %v2789
    %v2791 = vrot.slane %v2777, %v2790
    %v2792 = vcombine.high %v2768, 0.0
    %v2793 = vcombine.high %v2775, 0.0
    %v2794 = vcombine.high %v2784, 0.0
    %v2795 = vcombine.high %v2791, 0.0
    %v2796 = vcombine.low %v2707, %v2715
    %v2797 = vcombine.high %v2707, %v2715
    %v2799 = vunpack.c.l.s4 1983009808
    %v2800 = vunpack.c.0.s8 %v2799
    %v2801 = vlaneseq
    %v2802 = vshrl.u32 %v2801, 7
    %v2803 = vsub.s32 %v2800, %v2802
    %v2804 = vrot.slane %v2796, %v2803
    %v2806 = vunpack.c.l.s4 1983009808
    %v2807 = vunpack.c.0.s8 %v2806
    %v2808 = vlaneseq
    %v2809 = vshrl.u32 %v2808, 7
    %v2810 = vsub.s32 %v2807, %v2809
    %v2811 = vrot.slane %v2797, %v2810
    %v2812 = vcombine.low %v2711, %v2719
    %v2813 = vcombine.high %v2711, %v2719
    %v2815 = vunpack.c.l.s4 1983009808
    %v2816 = vunpack.c.0.s8 %v2815
    %v2817 = vlaneseq
    %v2818 = vshrl.u32 %v2817, 7
    %v2819 = vsub.s32 %v2816, %v2818
    %v2820 = vrot.slane %v2812, %v2819
    %v2822 = vunpack.c.l.s4 1983009808
    %v2823 = vunpack.c.0.s8 %v2822
    %v2824 = vlaneseq
    %v2825 = vshrl.u32 %v2824, 7
    %v2826 = vsub.s32 %v2823, %v2825
    %v2827 = vrot.slane %v2813, %v2826
    %v2828 = vcombine.low %v2804, %v2820
    %v2829 = vcombine.high %v2804, %v2820
    %v2831 = vunpack.c.l.s4 1934713408
    %v2832 = vunpack.c.0.s8 %v2831
    %v2833 = vlaneseq
    %v2834 = vshrl.u32 %v2833, 7
    %v2835 = vsub.s32 %v2832, %v2834
    %v2836 = vrot.slane %v2828, %v2835
    %v2838 = vunpack.c.l.s4 1934713408
    %v2839 = vunpack.c.0.s8 %v2838
    %v2840 = vlaneseq
    %v2841 = vshrl.u32 %v2840, 7
    %v2842 = vsub.s32 %v2839, %v2841
    %v2843 = vrot.slane %v2829, %v2842
    %v2844 = vcombine.low %v2811, %v2827
    %v2845 = vcombine.high %v2811, %v2827
    %v2847 = vunpack.c.l.s4 1934713408
    %v2848 = vunpack.c.0.s8 %v2847
    %v2849 = vlaneseq
    %v2850 = vshrl.u32 %v2849, 7
    %v2851 = vsub.s32 %v2848, %v2850
    %v2852 = vrot.slane %v2844, %v2851
    %v2854 = vunpack.c.l.s4 1934713408
    %v2855 = vunpack.c.0.s8 %v2854
    %v2856 = vlaneseq
    %v2857 = vshrl.u32 %v2856, 7
    %v2858 = vsub.s32 %v2855, %v2857
    %v2859 = vrot.slane %v2845, %v2858
    %v2860 = vcombine.high %v2836, 0.0
    %v2861 = vcombine.high %v2843, 0.0
    %v2862 = vcombine.high %v2852, 0.0
    %v2863 = vcombine.high %v2859, 0.0
    %2865 = vrot.lane.b32.xlu0 %v2792, 16
    %v2866 = vpop.permute.xlu0 %2865
    %2869 = vrot.lane.b32.xlu0 %v2775, 32
    %v2870 = vpop.permute.xlu0 %2869
    %2873 = vrot.lane.b32.xlu0 %v2793, 48
    %v2874 = vpop.permute.xlu0 %2873
    %2877 = vrot.lane.b32.xlu0 %v2784, 64
    %v2878 = vpop.permute.xlu0 %2877
    %2881 = vrot.lane.b32.xlu0 %v2794, 80
    %v2882 = vpop.permute.xlu0 %2881
    %2885 = vrot.lane.b32.xlu0 %v2791, 96
    %v2886 = vpop.permute.xlu0 %2885
    %2889 = vrot.lane.b32.xlu0 %v2795, 112
    %v2890 = vpop.permute.xlu0 %2889
    %2893 = vrot.lane.b32.xlu0 %v2860, 16
    %v2894 = vpop.permute.xlu0 %2893
    %2897 = vrot.lane.b32.xlu0 %v2843, 32
    %v2898 = vpop.permute.xlu0 %2897
    %2901 = vrot.lane.b32.xlu0 %v2861, 48
    %v2902 = vpop.permute.xlu0 %2901
    %2905 = vrot.lane.b32.xlu0 %v2852, 64
    %v2906 = vpop.permute.xlu0 %2905
    %2909 = vrot.lane.b32.xlu0 %v2862, 80
    %v2910 = vpop.permute.xlu0 %2909
    %2913 = vrot.lane.b32.xlu0 %v2859, 96
    %v2914 = vpop.permute.xlu0 %2913
    %2917 = vrot.lane.b32.xlu0 %v2863, 112
    %v2918 = vpop.permute.xlu0 %2917
    %v2920 = vsel %vm371, %v2768, %v2866
    %v2921 = vsel %vm373, %v2920, %v2870
    %v2922 = vsel %vm375, %v2921, %v2874
    %v2923 = vsel %vm377, %v2922, %v2878
    %v2924 = vsel %vm379, %v2923, %v2882
    %v2925 = vsel %vm381, %v2924, %v2886
    %v2926 = vsel %vm383, %v2925, %v2890
    %v2927 = vsel %vm371, %v2836, %v2894
    %v2928 = vsel %vm373, %v2927, %v2898
    %v2929 = vsel %vm375, %v2928, %v2902
    %v2930 = vsel %vm377, %v2929, %v2906
    %v2931 = vsel %vm379, %v2930, %v2910
    %v2932 = vsel %vm381, %v2931, %v2914
    %v2933 = vsel %vm383, %v2932, %v2918
    %2934 = vrot.lane.b32.xlu0 %v2482, 126
    %v2935 = vpop.permute.xlu0 %2934
    %2936 = vrot.lane.b32.xlu0 %v2483, 126
    %v2937 = vpop.permute.xlu0 %2936
    %2938 = vrot.lane.b32.xlu0 %v2484, 126
    %v2939 = vpop.permute.xlu0 %2938
    %2940 = vrot.lane.b32.xlu0 %v2485, 126
    %v2941 = vpop.permute.xlu0 %2940
    %2942 = vrot.lane.b32.xlu0 %v2486, 126
    %v2943 = vpop.permute.xlu0 %2942
    %2944 = vrot.lane.b32.xlu0 %v2487, 126
    %v2945 = vpop.permute.xlu0 %2944
    %2946 = vrot.lane.b32.xlu0 %v2488, 126
    %v2947 = vpop.permute.xlu0 %2946
    %2948 = vrot.lane.b32.xlu0 %v2489, 126
    %v2949 = vpop.permute.xlu0 %2948
    %v2958 = vcombine.low %v2935, %v2943
    %v2959 = vcombine.high %v2935, %v2943
    %v2961 = vunpack.c.l.s4 1983009808
    %v2962 = vunpack.c.0.s8 %v2961
    %v2963 = vlaneseq
    %v2964 = vshrl.u32 %v2963, 7
    %v2965 = vsub.s32 %v2962, %v2964
    %v2966 = vrot.slane %v2958, %v2965
    %v2968 = vunpack.c.l.s4 1983009808
    %v2969 = vunpack.c.0.s8 %v2968
    %v2970 = vlaneseq
    %v2971 = vshrl.u32 %v2970, 7
    %v2972 = vsub.s32 %v2969, %v2971
    %v2973 = vrot.slane %v2959, %v2972
    %v2974 = vcombine.low %v2939, %v2947
    %v2975 = vcombine.high %v2939, %v2947
    %v2977 = vunpack.c.l.s4 1983009808
    %v2978 = vunpack.c.0.s8 %v2977
    %v2979 = vlaneseq
    %v2980 = vshrl.u32 %v2979, 7
    %v2981 = vsub.s32 %v2978, %v2980
    %v2982 = vrot.slane %v2974, %v2981
    %v2984 = vunpack.c.l.s4 1983009808
    %v2985 = vunpack.c.0.s8 %v2984
    %v2986 = vlaneseq
    %v2987 = vshrl.u32 %v2986, 7
    %v2988 = vsub.s32 %v2985, %v2987
    %v2989 = vrot.slane %v2975, %v2988
    %v2990 = vcombine.low %v2966, %v2982
    %v2991 = vcombine.high %v2966, %v2982
    %v2993 = vunpack.c.l.s4 1934713408
    %v2994 = vunpack.c.0.s8 %v2993
    %v2995 = vlaneseq
    %v2996 = vshrl.u32 %v2995, 7
    %v2997 = vsub.s32 %v2994, %v2996
    %v2998 = vrot.slane %v2990, %v2997
    %v3000 = vunpack.c.l.s4 1934713408
    %v3001 = vunpack.c.0.s8 %v3000
    %v3002 = vlaneseq
    %v3003 = vshrl.u32 %v3002, 7
    %v3004 = vsub.s32 %v3001, %v3003
    %v3005 = vrot.slane %v2991, %v3004
    %v3006 = vcombine.low %v2973, %v2989
    %v3007 = vcombine.high %v2973, %v2989
    %v3009 = vunpack.c.l.s4 1934713408
    %v3010 = vunpack.c.0.s8 %v3009
    %v3011 = vlaneseq
    %v3012 = vshrl.u32 %v3011, 7
    %v3013 = vsub.s32 %v3010, %v3012
    %v3014 = vrot.slane %v3006, %v3013
    %v3016 = vunpack.c.l.s4 1934713408
    %v3017 = vunpack.c.0.s8 %v3016
    %v3018 = vlaneseq
    %v3019 = vshrl.u32 %v3018, 7
    %v3020 = vsub.s32 %v3017, %v3019
    %v3021 = vrot.slane %v3007, %v3020
    %v3022 = vcombine.high %v2998, 0.0
    %v3023 = vcombine.high %v3005, 0.0
    %v3024 = vcombine.high %v3014, 0.0
    %v3025 = vcombine.high %v3021, 0.0
    %v3026 = vcombine.low %v2937, %v2945
    %v3027 = vcombine.high %v2937, %v2945
    %v3029 = vunpack.c.l.s4 1983009808
    %v3030 = vunpack.c.0.s8 %v3029
    %v3031 = vlaneseq
    %v3032 = vshrl.u32 %v3031, 7
    %v3033 = vsub.s32 %v3030, %v3032
    %v3034 = vrot.slane %v3026, %v3033
    %v3036 = vunpack.c.l.s4 1983009808
    %v3037 = vunpack.c.0.s8 %v3036
    %v3038 = vlaneseq
    %v3039 = vshrl.u32 %v3038, 7
    %v3040 = vsub.s32 %v3037, %v3039
    %v3041 = vrot.slane %v3027, %v3040
    %v3042 = vcombine.low %v2941, %v2949
    %v3043 = vcombine.high %v2941, %v2949
    %v3045 = vunpack.c.l.s4 1983009808
    %v3046 = vunpack.c.0.s8 %v3045
    %v3047 = vlaneseq
    %v3048 = vshrl.u32 %v3047, 7
    %v3049 = vsub.s32 %v3046, %v3048
    %v3050 = vrot.slane %v3042, %v3049
    %v3052 = vunpack.c.l.s4 1983009808
    %v3053 = vunpack.c.0.s8 %v3052
    %v3054 = vlaneseq
    %v3055 = vshrl.u32 %v3054, 7
    %v3056 = vsub.s32 %v3053, %v3055
    %v3057 = vrot.slane %v3043, %v3056
    %v3058 = vcombine.low %v3034, %v3050
    %v3059 = vcombine.high %v3034, %v3050
    %v3061 = vunpack.c.l.s4 1934713408
    %v3062 = vunpack.c.0.s8 %v3061
    %v3063 = vlaneseq
    %v3064 = vshrl.u32 %v3063, 7
    %v3065 = vsub.s32 %v3062, %v3064
    %v3066 = vrot.slane %v3058, %v3065
    %v3068 = vunpack.c.l.s4 1934713408
    %v3069 = vunpack.c.0.s8 %v3068
    %v3070 = vlaneseq
    %v3071 = vshrl.u32 %v3070, 7
    %v3072 = vsub.s32 %v3069, %v3071
    %v3073 = vrot.slane %v3059, %v3072
    %v3074 = vcombine.low %v3041, %v3057
    %v3075 = vcombine.high %v3041, %v3057
    %v3077 = vunpack.c.l.s4 1934713408
    %v3078 = vunpack.c.0.s8 %v3077
    %v3079 = vlaneseq
    %v3080 = vshrl.u32 %v3079, 7
    %v3081 = vsub.s32 %v3078, %v3080
    %v3082 = vrot.slane %v3074, %v3081
    %v3084 = vunpack.c.l.s4 1934713408
    %v3085 = vunpack.c.0.s8 %v3084
    %v3086 = vlaneseq
    %v3087 = vshrl.u32 %v3086, 7
    %v3088 = vsub.s32 %v3085, %v3087
    %v3089 = vrot.slane %v3075, %v3088
    %v3090 = vcombine.high %v3066, 0.0
    %v3091 = vcombine.high %v3073, 0.0
    %v3092 = vcombine.high %v3082, 0.0
    %v3093 = vcombine.high %v3089, 0.0
    %3095 = vrot.lane.b32.xlu0 %v3022, 16
    %v3096 = vpop.permute.xlu0 %3095
    %3099 = vrot.lane.b32.xlu0 %v3005, 32
    %v3100 = vpop.permute.xlu0 %3099
    %3103 = vrot.lane.b32.xlu0 %v3023, 48
    %v3104 = vpop.permute.xlu0 %3103
    %3107 = vrot.lane.b32.xlu0 %v3014, 64
    %v3108 = vpop.permute.xlu0 %3107
    %3111 = vrot.lane.b32.xlu0 %v3024, 80
    %v3112 = vpop.permute.xlu0 %3111
    %3115 = vrot.lane.b32.xlu0 %v3021, 96
    %v3116 = vpop.permute.xlu0 %3115
    %3119 = vrot.lane.b32.xlu0 %v3025, 112
    %v3120 = vpop.permute.xlu0 %3119
    %3123 = vrot.lane.b32.xlu0 %v3090, 16
    %v3124 = vpop.permute.xlu0 %3123
    %3127 = vrot.lane.b32.xlu0 %v3073, 32
    %v3128 = vpop.permute.xlu0 %3127
    %3131 = vrot.lane.b32.xlu0 %v3091, 48
    %v3132 = vpop.permute.xlu0 %3131
    %3135 = vrot.lane.b32.xlu0 %v3082, 64
    %v3136 = vpop.permute.xlu0 %3135
    %3139 = vrot.lane.b32.xlu0 %v3092, 80
    %v3140 = vpop.permute.xlu0 %3139
    %3143 = vrot.lane.b32.xlu0 %v3089, 96
    %v3144 = vpop.permute.xlu0 %3143
    %3147 = vrot.lane.b32.xlu0 %v3093, 112
    %v3148 = vpop.permute.xlu0 %3147
    %v3150 = vsel %vm371, %v2998, %v3096
    %v3151 = vsel %vm373, %v3150, %v3100
    %v3152 = vsel %vm375, %v3151, %v3104
    %v3153 = vsel %vm377, %v3152, %v3108
    %v3154 = vsel %vm379, %v3153, %v3112
    %v3155 = vsel %vm381, %v3154, %v3116
    %v3156 = vsel %vm383, %v3155, %v3120
    %v3157 = vsel %vm371, %v3066, %v3124
    %v3158 = vsel %vm373, %v3157, %v3128
    %v3159 = vsel %vm375, %v3158, %v3132
    %v3160 = vsel %vm377, %v3159, %v3136
    %v3161 = vsel %vm379, %v3160, %v3140
    %v3162 = vsel %vm381, %v3161, %v3144
    %v3163 = vsel %vm383, %v3162, %v3148
    %v3164 = vrot.slane %v2482, 1
    %v3165 = vrot.slane %v2483, 1
    %v3166 = vsel %vm860, %v3164, %v3165
    %v3167 = vsel %vm860, %v3165, %v3164
    %v3168 = vrot.slane %v2484, 1
    %v3169 = vrot.slane %v2485, 1
    %v3170 = vsel %vm860, %v3168, %v3169
    %v3171 = vsel %vm860, %v3169, %v3168
    %v3172 = vrot.slane %v2486, 1
    %v3173 = vrot.slane %v2487, 1
    %v3174 = vsel %vm860, %v3172, %v3173
    %v3175 = vsel %vm860, %v3173, %v3172
    %v3176 = vrot.slane %v2488, 1
    %v3177 = vrot.slane %v2489, 1
    %v3178 = vsel %vm860, %v3176, %v3177
    %v3179 = vsel %vm860, %v3177, %v3176
    %v3188 = vcombine.low %v3166, %v3174
    %v3189 = vcombine.high %v3166, %v3174
    %v3191 = vunpack.c.l.s4 1983009808
    %v3192 = vunpack.c.0.s8 %v3191
    %v3193 = vlaneseq
    %v3194 = vshrl.u32 %v3193, 7
    %v3195 = vsub.s32 %v3192, %v3194
    %v3196 = vrot.slane %v3188, %v3195
    %v3198 = vunpack.c.l.s4 1983009808
    %v3199 = vunpack.c.0.s8 %v3198
    %v3200 = vlaneseq
    %v3201 = vshrl.u32 %v3200, 7
    %v3202 = vsub.s32 %v3199, %v3201
    %v3203 = vrot.slane %v3189, %v3202
    %v3204 = vcombine.low %v3170, %v3178
    %v3205 = vcombine.high %v3170, %v3178
    %v3207 = vunpack.c.l.s4 1983009808
    %v3208 = vunpack.c.0.s8 %v3207
    %v3209 = vlaneseq
    %v3210 = vshrl.u32 %v3209, 7
    %v3211 = vsub.s32 %v3208, %v3210
    %v3212 = vrot.slane %v3204, %v3211
    %v3214 = vunpack.c.l.s4 1983009808
    %v3215 = vunpack.c.0.s8 %v3214
    %v3216 = vlaneseq
    %v3217 = vshrl.u32 %v3216, 7
    %v3218 = vsub.s32 %v3215, %v3217
    %v3219 = vrot.slane %v3205, %v3218
    %v3220 = vcombine.low %v3196, %v3212
    %v3221 = vcombine.high %v3196, %v3212
    %v3223 = vunpack.c.l.s4 1934713408
    %v3224 = vunpack.c.0.s8 %v3223
    %v3225 = vlaneseq
    %v3226 = vshrl.u32 %v3225, 7
    %v3227 = vsub.s32 %v3224, %v3226
    %v3228 = vrot.slane %v3220, %v3227
    %v3230 = vunpack.c.l.s4 1934713408
    %v3231 = vunpack.c.0.s8 %v3230
    %v3232 = vlaneseq
    %v3233 = vshrl.u32 %v3232, 7
    %v3234 = vsub.s32 %v3231, %v3233
    %v3235 = vrot.slane %v3221, %v3234
    %v3236 = vcombine.low %v3203, %v3219
    %v3237 = vcombine.high %v3203, %v3219
    %v3239 = vunpack.c.l.s4 1934713408
    %v3240 = vunpack.c.0.s8 %v3239
    %v3241 = vlaneseq
    %v3242 = vshrl.u32 %v3241, 7
    %v3243 = vsub.s32 %v3240, %v3242
    %v3244 = vrot.slane %v3236, %v3243
    %v3246 = vunpack.c.l.s4 1934713408
    %v3247 = vunpack.c.0.s8 %v3246
    %v3248 = vlaneseq
    %v3249 = vshrl.u32 %v3248, 7
    %v3250 = vsub.s32 %v3247, %v3249
    %v3251 = vrot.slane %v3237, %v3250
    %v3252 = vcombine.high %v3228, 0.0
    %v3253 = vcombine.high %v3235, 0.0
    %v3254 = vcombine.high %v3244, 0.0
    %v3255 = vcombine.high %v3251, 0.0
    %v3256 = vcombine.low %v3167, %v3175
    %v3257 = vcombine.high %v3167, %v3175
    %v3259 = vunpack.c.l.s4 1983009808
    %v3260 = vunpack.c.0.s8 %v3259
    %v3261 = vlaneseq
    %v3262 = vshrl.u32 %v3261, 7
    %v3263 = vsub.s32 %v3260, %v3262
    %v3264 = vrot.slane %v3256, %v3263
    %v3266 = vunpack.c.l.s4 1983009808
    %v3267 = vunpack.c.0.s8 %v3266
    %v3268 = vlaneseq
    %v3269 = vshrl.u32 %v3268, 7
    %v3270 = vsub.s32 %v3267, %v3269
    %v3271 = vrot.slane %v3257, %v3270
    %v3272 = vcombine.low %v3171, %v3179
    %v3273 = vcombine.high %v3171, %v3179
    %v3275 = vunpack.c.l.s4 1983009808
    %v3276 = vunpack.c.0.s8 %v3275
    %v3277 = vlaneseq
    %v3278 = vshrl.u32 %v3277, 7
    %v3279 = vsub.s32 %v3276, %v3278
    %v3280 = vrot.slane %v3272, %v3279
    %v3282 = vunpack.c.l.s4 1983009808
    %v3283 = vunpack.c.0.s8 %v3282
    %v3284 = vlaneseq
    %v3285 = vshrl.u32 %v3284, 7
    %v3286 = vsub.s32 %v3283, %v3285
    %v3287 = vrot.slane %v3273, %v3286
    %v3288 = vcombine.low %v3264, %v3280
    %v3289 = vcombine.high %v3264, %v3280
    %v3291 = vunpack.c.l.s4 1934713408
    %v3292 = vunpack.c.0.s8 %v3291
    %v3293 = vlaneseq
    %v3294 = vshrl.u32 %v3293, 7
    %v3295 = vsub.s32 %v3292, %v3294
    %v3296 = vrot.slane %v3288, %v3295
    %v3298 = vunpack.c.l.s4 1934713408
    %v3299 = vunpack.c.0.s8 %v3298
    %v3300 = vlaneseq
    %v3301 = vshrl.u32 %v3300, 7
    %v3302 = vsub.s32 %v3299, %v3301
    %v3303 = vrot.slane %v3289, %v3302
    %v3304 = vcombine.low %v3271, %v3287
    %v3305 = vcombine.high %v3271, %v3287
    %v3307 = vunpack.c.l.s4 1934713408
    %v3308 = vunpack.c.0.s8 %v3307
    %v3309 = vlaneseq
    %v3310 = vshrl.u32 %v3309, 7
    %v3311 = vsub.s32 %v3308, %v3310
    %v3312 = vrot.slane %v3304, %v3311
    %v3314 = vunpack.c.l.s4 1934713408
    %v3315 = vunpack.c.0.s8 %v3314
    %v3316 = vlaneseq
    %v3317 = vshrl.u32 %v3316, 7
    %v3318 = vsub.s32 %v3315, %v3317
    %v3319 = vrot.slane %v3305, %v3318
    %v3320 = vcombine.high %v3296, 0.0
    %v3321 = vcombine.high %v3303, 0.0
    %v3322 = vcombine.high %v3312, 0.0
    %v3323 = vcombine.high %v3319, 0.0
    %3325 = vrot.lane.b32.xlu0 %v3252, 16
    %v3326 = vpop.permute.xlu0 %3325
    %3329 = vrot.lane.b32.xlu0 %v3235, 32
    %v3330 = vpop.permute.xlu0 %3329
    %3333 = vrot.lane.b32.xlu0 %v3253, 48
    %v3334 = vpop.permute.xlu0 %3333
    %3337 = vrot.lane.b32.xlu0 %v3244, 64
    %v3338 = vpop.permute.xlu0 %3337
    %3341 = vrot.lane.b32.xlu0 %v3254, 80
    %v3342 = vpop.permute.xlu0 %3341
    %3345 = vrot.lane.b32.xlu0 %v3251, 96
    %v3346 = vpop.permute.xlu0 %3345
    %3349 = vrot.lane.b32.xlu0 %v3255, 112
    %v3350 = vpop.permute.xlu0 %3349
    %3353 = vrot.lane.b32.xlu0 %v3320, 16
    %v3354 = vpop.permute.xlu0 %3353
    %3357 = vrot.lane.b32.xlu0 %v3303, 32
    %v3358 = vpop.permute.xlu0 %3357
    %3361 = vrot.lane.b32.xlu0 %v3321, 48
    %v3362 = vpop.permute.xlu0 %3361
    %3365 = vrot.lane.b32.xlu0 %v3312, 64
    %v3366 = vpop.permute.xlu0 %3365
    %3369 = vrot.lane.b32.xlu0 %v3322, 80
    %v3370 = vpop.permute.xlu0 %3369
    %3373 = vrot.lane.b32.xlu0 %v3319, 96
    %v3374 = vpop.permute.xlu0 %3373
    %3377 = vrot.lane.b32.xlu0 %v3323, 112
    %v3378 = vpop.permute.xlu0 %3377
    %v3380 = vsel %vm371, %v3228, %v3326
    %v3381 = vsel %vm373, %v3380, %v3330
    %v3382 = vsel %vm375, %v3381, %v3334
    %v3383 = vsel %vm377, %v3382, %v3338
    %v3384 = vsel %vm379, %v3383, %v3342
    %v3385 = vsel %vm381, %v3384, %v3346
    %v3386 = vsel %vm383, %v3385, %v3350
    %v3387 = vsel %vm371, %v3296, %v3354
    %v3388 = vsel %vm373, %v3387, %v3358
    %v3389 = vsel %vm375, %v3388, %v3362
    %v3390 = vsel %vm377, %v3389, %v3366
    %v3391 = vsel %vm379, %v3390, %v3370
    %v3392 = vsel %vm381, %v3391, %v3374
    %v3393 = vsel %vm383, %v3392, %v3378
    %3394 = vrot.lane.b32.xlu0 %v3166, 127
    %v3395 = vpop.permute.xlu0 %3394
    %3396 = vrot.lane.b32.xlu0 %v3167, 127
    %v3397 = vpop.permute.xlu0 %3396
    %3398 = vrot.lane.b32.xlu0 %v3170, 127
    %v3399 = vpop.permute.xlu0 %3398
    %3400 = vrot.lane.b32.xlu0 %v3171, 127
    %v3401 = vpop.permute.xlu0 %3400
    %3402 = vrot.lane.b32.xlu0 %v3174, 127
    %v3403 = vpop.permute.xlu0 %3402
    %3404 = vrot.lane.b32.xlu0 %v3175, 127
    %v3405 = vpop.permute.xlu0 %3404
    %3406 = vrot.lane.b32.xlu0 %v3178, 127
    %v3407 = vpop.permute.xlu0 %3406
    %3408 = vrot.lane.b32.xlu0 %v3179, 127
    %v3409 = vpop.permute.xlu0 %3408
    %v3418 = vcombine.low %v3395, %v3403
    %v3419 = vcombine.high %v3395, %v3403
    %v3421 = vunpack.c.l.s4 1983009808
    %v3422 = vunpack.c.0.s8 %v3421
    %v3423 = vlaneseq
    %v3424 = vshrl.u32 %v3423, 7
    %v3425 = vsub.s32 %v3422, %v3424
    %v3426 = vrot.slane %v3418, %v3425
    %v3428 = vunpack.c.l.s4 1983009808
    %v3429 = vunpack.c.0.s8 %v3428
    %v3430 = vlaneseq
    %v3431 = vshrl.u32 %v3430, 7
    %v3432 = vsub.s32 %v3429, %v3431
    %v3433 = vrot.slane %v3419, %v3432
    %v3434 = vcombine.low %v3399, %v3407
    %v3435 = vcombine.high %v3399, %v3407
    %v3437 = vunpack.c.l.s4 1983009808
    %v3438 = vunpack.c.0.s8 %v3437
    %v3439 = vlaneseq
    %v3440 = vshrl.u32 %v3439, 7
    %v3441 = vsub.s32 %v3438, %v3440
    %v3442 = vrot.slane %v3434, %v3441
    %v3444 = vunpack.c.l.s4 1983009808
    %v3445 = vunpack.c.0.s8 %v3444
    %v3446 = vlaneseq
    %v3447 = vshrl.u32 %v3446, 7
    %v3448 = vsub.s32 %v3445, %v3447
    %v3449 = vrot.slane %v3435, %v3448
    %v3450 = vcombine.low %v3426, %v3442
    %v3451 = vcombine.high %v3426, %v3442
    %v3453 = vunpack.c.l.s4 1934713408
    %v3454 = vunpack.c.0.s8 %v3453
    %v3455 = vlaneseq
    %v3456 = vshrl.u32 %v3455, 7
    %v3457 = vsub.s32 %v3454, %v3456
    %v3458 = vrot.slane %v3450, %v3457
    %v3460 = vunpack.c.l.s4 1934713408
    %v3461 = vunpack.c.0.s8 %v3460
    %v3462 = vlaneseq
    %v3463 = vshrl.u32 %v3462, 7
    %v3464 = vsub.s32 %v3461, %v3463
    %v3465 = vrot.slane %v3451, %v3464
    %v3466 = vcombine.low %v3433, %v3449
    %v3467 = vcombine.high %v3433, %v3449
    %v3469 = vunpack.c.l.s4 1934713408
    %v3470 = vunpack.c.0.s8 %v3469
    %v3471 = vlaneseq
    %v3472 = vshrl.u32 %v3471, 7
    %v3473 = vsub.s32 %v3470, %v3472
    %v3474 = vrot.slane %v3466, %v3473
    %v3476 = vunpack.c.l.s4 1934713408
    %v3477 = vunpack.c.0.s8 %v3476
    %v3478 = vlaneseq
    %v3479 = vshrl.u32 %v3478, 7
    %v3480 = vsub.s32 %v3477, %v3479
    %v3481 = vrot.slane %v3467, %v3480
    %v3482 = vcombine.high %v3458, 0.0
    %v3483 = vcombine.high %v3465, 0.0
    %v3484 = vcombine.high %v3474, 0.0
    %v3485 = vcombine.high %v3481, 0.0
    %v3486 = vcombine.low %v3397, %v3405
    %v3487 = vcombine.high %v3397, %v3405
    %v3489 = vunpack.c.l.s4 1983009808
    %v3490 = vunpack.c.0.s8 %v3489
    %v3491 = vlaneseq
    %v3492 = vshrl.u32 %v3491, 7
    %v3493 = vsub.s32 %v3490, %v3492
    %v3494 = vrot.slane %v3486, %v3493
    %v3496 = vunpack.c.l.s4 1983009808
    %v3497 = vunpack.c.0.s8 %v3496
    %v3498 = vlaneseq
    %v3499 = vshrl.u32 %v3498, 7
    %v3500 = vsub.s32 %v3497, %v3499
    %v3501 = vrot.slane %v3487, %v3500
    %v3502 = vcombine.low %v3401, %v3409
    %v3503 = vcombine.high %v3401, %v3409
    %v3505 = vunpack.c.l.s4 1983009808
    %v3506 = vunpack.c.0.s8 %v3505
    %v3507 = vlaneseq
    %v3508 = vshrl.u32 %v3507, 7
    %v3509 = vsub.s32 %v3506, %v3508
    %v3510 = vrot.slane %v3502, %v3509
    %v3512 = vunpack.c.l.s4 1983009808
    %v3513 = vunpack.c.0.s8 %v3512
    %v3514 = vlaneseq
    %v3515 = vshrl.u32 %v3514, 7
    %v3516 = vsub.s32 %v3513, %v3515
    %v3517 = vrot.slane %v3503, %v3516
    %v3518 = vcombine.low %v3494, %v3510
    %v3519 = vcombine.high %v3494, %v3510
    %v3521 = vunpack.c.l.s4 1934713408
    %v3522 = vunpack.c.0.s8 %v3521
    %v3523 = vlaneseq
    %v3524 = vshrl.u32 %v3523, 7
    %v3525 = vsub.s32 %v3522, %v3524
    %v3526 = vrot.slane %v3518, %v3525
    %v3528 = vunpack.c.l.s4 1934713408
    %v3529 = vunpack.c.0.s8 %v3528
    %v3530 = vlaneseq
    %v3531 = vshrl.u32 %v3530, 7
    %v3532 = vsub.s32 %v3529, %v3531
    %v3533 = vrot.slane %v3519, %v3532
    %v3534 = vcombine.low %v3501, %v3517
    %v3535 = vcombine.high %v3501, %v3517
    %v3537 = vunpack.c.l.s4 1934713408
    %v3538 = vunpack.c.0.s8 %v3537
    %v3539 = vlaneseq
    %v3540 = vshrl.u32 %v3539, 7
    %v3541 = vsub.s32 %v3538, %v3540
    %v3542 = vrot.slane %v3534, %v3541
    %v3544 = vunpack.c.l.s4 1934713408
    %v3545 = vunpack.c.0.s8 %v3544
    %v3546 = vlaneseq
    %v3547 = vshrl.u32 %v3546, 7
    %v3548 = vsub.s32 %v3545, %v3547
    %v3549 = vrot.slane %v3535, %v3548
    %v3550 = vcombine.high %v3526, 0.0
    %v3551 = vcombine.high %v3533, 0.0
    %v3552 = vcombine.high %v3542, 0.0
    %v3553 = vcombine.high %v3549, 0.0
    %3555 = vrot.lane.b32.xlu0 %v3482, 16
    %v3556 = vpop.permute.xlu0 %3555
    %3559 = vrot.lane.b32.xlu0 %v3465, 32
    %v3560 = vpop.permute.xlu0 %3559
    %3563 = vrot.lane.b32.xlu0 %v3483, 48
    %v3564 = vpop.permute.xlu0 %3563
    %3567 = vrot.lane.b32.xlu0 %v3474, 64
    %v3568 = vpop.permute.xlu0 %3567
    %3571 = vrot.lane.b32.xlu0 %v3484, 80
    %v3572 = vpop.permute.xlu0 %3571
    %3575 = vrot.lane.b32.xlu0 %v3481, 96
    %v3576 = vpop.permute.xlu0 %3575
    %3579 = vrot.lane.b32.xlu0 %v3485, 112
    %v3580 = vpop.permute.xlu0 %3579
    %3583 = vrot.lane.b32.xlu0 %v3550, 16
    %v3584 = vpop.permute.xlu0 %3583
    %3587 = vrot.lane.b32.xlu0 %v3533, 32
    %v3588 = vpop.permute.xlu0 %3587
    %3591 = vrot.lane.b32.xlu0 %v3551, 48
    %v3592 = vpop.permute.xlu0 %3591
    %3595 = vrot.lane.b32.xlu0 %v3542, 64
    %v3596 = vpop.permute.xlu0 %3595
    %3599 = vrot.lane.b32.xlu0 %v3552, 80
    %v3600 = vpop.permute.xlu0 %3599
    %3603 = vrot.lane.b32.xlu0 %v3549, 96
    %v3604 = vpop.permute.xlu0 %3603
    %3607 = vrot.lane.b32.xlu0 %v3553, 112
    %v3608 = vpop.permute.xlu0 %3607
    %v3610 = vsel %vm371, %v3458, %v3556
    %v3611 = vsel %vm373, %v3610, %v3560
    %v3612 = vsel %vm375, %v3611, %v3564
    %v3613 = vsel %vm377, %v3612, %v3568
    %v3614 = vsel %vm379, %v3613, %v3572
    %v3615 = vsel %vm381, %v3614, %v3576
    %v3616 = vsel %vm383, %v3615, %v3580
    %v3617 = vsel %vm371, %v3526, %v3584
    %v3618 = vsel %vm373, %v3617, %v3588
    %v3619 = vsel %vm375, %v3618, %v3592
    %v3620 = vsel %vm377, %v3619, %v3596
    %v3621 = vsel %vm379, %v3620, %v3600
    %v3622 = vsel %vm381, %v3621, %v3604
    %v3623 = vsel %vm383, %v3622, %v3608
    %3624 = vrot.lane.b32.xlu0 %v3166, 126
    %v3625 = vpop.permute.xlu0 %3624
    %3626 = vrot.lane.b32.xlu0 %v3167, 126
    %v3627 = vpop.permute.xlu0 %3626
    %3628 = vrot.lane.b32.xlu0 %v3170, 126
    %v3629 = vpop.permute.xlu0 %3628
    %3630 = vrot.lane.b32.xlu0 %v3171, 126
    %v3631 = vpop.permute.xlu0 %3630
    %3632 = vrot.lane.b32.xlu0 %v3174, 126
    %v3633 = vpop.permute.xlu0 %3632
    %3634 = vrot.lane.b32.xlu0 %v3175, 126
    %v3635 = vpop.permute.xlu0 %3634
    %3636 = vrot.lane.b32.xlu0 %v3178, 126
    %v3637 = vpop.permute.xlu0 %3636
    %3638 = vrot.lane.b32.xlu0 %v3179, 126
    %v3639 = vpop.permute.xlu0 %3638
    %v3648 = vcombine.low %v3625, %v3633
    %v3649 = vcombine.high %v3625, %v3633
    %v3651 = vunpack.c.l.s4 1983009808
    %v3652 = vunpack.c.0.s8 %v3651
    %v3653 = vlaneseq
    %v3654 = vshrl.u32 %v3653, 7
    %v3655 = vsub.s32 %v3652, %v3654
    %v3656 = vrot.slane %v3648, %v3655
    %v3658 = vunpack.c.l.s4 1983009808
    %v3659 = vunpack.c.0.s8 %v3658
    %v3660 = vlaneseq
    %v3661 = vshrl.u32 %v3660, 7
    %v3662 = vsub.s32 %v3659, %v3661
    %v3663 = vrot.slane %v3649, %v3662
    %v3664 = vcombine.low %v3629, %v3637
    %v3665 = vcombine.high %v3629, %v3637
    %v3667 = vunpack.c.l.s4 1983009808
    %v3668 = vunpack.c.0.s8 %v3667
    %v3669 = vlaneseq
    %v3670 = vshrl.u32 %v3669, 7
    %v3671 = vsub.s32 %v3668, %v3670
    %v3672 = vrot.slane %v3664, %v3671
    %v3674 = vunpack.c.l.s4 1983009808
    %v3675 = vunpack.c.0.s8 %v3674
    %v3676 = vlaneseq
    %v3677 = vshrl.u32 %v3676, 7
    %v3678 = vsub.s32 %v3675, %v3677
    %v3679 = vrot.slane %v3665, %v3678
    %v3680 = vcombine.low %v3656, %v3672
    %v3681 = vcombine.high %v3656, %v3672
    %v3683 = vunpack.c.l.s4 1934713408
    %v3684 = vunpack.c.0.s8 %v3683
    %v3685 = vlaneseq
    %v3686 = vshrl.u32 %v3685, 7
    %v3687 = vsub.s32 %v3684, %v3686
    %v3688 = vrot.slane %v3680, %v3687
    %v3690 = vunpack.c.l.s4 1934713408
    %v3691 = vunpack.c.0.s8 %v3690
    %v3692 = vlaneseq
    %v3693 = vshrl.u32 %v3692, 7
    %v3694 = vsub.s32 %v3691, %v3693
    %v3695 = vrot.slane %v3681, %v3694
    %v3696 = vcombine.low %v3663, %v3679
    %v3697 = vcombine.high %v3663, %v3679
    %v3699 = vunpack.c.l.s4 1934713408
    %v3700 = vunpack.c.0.s8 %v3699
    %v3701 = vlaneseq
    %v3702 = vshrl.u32 %v3701, 7
    %v3703 = vsub.s32 %v3700, %v3702
    %v3704 = vrot.slane %v3696, %v3703
    %v3706 = vunpack.c.l.s4 1934713408
    %v3707 = vunpack.c.0.s8 %v3706
    %v3708 = vlaneseq
    %v3709 = vshrl.u32 %v3708, 7
    %v3710 = vsub.s32 %v3707, %v3709
    %v3711 = vrot.slane %v3697, %v3710
    %v3712 = vcombine.high %v3688, 0.0
    %v3713 = vcombine.high %v3695, 0.0
    %v3714 = vcombine.high %v3704, 0.0
    %v3715 = vcombine.high %v3711, 0.0
    %v3716 = vcombine.low %v3627, %v3635
    %v3717 = vcombine.high %v3627, %v3635
    %v3719 = vunpack.c.l.s4 1983009808
    %v3720 = vunpack.c.0.s8 %v3719
    %v3721 = vlaneseq
    %v3722 = vshrl.u32 %v3721, 7
    %v3723 = vsub.s32 %v3720, %v3722
    %v3724 = vrot.slane %v3716, %v3723
    %v3726 = vunpack.c.l.s4 1983009808
    %v3727 = vunpack.c.0.s8 %v3726
    %v3728 = vlaneseq
    %v3729 = vshrl.u32 %v3728, 7
    %v3730 = vsub.s32 %v3727, %v3729
    %v3731 = vrot.slane %v3717, %v3730
    %v3732 = vcombine.low %v3631, %v3639
    %v3733 = vcombine.high %v3631, %v3639
    %v3735 = vunpack.c.l.s4 1983009808
    %v3736 = vunpack.c.0.s8 %v3735
    %v3737 = vlaneseq
    %v3738 = vshrl.u32 %v3737, 7
    %v3739 = vsub.s32 %v3736, %v3738
    %v3740 = vrot.slane %v3732, %v3739
    %v3742 = vunpack.c.l.s4 1983009808
    %v3743 = vunpack.c.0.s8 %v3742
    %v3744 = vlaneseq
    %v3745 = vshrl.u32 %v3744, 7
    %v3746 = vsub.s32 %v3743, %v3745
    %v3747 = vrot.slane %v3733, %v3746
    %v3748 = vcombine.low %v3724, %v3740
    %v3749 = vcombine.high %v3724, %v3740
    %v3751 = vunpack.c.l.s4 1934713408
    %v3752 = vunpack.c.0.s8 %v3751
    %v3753 = vlaneseq
    %v3754 = vshrl.u32 %v3753, 7
    %v3755 = vsub.s32 %v3752, %v3754
    %v3756 = vrot.slane %v3748, %v3755
    %v3758 = vunpack.c.l.s4 1934713408
    %v3759 = vunpack.c.0.s8 %v3758
    %v3760 = vlaneseq
    %v3761 = vshrl.u32 %v3760, 7
    %v3762 = vsub.s32 %v3759, %v3761
    %v3763 = vrot.slane %v3749, %v3762
    %v3764 = vcombine.low %v3731, %v3747
    %v3765 = vcombine.high %v3731, %v3747
    %v3767 = vunpack.c.l.s4 1934713408
    %v3768 = vunpack.c.0.s8 %v3767
    %v3769 = vlaneseq
    %v3770 = vshrl.u32 %v3769, 7
    %v3771 = vsub.s32 %v3768, %v3770
    %v3772 = vrot.slane %v3764, %v3771
    %v3774 = vunpack.c.l.s4 1934713408
    %v3775 = vunpack.c.0.s8 %v3774
    %v3776 = vlaneseq
    %v3777 = vshrl.u32 %v3776, 7
    %v3778 = vsub.s32 %v3775, %v3777
    %v3779 = vrot.slane %v3765, %v3778
    %v3780 = vcombine.high %v3756, 0.0
    %v3781 = vcombine.high %v3763, 0.0
    %v3782 = vcombine.high %v3772, 0.0
    %v3783 = vcombine.high %v3779, 0.0
    %3785 = vrot.lane.b32.xlu0 %v3712, 16
    %v3786 = vpop.permute.xlu0 %3785
    %3789 = vrot.lane.b32.xlu0 %v3695, 32
    %v3790 = vpop.permute.xlu0 %3789
    %3793 = vrot.lane.b32.xlu0 %v3713, 48
    %v3794 = vpop.permute.xlu0 %3793
    %3797 = vrot.lane.b32.xlu0 %v3704, 64
    %v3798 = vpop.permute.xlu0 %3797
    %3801 = vrot.lane.b32.xlu0 %v3714, 80
    %v3802 = vpop.permute.xlu0 %3801
    %3805 = vrot.lane.b32.xlu0 %v3711, 96
    %v3806 = vpop.permute.xlu0 %3805
    %3809 = vrot.lane.b32.xlu0 %v3715, 112
    %v3810 = vpop.permute.xlu0 %3809
    %3813 = vrot.lane.b32.xlu0 %v3780, 16
    %v3814 = vpop.permute.xlu0 %3813
    %3817 = vrot.lane.b32.xlu0 %v3763, 32
    %v3818 = vpop.permute.xlu0 %3817
    %3821 = vrot.lane.b32.xlu0 %v3781, 48
    %v3822 = vpop.permute.xlu0 %3821
    %3825 = vrot.lane.b32.xlu0 %v3772, 64
    %v3826 = vpop.permute.xlu0 %3825
    %3829 = vrot.lane.b32.xlu0 %v3782, 80
    %v3830 = vpop.permute.xlu0 %3829
    %3833 = vrot.lane.b32.xlu0 %v3779, 96
    %v3834 = vpop.permute.xlu0 %3833
    %3837 = vrot.lane.b32.xlu0 %v3783, 112
    %v3838 = vpop.permute.xlu0 %3837
    %v3840 = vsel %vm371, %v3688, %v3786
    %v3841 = vsel %vm373, %v3840, %v3790
    %v3842 = vsel %vm375, %v3841, %v3794
    %v3843 = vsel %vm377, %v3842, %v3798
    %v3844 = vsel %vm379, %v3843, %v3802
    %v3845 = vsel %vm381, %v3844, %v3806
    %v3846 = vsel %vm383, %v3845, %v3810
    %v3847 = vsel %vm371, %v3756, %v3814
    %v3848 = vsel %vm373, %v3847, %v3818
    %v3849 = vsel %vm375, %v3848, %v3822
    %v3850 = vsel %vm377, %v3849, %v3826
    %v3851 = vsel %vm379, %v3850, %v3830
    %v3852 = vsel %vm381, %v3851, %v3834
    %v3853 = vsel %vm383, %v3852, %v3838
    %v3854 = vrot.slane %v2482, 2
    %v3855 = vrot.slane %v2483, 2
    %v3856 = vsel %vm1551, %v3854, %v3855
    %v3857 = vsel %vm1551, %v3855, %v3854
    %v3858 = vrot.slane %v2484, 2
    %v3859 = vrot.slane %v2485, 2
    %v3860 = vsel %vm1551, %v3858, %v3859
    %v3861 = vsel %vm1551, %v3859, %v3858
    %v3862 = vrot.slane %v2486, 2
    %v3863 = vrot.slane %v2487, 2
    %v3864 = vsel %vm1551, %v3862, %v3863
    %v3865 = vsel %vm1551, %v3863, %v3862
    %v3866 = vrot.slane %v2488, 2
    %v3867 = vrot.slane %v2489, 2
    %v3868 = vsel %vm1551, %v3866, %v3867
    %v3869 = vsel %vm1551, %v3867, %v3866
    %v3878 = vcombine.low %v3856, %v3864
    %v3879 = vcombine.high %v3856, %v3864
    %v3881 = vunpack.c.l.s4 1983009808
    %v3882 = vunpack.c.0.s8 %v3881
    %v3883 = vlaneseq
    %v3884 = vshrl.u32 %v3883, 7
    %v3885 = vsub.s32 %v3882, %v3884
    %v3886 = vrot.slane %v3878, %v3885
    %v3888 = vunpack.c.l.s4 1983009808
    %v3889 = vunpack.c.0.s8 %v3888
    %v3890 = vlaneseq
    %v3891 = vshrl.u32 %v3890, 7
    %v3892 = vsub.s32 %v3889, %v3891
    %v3893 = vrot.slane %v3879, %v3892
    %v3894 = vcombine.low %v3860, %v3868
    %v3895 = vcombine.high %v3860, %v3868
    %v3897 = vunpack.c.l.s4 1983009808
    %v3898 = vunpack.c.0.s8 %v3897
    %v3899 = vlaneseq
    %v3900 = vshrl.u32 %v3899, 7
    %v3901 = vsub.s32 %v3898, %v3900
    %v3902 = vrot.slane %v3894, %v3901
    %v3904 = vunpack.c.l.s4 1983009808
    %v3905 = vunpack.c.0.s8 %v3904
    %v3906 = vlaneseq
    %v3907 = vshrl.u32 %v3906, 7
    %v3908 = vsub.s32 %v3905, %v3907
    %v3909 = vrot.slane %v3895, %v3908
    %v3910 = vcombine.low %v3886, %v3902
    %v3911 = vcombine.high %v3886, %v3902
    %v3913 = vunpack.c.l.s4 1934713408
    %v3914 = vunpack.c.0.s8 %v3913
    %v3915 = vlaneseq
    %v3916 = vshrl.u32 %v3915, 7
    %v3917 = vsub.s32 %v3914, %v3916
    %v3918 = vrot.slane %v3910, %v3917
    %v3920 = vunpack.c.l.s4 1934713408
    %v3921 = vunpack.c.0.s8 %v3920
    %v3922 = vlaneseq
    %v3923 = vshrl.u32 %v3922, 7
    %v3924 = vsub.s32 %v3921, %v3923
    %v3925 = vrot.slane %v3911, %v3924
    %v3926 = vcombine.low %v3893, %v3909
    %v3927 = vcombine.high %v3893, %v3909
    %v3929 = vunpack.c.l.s4 1934713408
    %v3930 = vunpack.c.0.s8 %v3929
    %v3931 = vlaneseq
    %v3932 = vshrl.u32 %v3931, 7
    %v3933 = vsub.s32 %v3930, %v3932
    %v3934 = vrot.slane %v3926, %v3933
    %v3936 = vunpack.c.l.s4 1934713408
    %v3937 = vunpack.c.0.s8 %v3936
    %v3938 = vlaneseq
    %v3939 = vshrl.u32 %v3938, 7
    %v3940 = vsub.s32 %v3937, %v3939
    %v3941 = vrot.slane %v3927, %v3940
    %v3942 = vcombine.high %v3918, 0.0
    %v3943 = vcombine.high %v3925, 0.0
    %v3944 = vcombine.high %v3934, 0.0
    %v3945 = vcombine.high %v3941, 0.0
    %v3946 = vcombine.low %v3857, %v3865
    %v3947 = vcombine.high %v3857, %v3865
    %v3949 = vunpack.c.l.s4 1983009808
    %v3950 = vunpack.c.0.s8 %v3949
    %v3951 = vlaneseq
    %v3952 = vshrl.u32 %v3951, 7
    %v3953 = vsub.s32 %v3950, %v3952
    %v3954 = vrot.slane %v3946, %v3953
    %v3956 = vunpack.c.l.s4 1983009808
    %v3957 = vunpack.c.0.s8 %v3956
    %v3958 = vlaneseq
    %v3959 = vshrl.u32 %v3958, 7
    %v3960 = vsub.s32 %v3957, %v3959
    %v3961 = vrot.slane %v3947, %v3960
    %v3962 = vcombine.low %v3861, %v3869
    %v3963 = vcombine.high %v3861, %v3869
    %v3965 = vunpack.c.l.s4 1983009808
    %v3966 = vunpack.c.0.s8 %v3965
    %v3967 = vlaneseq
    %v3968 = vshrl.u32 %v3967, 7
    %v3969 = vsub.s32 %v3966, %v3968
    %v3970 = vrot.slane %v3962, %v3969
    %v3972 = vunpack.c.l.s4 1983009808
    %v3973 = vunpack.c.0.s8 %v3972
    %v3974 = vlaneseq
    %v3975 = vshrl.u32 %v3974, 7
    %v3976 = vsub.s32 %v3973, %v3975
    %v3977 = vrot.slane %v3963, %v3976
    %v3978 = vcombine.low %v3954, %v3970
    %v3979 = vcombine.high %v3954, %v3970
    %v3981 = vunpack.c.l.s4 1934713408
    %v3982 = vunpack.c.0.s8 %v3981
    %v3983 = vlaneseq
    %v3984 = vshrl.u32 %v3983, 7
    %v3985 = vsub.s32 %v3982, %v3984
    %v3986 = vrot.slane %v3978, %v3985
    %v3988 = vunpack.c.l.s4 1934713408
    %v3989 = vunpack.c.0.s8 %v3988
    %v3990 = vlaneseq
    %v3991 = vshrl.u32 %v3990, 7
    %v3992 = vsub.s32 %v3989, %v3991
    %v3993 = vrot.slane %v3979, %v3992
    %v3994 = vcombine.low %v3961, %v3977
    %v3995 = vcombine.high %v3961, %v3977
    %v3997 = vunpack.c.l.s4 1934713408
    %v3998 = vunpack.c.0.s8 %v3997
    %v3999 = vlaneseq
    %v4000 = vshrl.u32 %v3999, 7
    %v4001 = vsub.s32 %v3998, %v4000
    %v4002 = vrot.slane %v3994, %v4001
    %v4004 = vunpack.c.l.s4 1934713408
    %v4005 = vunpack.c.0.s8 %v4004
    %v4006 = vlaneseq
    %v4007 = vshrl.u32 %v4006, 7
    %v4008 = vsub.s32 %v4005, %v4007
    %v4009 = vrot.slane %v3995, %v4008
    %v4010 = vcombine.high %v3986, 0.0
    %v4011 = vcombine.high %v3993, 0.0
    %v4012 = vcombine.high %v4002, 0.0
    %v4013 = vcombine.high %v4009, 0.0
    %4015 = vrot.lane.b32.xlu0 %v3942, 16
    %v4016 = vpop.permute.xlu0 %4015
    %4019 = vrot.lane.b32.xlu0 %v3925, 32
    %v4020 = vpop.permute.xlu0 %4019
    %4023 = vrot.lane.b32.xlu0 %v3943, 48
    %v4024 = vpop.permute.xlu0 %4023
    %4027 = vrot.lane.b32.xlu0 %v3934, 64
    %v4028 = vpop.permute.xlu0 %4027
    %4031 = vrot.lane.b32.xlu0 %v3944, 80
    %v4032 = vpop.permute.xlu0 %4031
    %4035 = vrot.lane.b32.xlu0 %v3941, 96
    %v4036 = vpop.permute.xlu0 %4035
    %4039 = vrot.lane.b32.xlu0 %v3945, 112
    %v4040 = vpop.permute.xlu0 %4039
    %4043 = vrot.lane.b32.xlu0 %v4010, 16
    %v4044 = vpop.permute.xlu0 %4043
    %4047 = vrot.lane.b32.xlu0 %v3993, 32
    %v4048 = vpop.permute.xlu0 %4047
    %4051 = vrot.lane.b32.xlu0 %v4011, 48
    %v4052 = vpop.permute.xlu0 %4051
    %4055 = vrot.lane.b32.xlu0 %v4002, 64
    %v4056 = vpop.permute.xlu0 %4055
    %4059 = vrot.lane.b32.xlu0 %v4012, 80
    %v4060 = vpop.permute.xlu0 %4059
    %4063 = vrot.lane.b32.xlu0 %v4009, 96
    %v4064 = vpop.permute.xlu0 %4063
    %4067 = vrot.lane.b32.xlu0 %v4013, 112
    %v4068 = vpop.permute.xlu0 %4067
    %v4070 = vsel %vm371, %v3918, %v4016
    %v4071 = vsel %vm373, %v4070, %v4020
    %v4072 = vsel %vm375, %v4071, %v4024
    %v4073 = vsel %vm377, %v4072, %v4028
    %v4074 = vsel %vm379, %v4073, %v4032
    %v4075 = vsel %vm381, %v4074, %v4036
    %v4076 = vsel %vm383, %v4075, %v4040
    %v4077 = vsel %vm371, %v3986, %v4044
    %v4078 = vsel %vm373, %v4077, %v4048
    %v4079 = vsel %vm375, %v4078, %v4052
    %v4080 = vsel %vm377, %v4079, %v4056
    %v4081 = vsel %vm379, %v4080, %v4060
    %v4082 = vsel %vm381, %v4081, %v4064
    %v4083 = vsel %vm383, %v4082, %v4068
    %4084 = vrot.lane.b32.xlu0 %v3856, 127
    %v4085 = vpop.permute.xlu0 %4084
    %4086 = vrot.lane.b32.xlu0 %v3857, 127
    %v4087 = vpop.permute.xlu0 %4086
    %4088 = vrot.lane.b32.xlu0 %v3860, 127
    %v4089 = vpop.permute.xlu0 %4088
    %4090 = vrot.lane.b32.xlu0 %v3861, 127
    %v4091 = vpop.permute.xlu0 %4090
    %4092 = vrot.lane.b32.xlu0 %v3864, 127
    %v4093 = vpop.permute.xlu0 %4092
    %4094 = vrot.lane.b32.xlu0 %v3865, 127
    %v4095 = vpop.permute.xlu0 %4094
    %4096 = vrot.lane.b32.xlu0 %v3868, 127
    %v4097 = vpop.permute.xlu0 %4096
    %4098 = vrot.lane.b32.xlu0 %v3869, 127
    %v4099 = vpop.permute.xlu0 %4098
    %v4108 = vcombine.low %v4085, %v4093
    %v4109 = vcombine.high %v4085, %v4093
    %v4111 = vunpack.c.l.s4 1983009808
    %v4112 = vunpack.c.0.s8 %v4111
    %v4113 = vlaneseq
    %v4114 = vshrl.u32 %v4113, 7
    %v4115 = vsub.s32 %v4112, %v4114
    %v4116 = vrot.slane %v4108, %v4115
    %v4118 = vunpack.c.l.s4 1983009808
    %v4119 = vunpack.c.0.s8 %v4118
    %v4120 = vlaneseq
    %v4121 = vshrl.u32 %v4120, 7
    %v4122 = vsub.s32 %v4119, %v4121
    %v4123 = vrot.slane %v4109, %v4122
    %v4124 = vcombine.low %v4089, %v4097
    %v4125 = vcombine.high %v4089, %v4097
    %v4127 = vunpack.c.l.s4 1983009808
    %v4128 = vunpack.c.0.s8 %v4127
    %v4129 = vlaneseq
    %v4130 = vshrl.u32 %v4129, 7
    %v4131 = vsub.s32 %v4128, %v4130
    %v4132 = vrot.slane %v4124, %v4131
    %v4134 = vunpack.c.l.s4 1983009808
    %v4135 = vunpack.c.0.s8 %v4134
    %v4136 = vlaneseq
    %v4137 = vshrl.u32 %v4136, 7
    %v4138 = vsub.s32 %v4135, %v4137
    %v4139 = vrot.slane %v4125, %v4138
    %v4140 = vcombine.low %v4116, %v4132
    %v4141 = vcombine.high %v4116, %v4132
    %v4143 = vunpack.c.l.s4 1934713408
    %v4144 = vunpack.c.0.s8 %v4143
    %v4145 = vlaneseq
    %v4146 = vshrl.u32 %v4145, 7
    %v4147 = vsub.s32 %v4144, %v4146
    %v4148 = vrot.slane %v4140, %v4147
    %v4150 = vunpack.c.l.s4 1934713408
    %v4151 = vunpack.c.0.s8 %v4150
    %v4152 = vlaneseq
    %v4153 = vshrl.u32 %v4152, 7
    %v4154 = vsub.s32 %v4151, %v4153
    %v4155 = vrot.slane %v4141, %v4154
    %v4156 = vcombine.low %v4123, %v4139
    %v4157 = vcombine.high %v4123, %v4139
    %v4159 = vunpack.c.l.s4 1934713408
    %v4160 = vunpack.c.0.s8 %v4159
    %v4161 = vlaneseq
    %v4162 = vshrl.u32 %v4161, 7
    %v4163 = vsub.s32 %v4160, %v4162
    %v4164 = vrot.slane %v4156, %v4163
    %v4166 = vunpack.c.l.s4 1934713408
    %v4167 = vunpack.c.0.s8 %v4166
    %v4168 = vlaneseq
    %v4169 = vshrl.u32 %v4168, 7
    %v4170 = vsub.s32 %v4167, %v4169
    %v4171 = vrot.slane %v4157, %v4170
    %v4172 = vcombine.high %v4148, 0.0
    %v4173 = vcombine.high %v4155, 0.0
    %v4174 = vcombine.high %v4164, 0.0
    %v4175 = vcombine.high %v4171, 0.0
    %v4176 = vcombine.low %v4087, %v4095
    %v4177 = vcombine.high %v4087, %v4095
    %v4179 = vunpack.c.l.s4 1983009808
    %v4180 = vunpack.c.0.s8 %v4179
    %v4181 = vlaneseq
    %v4182 = vshrl.u32 %v4181, 7
    %v4183 = vsub.s32 %v4180, %v4182
    %v4184 = vrot.slane %v4176, %v4183
    %v4186 = vunpack.c.l.s4 1983009808
    %v4187 = vunpack.c.0.s8 %v4186
    %v4188 = vlaneseq
    %v4189 = vshrl.u32 %v4188, 7
    %v4190 = vsub.s32 %v4187, %v4189
    %v4191 = vrot.slane %v4177, %v4190
    %v4192 = vcombine.low %v4091, %v4099
    %v4193 = vcombine.high %v4091, %v4099
    %v4195 = vunpack.c.l.s4 1983009808
    %v4196 = vunpack.c.0.s8 %v4195
    %v4197 = vlaneseq
    %v4198 = vshrl.u32 %v4197, 7
    %v4199 = vsub.s32 %v4196, %v4198
    %v4200 = vrot.slane %v4192, %v4199
    %v4202 = vunpack.c.l.s4 1983009808
    %v4203 = vunpack.c.0.s8 %v4202
    %v4204 = vlaneseq
    %v4205 = vshrl.u32 %v4204, 7
    %v4206 = vsub.s32 %v4203, %v4205
    %v4207 = vrot.slane %v4193, %v4206
    %v4208 = vcombine.low %v4184, %v4200
    %v4209 = vcombine.high %v4184, %v4200
    %v4211 = vunpack.c.l.s4 1934713408
    %v4212 = vunpack.c.0.s8 %v4211
    %v4213 = vlaneseq
    %v4214 = vshrl.u32 %v4213, 7
    %v4215 = vsub.s32 %v4212, %v4214
    %v4216 = vrot.slane %v4208, %v4215
    %v4218 = vunpack.c.l.s4 1934713408
    %v4219 = vunpack.c.0.s8 %v4218
    %v4220 = vlaneseq
    %v4221 = vshrl.u32 %v4220, 7
    %v4222 = vsub.s32 %v4219, %v4221
    %v4223 = vrot.slane %v4209, %v4222
    %v4224 = vcombine.low %v4191, %v4207
    %v4225 = vcombine.high %v4191, %v4207
    %v4227 = vunpack.c.l.s4 1934713408
    %v4228 = vunpack.c.0.s8 %v4227
    %v4229 = vlaneseq
    %v4230 = vshrl.u32 %v4229, 7
    %v4231 = vsub.s32 %v4228, %v4230
    %v4232 = vrot.slane %v4224, %v4231
    %v4234 = vunpack.c.l.s4 1934713408
    %v4235 = vunpack.c.0.s8 %v4234
    %v4236 = vlaneseq
    %v4237 = vshrl.u32 %v4236, 7
    %v4238 = vsub.s32 %v4235, %v4237
    %v4239 = vrot.slane %v4225, %v4238
    %v4240 = vcombine.high %v4216, 0.0
    %v4241 = vcombine.high %v4223, 0.0
    %v4242 = vcombine.high %v4232, 0.0
    %v4243 = vcombine.high %v4239, 0.0
    %4245 = vrot.lane.b32.xlu0 %v4172, 16
    %v4246 = vpop.permute.xlu0 %4245
    %4249 = vrot.lane.b32.xlu0 %v4155, 32
    %v4250 = vpop.permute.xlu0 %4249
    %4253 = vrot.lane.b32.xlu0 %v4173, 48
    %v4254 = vpop.permute.xlu0 %4253
    %4257 = vrot.lane.b32.xlu0 %v4164, 64
    %v4258 = vpop.permute.xlu0 %4257
    %4261 = vrot.lane.b32.xlu0 %v4174, 80
    %v4262 = vpop.permute.xlu0 %4261
    %4265 = vrot.lane.b32.xlu0 %v4171, 96
    %v4266 = vpop.permute.xlu0 %4265
    %4269 = vrot.lane.b32.xlu0 %v4175, 112
    %v4270 = vpop.permute.xlu0 %4269
    %4273 = vrot.lane.b32.xlu0 %v4240, 16
    %v4274 = vpop.permute.xlu0 %4273
    %4277 = vrot.lane.b32.xlu0 %v4223, 32
    %v4278 = vpop.permute.xlu0 %4277
    %4281 = vrot.lane.b32.xlu0 %v4241, 48
    %v4282 = vpop.permute.xlu0 %4281
    %4285 = vrot.lane.b32.xlu0 %v4232, 64
    %v4286 = vpop.permute.xlu0 %4285
    %4289 = vrot.lane.b32.xlu0 %v4242, 80
    %v4290 = vpop.permute.xlu0 %4289
    %4293 = vrot.lane.b32.xlu0 %v4239, 96
    %v4294 = vpop.permute.xlu0 %4293
    %4297 = vrot.lane.b32.xlu0 %v4243, 112
    %v4298 = vpop.permute.xlu0 %4297
    %v4300 = vsel %vm371, %v4148, %v4246
    %v4301 = vsel %vm373, %v4300, %v4250
    %v4302 = vsel %vm375, %v4301, %v4254
    %v4303 = vsel %vm377, %v4302, %v4258
    %v4304 = vsel %vm379, %v4303, %v4262
    %v4305 = vsel %vm381, %v4304, %v4266
    %v4306 = vsel %vm383, %v4305, %v4270
    %v4307 = vsel %vm371, %v4216, %v4274
    %v4308 = vsel %vm373, %v4307, %v4278
    %v4309 = vsel %vm375, %v4308, %v4282
    %v4310 = vsel %vm377, %v4309, %v4286
    %v4311 = vsel %vm379, %v4310, %v4290
    %v4312 = vsel %vm381, %v4311, %v4294
    %v4313 = vsel %vm383, %v4312, %v4298
    %4314 = vrot.lane.b32.xlu0 %v3856, 126
    %v4315 = vpop.permute.xlu0 %4314
    %4316 = vrot.lane.b32.xlu0 %v3857, 126
    %v4317 = vpop.permute.xlu0 %4316
    %4318 = vrot.lane.b32.xlu0 %v3860, 126
    %v4319 = vpop.permute.xlu0 %4318
    %4320 = vrot.lane.b32.xlu0 %v3861, 126
    %v4321 = vpop.permute.xlu0 %4320
    %4322 = vrot.lane.b32.xlu0 %v3864, 126
    %v4323 = vpop.permute.xlu0 %4322
    %4324 = vrot.lane.b32.xlu0 %v3865, 126
    %v4325 = vpop.permute.xlu0 %4324
    %4326 = vrot.lane.b32.xlu0 %v3868, 126
    %v4327 = vpop.permute.xlu0 %4326
    %4328 = vrot.lane.b32.xlu0 %v3869, 126
    %v4329 = vpop.permute.xlu0 %4328
    %v4338 = vcombine.low %v4315, %v4323
    %v4339 = vcombine.high %v4315, %v4323
    %v4341 = vunpack.c.l.s4 1983009808
    %v4342 = vunpack.c.0.s8 %v4341
    %v4343 = vlaneseq
    %v4344 = vshrl.u32 %v4343, 7
    %v4345 = vsub.s32 %v4342, %v4344
    %v4346 = vrot.slane %v4338, %v4345
    %v4348 = vunpack.c.l.s4 1983009808
    %v4349 = vunpack.c.0.s8 %v4348
    %v4350 = vlaneseq
    %v4351 = vshrl.u32 %v4350, 7
    %v4352 = vsub.s32 %v4349, %v4351
    %v4353 = vrot.slane %v4339, %v4352
    %v4354 = vcombine.low %v4319, %v4327
    %v4355 = vcombine.high %v4319, %v4327
    %v4357 = vunpack.c.l.s4 1983009808
    %v4358 = vunpack.c.0.s8 %v4357
    %v4359 = vlaneseq
    %v4360 = vshrl.u32 %v4359, 7
    %v4361 = vsub.s32 %v4358, %v4360
    %v4362 = vrot.slane %v4354, %v4361
    %v4364 = vunpack.c.l.s4 1983009808
    %v4365 = vunpack.c.0.s8 %v4364
    %v4366 = vlaneseq
    %v4367 = vshrl.u32 %v4366, 7
    %v4368 = vsub.s32 %v4365, %v4367
    %v4369 = vrot.slane %v4355, %v4368
    %v4370 = vcombine.low %v4346, %v4362
    %v4371 = vcombine.high %v4346, %v4362
    %v4373 = vunpack.c.l.s4 1934713408
    %v4374 = vunpack.c.0.s8 %v4373
    %v4375 = vlaneseq
    %v4376 = vshrl.u32 %v4375, 7
    %v4377 = vsub.s32 %v4374, %v4376
    %v4378 = vrot.slane %v4370, %v4377
    %v4380 = vunpack.c.l.s4 1934713408
    %v4381 = vunpack.c.0.s8 %v4380
    %v4382 = vlaneseq
    %v4383 = vshrl.u32 %v4382, 7
    %v4384 = vsub.s32 %v4381, %v4383
    %v4385 = vrot.slane %v4371, %v4384
    %v4386 = vcombine.low %v4353, %v4369
    %v4387 = vcombine.high %v4353, %v4369
    %v4389 = vunpack.c.l.s4 1934713408
    %v4390 = vunpack.c.0.s8 %v4389
    %v4391 = vlaneseq
    %v4392 = vshrl.u32 %v4391, 7
    %v4393 = vsub.s32 %v4390, %v4392
    %v4394 = vrot.slane %v4386, %v4393
    %v4396 = vunpack.c.l.s4 1934713408
    %v4397 = vunpack.c.0.s8 %v4396
    %v4398 = vlaneseq
    %v4399 = vshrl.u32 %v4398, 7
    %v4400 = vsub.s32 %v4397, %v4399
    %v4401 = vrot.slane %v4387, %v4400
    %v4402 = vcombine.high %v4378, 0.0
    %v4403 = vcombine.high %v4385, 0.0
    %v4404 = vcombine.high %v4394, 0.0
    %v4405 = vcombine.high %v4401, 0.0
    %v4406 = vcombine.low %v4317, %v4325
    %v4407 = vcombine.high %v4317, %v4325
    %v4409 = vunpack.c.l.s4 1983009808
    %v4410 = vunpack.c.0.s8 %v4409
    %v4411 = vlaneseq
    %v4412 = vshrl.u32 %v4411, 7
    %v4413 = vsub.s32 %v4410, %v4412
    %v4414 = vrot.slane %v4406, %v4413
    %v4416 = vunpack.c.l.s4 1983009808
    %v4417 = vunpack.c.0.s8 %v4416
    %v4418 = vlaneseq
    %v4419 = vshrl.u32 %v4418, 7
    %v4420 = vsub.s32 %v4417, %v4419
    %v4421 = vrot.slane %v4407, %v4420
    %v4422 = vcombine.low %v4321, %v4329
    %v4423 = vcombine.high %v4321, %v4329
    %v4425 = vunpack.c.l.s4 1983009808
    %v4426 = vunpack.c.0.s8 %v4425
    %v4427 = vlaneseq
    %v4428 = vshrl.u32 %v4427, 7
    %v4429 = vsub.s32 %v4426, %v4428
    %v4430 = vrot.slane %v4422, %v4429
    %v4432 = vunpack.c.l.s4 1983009808
    %v4433 = vunpack.c.0.s8 %v4432
    %v4434 = vlaneseq
    %v4435 = vshrl.u32 %v4434, 7
    %v4436 = vsub.s32 %v4433, %v4435
    %v4437 = vrot.slane %v4423, %v4436
    %v4438 = vcombine.low %v4414, %v4430
    %v4439 = vcombine.high %v4414, %v4430
    %v4441 = vunpack.c.l.s4 1934713408
    %v4442 = vunpack.c.0.s8 %v4441
    %v4443 = vlaneseq
    %v4444 = vshrl.u32 %v4443, 7
    %v4445 = vsub.s32 %v4442, %v4444
    %v4446 = vrot.slane %v4438, %v4445
    %v4448 = vunpack.c.l.s4 1934713408
    %v4449 = vunpack.c.0.s8 %v4448
    %v4450 = vlaneseq
    %v4451 = vshrl.u32 %v4450, 7
    %v4452 = vsub.s32 %v4449, %v4451
    %v4453 = vrot.slane %v4439, %v4452
    %v4454 = vcombine.low %v4421, %v4437
    %v4455 = vcombine.high %v4421, %v4437
    %v4457 = vunpack.c.l.s4 1934713408
    %v4458 = vunpack.c.0.s8 %v4457
    %v4459 = vlaneseq
    %v4460 = vshrl.u32 %v4459, 7
    %v4461 = vsub.s32 %v4458, %v4460
    %v4462 = vrot.slane %v4454, %v4461
    %v4464 = vunpack.c.l.s4 1934713408
    %v4465 = vunpack.c.0.s8 %v4464
    %v4466 = vlaneseq
    %v4467 = vshrl.u32 %v4466, 7
    %v4468 = vsub.s32 %v4465, %v4467
    %v4469 = vrot.slane %v4455, %v4468
    %v4470 = vcombine.high %v4446, 0.0
    %v4471 = vcombine.high %v4453, 0.0
    %v4472 = vcombine.high %v4462, 0.0
    %v4473 = vcombine.high %v4469, 0.0
    %4475 = vrot.lane.b32.xlu0 %v4402, 16
    %v4476 = vpop.permute.xlu0 %4475
    %4479 = vrot.lane.b32.xlu0 %v4385, 32
    %v4480 = vpop.permute.xlu0 %4479
    %4483 = vrot.lane.b32.xlu0 %v4403, 48
    %v4484 = vpop.permute.xlu0 %4483
    %4487 = vrot.lane.b32.xlu0 %v4394, 64
    %v4488 = vpop.permute.xlu0 %4487
    %4491 = vrot.lane.b32.xlu0 %v4404, 80
    %v4492 = vpop.permute.xlu0 %4491
    %4495 = vrot.lane.b32.xlu0 %v4401, 96
    %v4496 = vpop.permute.xlu0 %4495
    %4499 = vrot.lane.b32.xlu0 %v4405, 112
    %v4500 = vpop.permute.xlu0 %4499
    %4503 = vrot.lane.b32.xlu0 %v4470, 16
    %v4504 = vpop.permute.xlu0 %4503
    %4507 = vrot.lane.b32.xlu0 %v4453, 32
    %v4508 = vpop.permute.xlu0 %4507
    %4511 = vrot.lane.b32.xlu0 %v4471, 48
    %v4512 = vpop.permute.xlu0 %4511
    %4515 = vrot.lane.b32.xlu0 %v4462, 64
    %v4516 = vpop.permute.xlu0 %4515
    %4519 = vrot.lane.b32.xlu0 %v4472, 80
    %v4520 = vpop.permute.xlu0 %4519
    %4523 = vrot.lane.b32.xlu0 %v4469, 96
    %v4524 = vpop.permute.xlu0 %4523
    %4527 = vrot.lane.b32.xlu0 %v4473, 112
    %v4528 = vpop.permute.xlu0 %4527
    %v4530 = vsel %vm371, %v4378, %v4476
    %v4531 = vsel %vm373, %v4530, %v4480
    %v4532 = vsel %vm375, %v4531, %v4484
    %v4533 = vsel %vm377, %v4532, %v4488
    %v4534 = vsel %vm379, %v4533, %v4492
    %v4535 = vsel %vm381, %v4534, %v4496
    %v4536 = vsel %vm383, %v4535, %v4500
    %v4537 = vsel %vm371, %v4446, %v4504
    %v4538 = vsel %vm373, %v4537, %v4508
    %v4539 = vsel %vm375, %v4538, %v4512
    %v4540 = vsel %vm377, %v4539, %v4516
    %v4541 = vsel %vm379, %v4540, %v4520
    %v4542 = vsel %vm381, %v4541, %v4524
    %v4543 = vsel %vm383, %v4542, %v4528
    %v4546 = vrot.slane %v2926, 4
    %v4547 = vrot.slane %v2933, 4
    %v4552 = vrot.slane %v3386, 4
    %v4553 = vrot.slane %v3393, 4
    %v4558 = vrot.slane %v3846, 4
    %v4559 = vrot.slane %v3853, 4
    %v4564 = vrot.slane %v4306, 4
    %v4565 = vrot.slane %v4313, 4
    %v4568 = vsel %vm2266, %v2688, %v4546
    %v4569 = vsel %vm2266, %v2695, %v4547
    %v4570 = vsel %vm2266, %v3156, %v4552
    %v4571 = vsel %vm2266, %v3163, %v4553
    %v4572 = vsel %vm2266, %v3616, %v4558
    %v4573 = vsel %vm2266, %v3623, %v4559
    %v4574 = vsel %vm2266, %v4076, %v4564
    %v4575 = vsel %vm2266, %v4083, %v4565
    %v4576 = vpack.c.bf16 %v4570, %v4568
    %v4577 = vpack.c.bf16 %v4571, %v4569
    %v4578 = vpack.c.bf16 %v4574, %v4572
    %v4579 = vpack.c.bf16 %v4575, %v4573
    %v4580 = vpack.c.bf16 %v4536, %v4536
    %v4581 = vpack.c.bf16 %v4543, %v4543
    %v4583 = vsel %vm2285, %v4580, 0
    %v4586 = vsel %vm2285, %v4581, 0
    %4588 = vmatprep.subr.bf16.mxu0 0
    %4589 = vmatpush1.bf16.msra.mxu0 0
    %4590 = vmatprep.subr.bf16.mxu0 0
    %4591 = vmatpush1.bf16.msra.mxu0 0
    %4592 = vmatprep.subr.bf16.mxu0 0
    %4593 = vmatpush1.bf16.msra.mxu0 0
    %4594 = vmatprep.subr.bf16.mxu0 0
    %4595 = vmatpush1.bf16.msra.mxu0 0
    %4596 = vmatprep.subr.bf16.mxu0 0
    %4597 = vmatpush1.bf16.msra.mxu0 0
    %4598 = vmatprep.subr.bf16.mxu0 %v4586
    %4599 = vmatpush1.bf16.msra.mxu0 %v4583
    %4600 = vmatprep.subr.bf16.mxu0 %v4579
    %4601 = vmatpush1.bf16.msra.mxu0 %v4578
    %4602 = vmatprep.subr.bf16.mxu0 %v4577
    %4603 = vmatpush1.bf16.msra.mxu0 %v4576
    %4604 = vmatprep.subr.bf16.mxu0 0
    %4605 = vmatpush2.bf16.msra.mxu0 0
    %4606 = vmatprep.subr.bf16.mxu0 0
    %4607 = vmatpush2.bf16.msra.mxu0 0
    %4608 = vmatprep.subr.bf16.mxu0 0
    %4609 = vmatpush2.bf16.msra.mxu0 0
    %4610 = vmatprep.subr.bf16.mxu0 0
    %4611 = vmatpush2.bf16.msra.mxu0 0
    %4612 = vmatprep.subr.bf16.mxu0 0
    %4613 = vmatpush2.bf16.msra.mxu0 0
    %4614 = vmatprep.subr.bf16.mxu0 0
    %4615 = vmatpush2.bf16.msra.mxu0 0
    %4616 = vmatprep.subr.bf16.mxu0 0
    %4617 = vmatpush2.bf16.msra.mxu0 0
    %4618 = vmatprep.subr.bf16.mxu0 0
    %4619 = vmatpush2.bf16.msra.mxu0 0
    %4620 = vmatprep.mubr.bf16.mxu0 0
    %4621 = vmatmul.mubr.bf16.gmra.mxu0 %v2283
    %v4622 = vpop.f32.mrf.mxu0
    %v4623 = vadd.f32 0.0, %v4622
    %v4624 = vpop.f32.mrf.mxu0
    %v4625 = vadd.f32 0.0, %v4624
    %v4626 = vpop.f32.mrf.mxu0
    %v4627 = vpop.f32.mrf.mxu0
    %4628 = vdwg.mxu0
    %v4629 = vmul.f32 %v4623, %v2336
    %v4630 = vmul.f32 %v4625, %v2336
    %v4631 = vadd.f32 %v4629, %v2343
    %v4632 = vadd.f32 %v4630, %v2343
    %s4633 = scalar_lea.vmem [#allocation5], 16
    %4634 = vst [vmem:[%s4633] sm:$0xff] %v4631
    %4635 = vst [vmem:[%s4633 + $0x8] sm:$0xff] %v4632
    // Predicated region
    $region22: #{tpu_custom_call.1} parent=1 // pred_check
      _
    $region23: #{tpu_custom_call.1} parent=1 // pred_check_branch
      %4637 = sbr.rel (0) target = $region25
    $region24: #{tpu_custom_call.1} parent=1 // pred_region
      %s4639 = ssub.s32 512, 512
      %4640 = vsyncadd [#allocation4], %s4639
      %s4641 = sshll.u32 [#allocation5], 4
      %s4642 = int_to_ptr.vmem [resolvable:$true] %s4641
      %4647 = dma.vmem_to_hbm [thread:$0]  %s4642, 512, %s4, [#allocation4], 256, 256, 16
    $region25: #{tpu_custom_call.1} parent=1 // pred_fallthru
      _
    // Predicated region
    $region26: #{tpu_custom_call.1} parent=1 // pred_check
      _
    $region27: #{tpu_custom_call.1} parent=1 // pred_check_branch
      %4649 = sbr.rel (0) target = $region29
    $region28: #{tpu_custom_call.1} parent=1 // pred_region
      %4650 = dma.done [#allocation4], 512
    $region29: #{tpu_custom_call.1} parent=1 // pred_fallthru
      _
    %4651 = vsyncpa [#allocation3], 1
    %4652 = vsyncpa [#allocation4], 1

</llo_original>
